<compile_context>
chip_gen: v7x
topology: tpu7x:2x2x1
jax: 0.10.0
libtpu: 0.0.40
codegen_flags: <defaults>
</compile_context>

<pallas_src>
import functools
import math
import numpy as np
import jax
import jax.numpy as jnp
from jax.experimental import pallas as pl
from jax.experimental.pallas import tpu as pltpu

EPS = 1e-5
_SQRT_HALF = 0.7071067811865476


# ----------------------------- in-kernel helpers -----------------------------
def _rms(x, gamma):
    # RMSNorm: x * gamma / (sqrt(mean(x^2, -1)) + eps); gamma is an SMEM scalar.
    ms = jnp.mean(x * x, axis=-1, keepdims=True)
    inv = pl.reciprocal(jnp.sqrt(ms) + EPS, approx=True)   # EUP slot, off the VALU
    return x * (gamma * inv)


def _erf(x):
    # float32-accurate erf (Abramowitz & Stegun 7.1.26, |err| < 1.5e-7).
    a1, a2, a3, a4, a5 = 0.254829592, -0.284496736, 1.421413741, -1.453152027, 1.061405429
    p = 0.3275911
    ax = jnp.abs(x)
    t = 1.0 / (1.0 + p * ax)
    poly = ((((a5 * t + a4) * t + a3) * t + a2) * t + a1) * t
    y = 1.0 - poly * jnp.exp(-ax * ax)
    return jnp.where(x < 0, -y, y)


def _gelu_exact(x):
    # matches torch nn.GELU() (erf-based)
    return 0.5 * x * (1.0 + _erf(x * _SQRT_HALF))


# ------------------- strided sublane read (with safe fallback) -------------------
_STRIDED_OK = None


def _strided_reads_supported():
    """Probe once whether Mosaic lowers dynamic-start strided sublane reads on refs."""
    global _STRIDED_OK
    if _STRIDED_OK is not None:
        return _STRIDED_OK

    def probe(x_ref, o_ref):
        t = pl.program_id(0)
        o_ref[...] = x_ref[pl.ds(t, 8, stride=2), :]

    try:
        x = jnp.arange(16 * 128, dtype=jnp.float32).reshape(16, 128)
        out = pl.pallas_call(
            probe,
            out_shape=jax.ShapeDtypeStruct((8, 128), jnp.float32),
            grid=(1,),
            in_specs=[pl.BlockSpec((16, 128), lambda i: (0, 0))],
            out_specs=pl.BlockSpec((8, 128), lambda i: (0, 0)),
        )(x)
        _STRIDED_OK = bool(np.allclose(np.asarray(out), np.asarray(x)[0:16:2]))
    except Exception:
        _STRIDED_OK = False
    return _STRIDED_OK


def _read_t_slab(ref, t, n_rows, stride, use_strided):
    """Rows {t, t+stride, ..., t+(n_rows-1)*stride} of `ref` as an (n_rows, lanes) tile."""
    if use_strided:
        return ref[pl.ds(t, n_rows, stride=stride), :]
    return jnp.concatenate([ref[pl.ds(t + n * stride, 1), :] for n in range(n_rows)], axis=0)


# ------------------------------- Pallas kernels -------------------------------
def mamba_block_kernel(
    gin_ref, gout_ref,                 # SMEM scalars (1,)
    x_ref, xnext_ref,                  # (Lc, D) current chunk, (8, D) next-chunk conv halo
    win_ref, bin_ref,                  # (D, 2Dh) bf16, (1, 2Dh) f32
    cw_ref, cb_ref,                    # (k, Dh), (1, Dh)
    wssm_ref, bssm_ref,                # (N, Dh, 2Dh) bf16 [B_n | C_n], (N, 1, 2Dh) f32
    wdlt_ref, bdlt_ref,                # (Dh, Dh) bf16, (1, Dh)
    nega_ref, dprm_ref,                # (N, Dh) = -(A^T), (1, Dh)
    wg_ref, bg_ref,                    # (Dh, Dh) bf16, (1, Dh)
    wo_ref, bo_ref,                    # (Dh, D) bf16, (1, D)
    out_ref,                           # (Lc, D)
    bu_scr, c_scr,                     # (N*Lc, Dh): n-major blocks of delta*B*u and C
    d_scr, h_scr,                      # (Lc, Dh): delta, scan outputs
    state_scr,                         # (N, Dh): SSM state carried across L-chunks
    utail_scr,                         # (8, Dh): u_pre tail carried across L-chunks
    *, use_strided,
):
    Lc, D = x_ref.shape
    k, Dh = cw_ref.shape
    N = nega_ref.shape[0]
    pad = k // 2
    SUB = 8                            # scan sub-chunk (aligned 8-row stores)
    assert Lc % SUB == 0 and pad <= 8

    # NOTE: correctness of state_scr / utail_scr relies on the L-chunk grid axis (axis 1)
    # being the innermost, sequentially executed ("arbitrary") axis for each batch row.
    c_idx = pl.program_id(1)
    n_chunks = pl.num_programs(1)
    gin = gin_ref[0]
    gout = gout_ref[0]
    mm_dtype = win_ref.dtype

    # ---- ln_in (RMSNorm) + fused W_in on this chunk ----
    xn = _rms(x_ref[...], gin)                                          # (Lc, D)
    z = (jnp.dot(xn.astype(mm_dtype), win_ref[...],
                 preferred_element_type=jnp.float32) + bin_ref[...])    # (Lc, 2Dh)
    u_pre = z[:, :Dh]
    g_pre = z[:, Dh:]

    # ---- depthwise conv along L (in registers) with carried / recomputed halos ----
    if pad > 0:
        # left halo: last `pad` rows of the previous chunk's u_pre, carried in utail_scr
        left = jnp.where(c_idx > 0, utail_scr[...][8 - pad:, :], 0.0)   # (pad, Dh)
        # right halo: first `pad` rows of the next chunk's u_pre from an (8, D) x halo block
        xh = _rms(xnext_ref[...], gin)
        zh = (jnp.dot(xh.astype(mm_dtype), win_ref[:, :Dh],
                      preferred_element_type=jnp.float32) + bin_ref[:, :Dh])
        right = jnp.where(c_idx < n_chunks - 1, zh[:pad, :], 0.0)       # (pad, Dh)
        u_ext = jnp.concatenate([left, u_pre, right], axis=0)           # (Lc + 2*pad, Dh)
    else:
        u_ext = u_pre
    # carry this chunk's u_pre tail for the next chunk (old tail already consumed above)
    utail_scr[...] = u_pre[Lc - 8:, :]

    cw = cw_ref[...]
    acc = cb_ref[...] + cw[0:1, :] * u_ext[0:Lc, :]
    for j in range(1, k):                                               # k is tiny & static
        acc = acc + cw[j:j + 1, :] * u_ext[j:j + Lc, :]
    u3 = jax.nn.sigmoid(acc)                                            # (Lc, Dh)
    u3b = u3.astype(mm_dtype)

    # ---- x_proj: delta + per-n (B_n | C_n) matmuls straight into scan-layout scratches ----
    delta = (jnp.dot(u3b, wdlt_ref[...], preferred_element_type=jnp.float32)
             + bdlt_ref[...])                                           # (Lc, Dh)
    d_scr[...] = delta
    du = delta * u3                                                     # (Lc, Dh)
    # (For production Dh the (N, Dh, 2Dh) weight should additionally be streamed/tiled
    #  over n instead of held as a single resident block; fine at these sizes.)
    for n in range(N):                                                  # N is small & static
        pc = (jnp.dot(u3b, wssm_ref[n], preferred_element_type=jnp.float32)
              + bssm_ref[n])                                            # (Lc, 2Dh)
        bu_scr[pl.ds(n * Lc, Lc), :] = du * pc[:, :Dh]                  # delta*B*u, n-major
        c_scr[pl.ds(n * Lc, Lc), :] = pc[:, Dh:]                        # C,         n-major

    # ---- selective scan on full (N, Dh) vreg tiles (state carried across L-chunks) ----
    @pl.when(c_idx == 0)
    def _():
        state_scr[...] = jnp.zeros_like(state_scr)

    neg_a = nega_ref[...]                                               # (N, Dh)

    def scan_body(s, state):
        s0 = pl.multiple_of(s * SUB, SUB)
        rows = []
        for i in range(SUB):                                            # short static unroll
            t = s0 + i
            d_row = d_scr[pl.ds(t, 1), :]                               # (1, Dh)
            a_t = jnp.exp(d_row * neg_a)                                # (N, Dh) = exp(-delta*A)
            bu_t = _read_t_slab(bu_scr, t, N, Lc, use_strided)          # (N, Dh)
            c_t = _read_t_slab(c_scr, t, N, Lc, use_strided)            # (N, Dh)
            state = a_t * state + bu_t
            rows.append(jnp.sum(c_t * state, axis=0, keepdims=True))    # sublane (XLU) reduce
        h_scr[pl.ds(s0, SUB), :] = jnp.concatenate(rows, axis=0)        # one aligned store / SUB
        return state

    state_fin = jax.lax.fori_loop(0, Lc // SUB, scan_body, state_scr[...])
    state_scr[...] = state_fin

    h = h_scr[...] + dprm_ref[...] * u3                                 # + D * u

    # ---- gate, GELU, output projection, residual (on ln_in output), ln_out ----
    g = jax.nn.sigmoid(jnp.dot(g_pre.astype(mm_dtype), wg_ref[...],
                               preferred_element_type=jnp.float32) + bg_ref[...])
    y = _gelu_exact(g * h)
    o = jnp.dot(y.astype(mm_dtype), wo_ref[...],
                preferred_element_type=jnp.float32) + bo_ref[...]
    out_ref[...] = _rms(xn + o, gout)


def head_kernel(gamma_ref, h_ref, wu_ref, bu_ref, out_ref):
    hn = _rms(h_ref[...], gamma_ref[0])
    out_ref[...] = (jnp.dot(hn.astype(wu_ref.dtype), wu_ref[...],
                            preferred_element_type=jnp.float32) + bu_ref[...])


# ------------------------------ sizing helpers ------------------------------
_VMEM_LIMIT = None


def _vmem_limit():
    # Size the scoped-VMEM limit from the device (v7x has 64 MiB/TC vs 128 MiB on v5e/v6e).
    global _VMEM_LIMIT
    if _VMEM_LIMIT is None:
        try:
            cap = int(pltpu.get_tpu_info().vmem_capacity_bytes)
        except Exception:
            cap = 64 * 1024 * 1024
        _VMEM_LIMIT = int(min(cap * 3 // 4, 96 * 1024 * 1024))
    return _VMEM_LIMIT


def _pick_chunk(L, D, Dh, N):
    """Largest multiple-of-8 L-chunk whose per-chunk activation + scan-scratch footprint
    fits roughly half of the device VMEM budget (keeps double-buffering alive on v7x)."""
    assert L % 8 == 0, "sequence length must be a multiple of 8"
    budget = _vmem_limit() // 2
    best = 8
    for cand in range(8, L + 1, 8):
        if L % cand:
            continue
        act = 2 * 2 * cand * D * 4                       # double-buffered x + out blocks
        scr = (2 * N + 3) * cand * Dh * 4                # bu / c / delta / y scratches
        if act + scr <= budget:
            best = cand
    return best


def _pick_seq_tile(L, target=512):
    best = 8 if L % 8 == 0 else L
    for cand in range(8, min(L, target) + 1, 8):
        if L % cand == 0:
            best = cand
    return best


def _pick_vtile(V, target=2048):
    if V % 128 != 0:
        return V
    best = V
    for cand in range(128, min(V, target) + 1, 128):
        if V % cand == 0:
            best = cand
    return best


# ------------------------------ JAX-side wrappers ------------------------------
def mamba_block_apply(x, bp, *, lc=None):
    B, L, D = x.shape
    k, Dh = bp["conv_w"].shape
    N = bp["neg_a"].shape[0]
    assert L % 8 == 0, "sequence length must be a multiple of 8"
    if lc is None:
        lc = _pick_chunk(L, D, Dh, N)
    assert L % lc == 0 and lc % 8 == 0, "L-chunk must divide L and be a multiple of 8"
    assert k // 2 <= 8, "conv halo must fit in one 8-row block"
    nc = L // lc
    n_lblk = L // 8                      # number of 8-row blocks along L (for the halo spec)
    use_strided = _strided_reads_supported()

    def wspec(arr):
        # Grid-invariant weights (constant index_map): fetched once per core.
        return pl.BlockSpec(arr.shape, lambda b, c, nd=arr.ndim: (0,) * nd)

    smem_spec = pl.BlockSpec(memory_space=pltpu.MemorySpace.SMEM)
    kernel = functools.partial(mamba_block_kernel, use_strided=use_strided)

    return pl.pallas_call(
        kernel,
        out_shape=jax.ShapeDtypeStruct((B, L, D), jnp.float32),
        grid=(B, nc),
        in_specs=[
            smem_spec, smem_spec,
            pl.BlockSpec((None, lc, D), lambda b, c: (b, c, 0)),
            # (8, D) halo block of the NEXT chunk (clamped at the end; zeroed in-kernel).
            pl.BlockSpec((None, 8, D),
                         lambda b, c: (b, jnp.minimum((c + 1) * (lc // 8), n_lblk - 1), 0)),
            wspec(bp["w_in"]), wspec(bp["b_in"]),
            wspec(bp["conv_w"]), wspec(bp["conv_b"]),
            wspec(bp["w_ssm"]), wspec(bp["b_ssm"]),
            wspec(bp["w_dlt"]), wspec(bp["b_dlt"]),
            wspec(bp["neg_a"]), wspec(bp["d_prm"]),
            wspec(bp["w_g"]), wspec(bp["b_g"]),
            wspec(bp["w_out"]), wspec(bp["b_out"]),
        ],
        out_specs=pl.BlockSpec((None, lc, D), lambda b, c: (b, c, 0)),
        scratch_shapes=[
            pltpu.VMEM((N * lc, Dh), jnp.float32),   # delta*B*u, n-major blocks
            pltpu.VMEM((N * lc, Dh), jnp.float32),   # C,         n-major blocks
            pltpu.VMEM((lc, Dh), jnp.float32),       # delta
            pltpu.VMEM((lc, Dh), jnp.float32),       # scan outputs y
            pltpu.VMEM((N, Dh), jnp.float32),        # carried SSM state
            pltpu.VMEM((8, Dh), jnp.float32),        # carried u_pre tail (left conv halo)
        ],
        compiler_params=pltpu.CompilerParams(
            dimension_semantics=("parallel", "arbitrary"),
            vmem_limit_bytes=_vmem_limit(),
        ),
    )(bp["gin"], bp["gout"], x, x,
      bp["w_in"], bp["b_in"], bp["conv_w"], bp["conv_b"],
      bp["w_ssm"], bp["b_ssm"], bp["w_dlt"], bp["b_dlt"],
      bp["neg_a"], bp["d_prm"], bp["w_g"], bp["b_g"], bp["w_out"], bp["b_out"])


def mamba_head_apply(h, gamma, wu, bu, *, lc=None, tv=None):
    B, L, D = h.shape
    V = wu.shape[1]
    if lc is None:
        lc = _pick_seq_tile(L)
    assert L % lc == 0
    nc = L // lc
    if tv is None:
        tv = _pick_vtile(V)
    assert V % tv == 0
    nv = V // tv

    return pl.pallas_call(
        head_kernel,
        out_shape=jax.ShapeDtypeStruct((B, L, V), jnp.float32),
        # Vocab tile is OUTERMOST: each (D, tv) unembed tile is DMA'd once and reused over
        # all B*nc activation chunks instead of re-streaming D x V per chunk.
        grid=(nv, B, nc),
        in_specs=[
            pl.BlockSpec(memory_space=pltpu.MemorySpace.SMEM),
            pl.BlockSpec((None, lc, D), lambda v, b, c: (b, c, 0)),
            pl.BlockSpec((D, tv), lambda v, b, c: (0, v)),
            pl.BlockSpec((1, tv), lambda v, b, c: (0, v)),
        ],
        out_specs=pl.BlockSpec((None, lc, tv), lambda v, b, c: (b, c, v)),
        compiler_params=pltpu.CompilerParams(
            dimension_semantics=("parallel", "parallel", "arbitrary"),
            vmem_limit_bytes=_vmem_limit(),
        ),
    )(gamma, h, wu, bu)


def mamba_forward(tokens, prepared, *, lc=None):
    h = prepared["embed"][tokens]               # embedding gather: plain-JAX glue
    for bp in prepared["blocks"]:
        h = mamba_block_apply(h, bp, lc=lc)
    return mamba_head_apply(h, prepared["final_gamma"], prepared["unembed_w"],
                            prepared["unembed_b"], lc=lc)


# -------------------- one-time parameter repacking (hoisted) --------------------
def prepare_params(params, *, matmul_dtype=jnp.bfloat16):
    """One-time repacking of torch-layout parameters into kernel-friendly layouts.
    Matmul weights are stored (in, out) and cast to bf16 (MXU-native); biases and
    elementwise params stay f32 and accumulation is f32."""
    mm = matmul_dtype
    out = {
        "embed": params["embed"],
        "final_gamma": params["final_gamma"].reshape(1,),
        "unembed_w": params["unembed_w"].T.astype(mm),              # (D, V)
        "unembed_b": params["unembed_b"][None, :].astype(jnp.float32),
    }
    blocks = []
    for bp in params["blocks"]:
        Dh, N = bp["A"].shape
        xpw = bp["x_proj_w"].T                                      # (Dh, (2N+1)*Dh)
        xpb = bp["x_proj_b"]
        # torch output feature d*N + n of the B (resp. C) segment is B[d, n] (resp. C[d, n]).
        wb = xpw[:, :N * Dh].reshape(Dh, Dh, N)                     # [in, d, n]
        wc = xpw[:, N * Dh:2 * N * Dh].reshape(Dh, Dh, N)
        wd = xpw[:, 2 * N * Dh:]                                    # (Dh, Dh) -> delta
        bb = xpb[:N * Dh].reshape(Dh, N)
        bc = xpb[N * Dh:2 * N * Dh].reshape(Dh, N)
        bd = xpb[2 * N * Dh:].reshape(1, Dh)
        # per-n fused (B_n | C_n) weight: (N, Dh_in, 2*Dh); the kernel's per-n matmuls then
        # write straight into the scan's n-major (N*Lc, Dh) scratch layout.
        w_ssm = jnp.stack(
            [jnp.concatenate([wb[:, :, n], wc[:, :, n]], axis=1) for n in range(N)], axis=0)
        b_ssm = jnp.stack(
            [jnp.concatenate([bb[:, n], bc[:, n]])[None, :] for n in range(N)], axis=0)
        blocks.append(dict(
            gin=bp["gamma_in"].reshape(1,), gout=bp["gamma_out"].reshape(1,),
            w_in=bp["W_in_w"].T.astype(mm), b_in=bp["W_in_b"][None, :].astype(jnp.float32),
            conv_w=bp["conv_w"][:, 0, :].T, conv_b=bp["conv_b"][None, :],
            w_ssm=w_ssm.astype(mm), b_ssm=b_ssm.astype(jnp.float32),
            w_dlt=wd.astype(mm), b_dlt=bd.astype(jnp.float32),
            neg_a=-(bp["A"].T),                                     # (N, Dh): A_bar = exp(d*neg_a)
            d_prm=bp["D"][None, :],
            w_g=bp["W_g_w"].T.astype(mm), b_g=bp["W_g_b"][None, :].astype(jnp.float32),
            w_out=bp["W_out_w"].T.astype(mm), b_out=bp["W_out_b"][None, :].astype(jnp.float32),
        ))
    out["blocks"] = blocks
    return out


# ----------------------------- parameter init (torch layout) --------------------
def _linear_init(key, fan_in, fan_out):
    kw, kb = jax.random.split(key)
    bound = 1.0 / math.sqrt(fan_in)
    w = jax.random.uniform(kw, (fan_out, fan_in), jnp.float32, -bound, bound)
    b = jax.random.uniform(kb, (fan_out,), jnp.float32, -bound, bound)
    return w, b


def init_params(key, V, D, depth, N, mult, k):
    Dh = D * mult
    keys = jax.random.split(key, depth + 2)
    params = {
        "embed": jax.random.normal(keys[0], (V, D), jnp.float32),
        "final_gamma": jnp.ones((1,), jnp.float32),
    }
    params["unembed_w"], params["unembed_b"] = _linear_init(keys[1], D, V)
    blocks = []
    for i in range(depth):
        bkeys = jax.random.split(keys[2 + i], 6)
        w_in_w, w_in_b = _linear_init(bkeys[0], D, 2 * Dh)
        cbound = 1.0 / math.sqrt(k)
        conv_w = jax.random.uniform(bkeys[1], (Dh, 1, k), jnp.float32, -cbound, cbound)
        conv_b = jax.random.uniform(bkeys[2], (Dh,), jnp.float32, -cbound, cbound)
        wg_w, wg_b = _linear_init(bkeys[3], Dh, Dh)
        wout_w, wout_b = _linear_init(bkeys[4], Dh, D)
        xp_w, xp_b = _linear_init(bkeys[5], Dh, (2 * N + 1) * Dh)
        blocks.append(dict(
            gamma_in=jnp.ones((1,), jnp.float32), gamma_out=jnp.ones((1,), jnp.float32),
            W_in_w=w_in_w, W_in_b=w_in_b, conv_w=conv_w, conv_b=conv_b,
            W_g_w=wg_w, W_g_b=wg_b, W_out_w=wout_w, W_out_b=wout_b,
            x_proj_w=xp_w, x_proj_b=xp_b,
            A=jnp.ones((Dh, N), jnp.float32) / Dh,
            D=jnp.ones((Dh,), jnp.float32) / Dh,
        ))
    params["blocks"] = blocks
    return params


# ------------------------- pure-JAX reference (torch semantics) -----------------
def _ref_rms(x, gamma):
    norms = jnp.sqrt(jnp.mean(x * x, axis=-1, keepdims=True))
    return x * gamma / (norms + EPS)


def ref_block(x, bp):
    B, L, _ = x.shape
    Dh, N = bp["A"].shape
    k = bp["conv_w"].shape[2]
    pad = k // 2
    x = _ref_rms(x, bp["gamma_in"][0])
    z = x @ bp["W_in_w"].T + bp["W_in_b"]
    u, g = z[..., :Dh], z[..., Dh:]
    up = jnp.pad(u, ((0, 0), (pad, pad), (0, 0)))
    conv = bp["conv_b"][None, None, :]
    for j in range(k):
        conv = conv + bp["conv_w"][:, 0, j][None, None, :] * up[:, j:j + L, :]
    u = jax.nn.sigmoid(conv)
    ssm = u @ bp["x_proj_w"].T + bp["x_proj_b"]
    B_raw = ssm[..., :N * Dh].reshape(B, L, Dh, N)
    C_raw = ssm[..., N * Dh:2 * N * Dh].reshape(B, L, Dh, N)
    delta = ssm[..., 2 * N * Dh:]
    A_bar = jnp.exp(-(delta[..., None] * bp["A"][None, None]))
    Bu = delta[..., None] * B_raw * u[..., None]
    state = jnp.zeros((B, Dh, N), jnp.float32)
    ys = []
    for t in range(L):
        state = A_bar[:, t] * state + Bu[:, t]
        ys.append(jnp.sum(C_raw[:, t] * state, axis=-1))
    h = jnp.stack(ys, axis=1) + bp["D"][None, None, :] * u
    g = jax.nn.sigmoid(g @ bp["W_g_w"].T + bp["W_g_b"])
    y = jax.nn.gelu(g * h, approximate=False)
    o = y @ bp["W_out_w"].T + bp["W_out_b"]
    return _ref_rms(x + o, bp["gamma_out"][0])


def ref_forward(tokens, params):
    h = params["embed"][tokens]
    for bp in params["blocks"]:
        h = ref_block(h, bp)
    h = _ref_rms(h, params["final_gamma"][0])
    return h @ params["unembed_w"].T + params["unembed_b"]


# ------------------------------------ main -------------------------------------
if __name__ == "__main__":
    V, D, depth, N, mult, k = 50, 16, 2, 8, 2, 3      # D_h = 32
    B, L = 2, 16
    lc = 8            # two L-chunks per sequence: exercises halo carry + carried scan state

    key = jax.random.PRNGKey(0)
    pkey, tkey = jax.random.split(key)
    params = init_params(pkey, V, D, depth, N, mult, k)
    prepared = prepare_params(params)               # one-time repacking, bf16 matmul weights
    tokens = jax.random.randint(tkey, (B, L), 0, V, dtype=jnp.int32)

    out = mamba_forward(tokens, prepared, lc=lc)
    out = jax.block_until_ready(out)
    assert out.shape == (B, L, V)

    ref = ref_forward(tokens, params)
    # Tolerance covers bf16 matmul operands (accumulation is f32; reference is pure f32).
    np.testing.assert_allclose(np.asarray(out), np.asarray(ref), rtol=5e-2, atol=5e-2)

    print("KERNEL_OK")
</pallas_src>

<mosaic_0001>
module attributes {stable_mosaic.version = 11 : i64} {
  func.func @probe(%arg0: i32, %arg1: memref<16x128xf32, #tpu.memory_space<vmem>>, %arg2: memref<8x128xf32, #tpu.memory_space<vmem>>) attributes {dimension_semantics = [#tpu.dimension_semantics<arbitrary>], iteration_bounds = array<i64: 1>, scalar_prefetch = 0 : i64, scratch_operands = 0 : i64, tpu.core_type = #tpu.core_type<tc>, window_params = [{pipeline_mode = #tpu.pipeline_mode<synchronous>, transform_indices = @transform_0, window_bounds = array<i64: 16, 128>}, {pipeline_mode = #tpu.pipeline_mode<synchronous>, transform_indices = @transform_1, window_bounds = array<i64: 8, 128>}]} {
    %0 = arith.index_cast %arg0 : i32 to index
    %c0 = arith.constant 0 : index
    %1 = tpu.strided_load %arg1[%0, %c0] {strides = array<i32: 2, 1>} : memref<16x128xf32, #tpu.memory_space<vmem>>, vector<8x128xf32>
    %c0_0 = arith.constant 0 : index
    %c0_1 = arith.constant 0 : index
    %2 = vector.load %arg2[%c0_0, %c0_1] : memref<8x128xf32, #tpu.memory_space<vmem>>, vector<8x128xf32>
    tpu.vector_store %arg2[%c0_0, %c0_1], %1 {strides = array<i32>} : memref<8x128xf32, #tpu.memory_space<vmem>>, vector<8x128xf32>,
    return
  }
  func.func @transform_0(%arg0: i32) -> (i32, i32) {
    %c0_i32 = arith.constant 0 : i32
    %c0_i32_0 = arith.constant 0 : i32
    %c0_i32_1 = arith.constant 0 : i32
    return %c0_i32, %c0_i32_0 : i32, i32
  }
  func.func @transform_1(%arg0: i32) -> (i32, i32) {
    %c0_i32 = arith.constant 0 : i32
    %c0_i32_0 = arith.constant 0 : i32
    %c0_i32_1 = arith.constant 0 : i32
    return %c0_i32, %c0_i32_0 : i32, i32
  }
}

module attributes {stable_mosaic.version = 11 : i64} {
  func.func @mamba_block_kernel(%arg0: i32, %arg1: i32, %arg2: memref<1xf32, #tpu.memory_space<smem>>, %arg3: memref<1xf32, #tpu.memory_space<smem>>, %arg4: memref<1x8x16xf32, #tpu.memory_space<vmem>>, %arg5: memref<1x8x16xf32, #tpu.memory_space<vmem>>, %arg6: memref<16x64xbf16, #tpu.memory_space<vmem>>, %arg7: memref<1x64xf32, #tpu.memory_space<vmem>>, %arg8: memref<3x32xf32, #tpu.memory_space<vmem>>, %arg9: memref<1x32xf32, #tpu.memory_space<vmem>>, %arg10: memref<8x32x64xbf16, #tpu.memory_space<vmem>>, %arg11: memref<8x1x64xf32, #tpu.memory_space<vmem>>, %arg12: memref<32x32xbf16, #tpu.memory_space<vmem>>, %arg13: memref<1x32xf32, #tpu.memory_space<vmem>>, %arg14: memref<8x32xf32, #tpu.memory_space<vmem>>, %arg15: memref<1x32xf32, #tpu.memory_space<vmem>>, %arg16: memref<32x32xbf16, #tpu.memory_space<vmem>>, %arg17: memref<1x32xf32, #tpu.memory_space<vmem>>, %arg18: memref<32x16xbf16, #tpu.memory_space<vmem>>, %arg19: memref<1x16xf32, #tpu.memory_space<vmem>>, %arg20: memref<1x8x16xf32, #tpu.memory_space<vmem>>, %arg21: memref<64x32xf32, #tpu.memory_space<vmem>>, %arg22: memref<64x32xf32, #tpu.memory_space<vmem>>, %arg23: memref<8x32xf32, #tpu.memory_space<vmem>>, %arg24: memref<8x32xf32, #tpu.memory_space<vmem>>, %arg25: memref<8x32xf32, #tpu.memory_space<vmem>>, %arg26: memref<8x32xf32, #tpu.memory_space<vmem>>) attributes {dimension_semantics = [#tpu.dimension_semantics<parallel>, #tpu.dimension_semantics<arbitrary>], iteration_bounds = array<i64: 2, 2>, scalar_prefetch = 0 : i64, scratch_operands = 6 : i64, tpu.core_type = #tpu.core_type<tc>, window_params = [{transform_indices = @transform_0, window_bounds = array<i64: 1>}, {transform_indices = @transform_1, window_bounds = array<i64: 1>}, {transform_indices = @transform_2, window_bounds = array<i64: 1, 8, 16>}, {transform_indices = @transform_3, window_bounds = array<i64: 1, 8, 16>}, {pipeline_mode = #tpu.pipeline_mode<synchronous>, transform_indices = @transform_4, window_bounds = array<i64: 16, 64>}, {pipeline_mode = #tpu.pipeline_mode<synchronous>, transform_indices = @transform_5, window_bounds = array<i64: 1, 64>}, {pipeline_mode = #tpu.pipeline_mode<synchronous>, transform_indices = @transform_6, window_bounds = array<i64: 3, 32>}, {pipeline_mode = #tpu.pipeline_mode<synchronous>, transform_indices = @transform_7, window_bounds = array<i64: 1, 32>}, {pipeline_mode = #tpu.pipeline_mode<synchronous>, transform_indices = @transform_8, window_bounds = array<i64: 8, 32, 64>}, {pipeline_mode = #tpu.pipeline_mode<synchronous>, transform_indices = @transform_9, window_bounds = array<i64: 8, 1, 64>}, {pipeline_mode = #tpu.pipeline_mode<synchronous>, transform_indices = @transform_10, window_bounds = array<i64: 32, 32>}, {pipeline_mode = #tpu.pipeline_mode<synchronous>, transform_indices = @transform_11, window_bounds = array<i64: 1, 32>}, {pipeline_mode = #tpu.pipeline_mode<synchronous>, transform_indices = @transform_12, window_bounds = array<i64: 8, 32>}, {pipeline_mode = #tpu.pipeline_mode<synchronous>, transform_indices = @transform_13, window_bounds = array<i64: 1, 32>}, {pipeline_mode = #tpu.pipeline_mode<synchronous>, transform_indices = @transform_14, window_bounds = array<i64: 32, 32>}, {pipeline_mode = #tpu.pipeline_mode<synchronous>, transform_indices = @transform_15, window_bounds = array<i64: 1, 32>}, {pipeline_mode = #tpu.pipeline_mode<synchronous>, transform_indices = @transform_16, window_bounds = array<i64: 32, 16>}, {pipeline_mode = #tpu.pipeline_mode<synchronous>, transform_indices = @transform_17, window_bounds = array<i64: 1, 16>}, {transform_indices = @transform_18, window_bounds = array<i64: 1, 8, 16>}]} {
    %c0 = arith.constant 0 : index
    %0 = memref.load %arg2[%c0] : memref<1xf32, #tpu.memory_space<smem>>
    %c0_0 = arith.constant 0 : index
    %1 = memref.load %arg3[%c0_0] : memref<1xf32, #tpu.memory_space<smem>>
    %c0_1 = arith.constant 0 : index
    %c0_2 = arith.constant 0 : index
    %c0_3 = arith.constant 0 : index
    %2 = vector.load %arg4[%c0_1, %c0_2, %c0_3] : memref<1x8x16xf32, #tpu.memory_space<vmem>>, vector<1x8x16xf32>
    %3 = vector.shape_cast %2 : vector<1x8x16xf32> to vector<8x16xf32>
    %4 = arith.mulf %3, %3 : vector<8x16xf32>
    %cst = arith.constant dense<0.000000e+00> : vector<8xf32>
    %5 = vector.multi_reduction <add>, %4, %cst [1] : vector<8x16xf32> to vector<8xf32>
    %6 = vector.shape_cast %5 : vector<8xf32> to vector<8x1xf32>
    %cst_4 = arith.constant 1.600000e+01 : f32
    %7 = vector.broadcast %cst_4 : f32 to vector<8x1xf32>
    %8 = arith.divf %6, %7 : vector<8x1xf32>
    %9 = math.sqrt %8 : vector<8x1xf32>
    %cst_5 = arith.constant 9.99999974E-6 : f32
    %10 = vector.broadcast %cst_5 : f32 to vector<8x1xf32>
    %11 = arith.addf %9, %10 : vector<8x1xf32>
    %12 = tpu.reciprocal %11 {approx = true} : vector<8x1xf32> -> vector<8x1xf32>
    %13 = vector.broadcast %0 : f32 to vector<8x1xf32>
    %14 = arith.mulf %13, %12 : vector<8x1xf32>
    %15 = vector.broadcast %14 : vector<8x1xf32> to vector<8x16xf32>
    %16 = arith.mulf %3, %15 : vector<8x16xf32>
    %17 = arith.truncf %16 : vector<8x16xf32> to vector<8x16xbf16>
    %c0_6 = arith.constant 0 : index
    %c0_7 = arith.constant 0 : index
    %18 = vector.load %arg6[%c0_6, %c0_7] : memref<16x64xbf16, #tpu.memory_space<vmem>>, vector<16x64xbf16>
    %cst_8 = arith.constant dense<0.000000e+00> : vector<8x64xf32>
    %19 = tpu.matmul %17, %18, %cst_8 {dimension_numbers = #tpu.dot_dimension_numbers<[1], [0], [0], [1], [0, 0, 1, 1], [], []>} : vector<8x16xbf16>, vector<16x64xbf16>, vector<8x64xf32> -> vector<8x64xf32>
    %c0_9 = arith.constant 0 : index
    %c0_10 = arith.constant 0 : index
    %20 = vector.load %arg7[%c0_9, %c0_10] : memref<1x64xf32, #tpu.memory_space<vmem>>, vector<1x64xf32>
    %21 = vector.broadcast %20 : vector<1x64xf32> to vector<8x64xf32>
    %22 = arith.addf %19, %21 : vector<8x64xf32>
    %23 = vector.extract_strided_slice %22 {offsets = [0, 0], sizes = [8, 32], strides = [1, 1]} : vector<8x64xf32> to vector<8x32xf32>
    %24 = vector.extract_strided_slice %22 {offsets = [0, 32], sizes = [8, 32], strides = [1, 1]} : vector<8x64xf32> to vector<8x32xf32>
    %c0_i32 = arith.constant 0 : i32
    %25 = arith.cmpi sgt, %arg1, %c0_i32 : i32
    %c0_11 = arith.constant 0 : index
    %c0_12 = arith.constant 0 : index
    %26 = vector.load %arg26[%c0_11, %c0_12] : memref<8x32xf32, #tpu.memory_space<vmem>>, vector<8x32xf32>
    %27 = vector.extract_strided_slice %26 {offsets = [7, 0], sizes = [1, 32], strides = [1, 1]} : vector<8x32xf32> to vector<1x32xf32>
    %cst_13 = arith.constant 0.000000e+00 : f32
    %28 = vector.broadcast %cst_13 : f32 to vector<1x32xf32>
    %29 = arith.select %25, %27, %28 : vector<1x32xf32>
    %c0_14 = arith.constant 0 : index
    %c0_15 = arith.constant 0 : index
    %c0_16 = arith.constant 0 : index
    %30 = vector.load %arg5[%c0_14, %c0_15, %c0_16] : memref<1x8x16xf32, #tpu.memory_space<vmem>>, vector<1x8x16xf32>
    %31 = vector.shape_cast %30 : vector<1x8x16xf32> to vector<8x16xf32>
    %32 = arith.mulf %31, %31 : vector<8x16xf32>
    %cst_17 = arith.constant dense<0.000000e+00> : vector<8xf32>
    %33 = vector.multi_reduction <add>, %32, %cst_17 [1] : vector<8x16xf32> to vector<8xf32>
    %34 = vector.shape_cast %33 : vector<8xf32> to vector<8x1xf32>
    %cst_18 = arith.constant 1.600000e+01 : f32
    %35 = vector.broadcast %cst_18 : f32 to vector<8x1xf32>
    %36 = arith.divf %34, %35 : vector<8x1xf32>
    %37 = math.sqrt %36 : vector<8x1xf32>
    %cst_19 = arith.constant 9.99999974E-6 : f32
    %38 = vector.broadcast %cst_19 : f32 to vector<8x1xf32>
    %39 = arith.addf %37, %38 : vector<8x1xf32>
    %40 = tpu.reciprocal %39 {approx = true} : vector<8x1xf32> -> vector<8x1xf32>
    %41 = vector.broadcast %0 : f32 to vector<8x1xf32>
    %42 = arith.mulf %41, %40 : vector<8x1xf32>
    %43 = vector.broadcast %42 : vector<8x1xf32> to vector<8x16xf32>
    %44 = arith.mulf %31, %43 : vector<8x16xf32>
    %45 = arith.truncf %44 : vector<8x16xf32> to vector<8x16xbf16>
    %c0_20 = arith.constant 0 : index
    %c0_21 = arith.constant 0 : index
    %46 = vector.load %arg6[%c0_20, %c0_21] : memref<16x64xbf16, #tpu.memory_space<vmem>>, vector<16x32xbf16>
    %cst_22 = arith.constant dense<0.000000e+00> : vector<8x32xf32>
    %47 = tpu.matmul %45, %46, %cst_22 {dimension_numbers = #tpu.dot_dimension_numbers<[1], [0], [0], [1], [0, 0, 1, 1], [], []>} : vector<8x16xbf16>, vector<16x32xbf16>, vector<8x32xf32> -> vector<8x32xf32>
    %c0_23 = arith.constant 0 : index
    %c0_24 = arith.constant 0 : index
    %48 = vector.load %arg7[%c0_23, %c0_24] : memref<1x64xf32, #tpu.memory_space<vmem>>, vector<1x32xf32>
    %49 = vector.broadcast %48 : vector<1x32xf32> to vector<8x32xf32>
    %50 = arith.addf %47, %49 : vector<8x32xf32>
    %c1_i32 = arith.constant 1 : i32
    %51 = arith.cmpi slt, %arg1, %c1_i32 : i32
    %52 = vector.extract_strided_slice %50 {offsets = [0, 0], sizes = [1, 32], strides = [1, 1]} : vector<8x32xf32> to vector<1x32xf32>
    %cst_25 = arith.constant 0.000000e+00 : f32
    %53 = vector.broadcast %cst_25 : f32 to vector<1x32xf32>
    %54 = arith.select %51, %52, %53 : vector<1x32xf32>
    %55 = tpu.concatenate %29, %23, %54 in 0 : vector<1x32xf32>, vector<8x32xf32>, vector<1x32xf32> -> vector<10x32xf32>
    %c0_26 = arith.constant 0 : index
    %c0_27 = arith.constant 0 : index
    %56 = vector.load %arg26[%c0_26, %c0_27] : memref<8x32xf32, #tpu.memory_space<vmem>>, vector<8x32xf32>
    tpu.vector_store %arg26[%c0_26, %c0_27], %23 {strides = array<i32>} : memref<8x32xf32, #tpu.memory_space<vmem>>, vector<8x32xf32>,
    %c0_28 = arith.constant 0 : index
    %c0_29 = arith.constant 0 : index
    %57 = vector.load %arg8[%c0_28, %c0_29] : memref<3x32xf32, #tpu.memory_space<vmem>>, vector<3x32xf32>
    %c0_30 = arith.constant 0 : index
    %c0_31 = arith.constant 0 : index
    %58 = vector.load %arg9[%c0_30, %c0_31] : memref<1x32xf32, #tpu.memory_space<vmem>>, vector<1x32xf32>
    %59 = vector.extract_strided_slice %57 {offsets = [0, 0], sizes = [1, 32], strides = [1, 1]} : vector<3x32xf32> to vector<1x32xf32>
    %60 = vector.extract_strided_slice %55 {offsets = [0, 0], sizes = [8, 32], strides = [1, 1]} : vector<10x32xf32> to vector<8x32xf32>
    %61 = vector.broadcast %59 : vector<1x32xf32> to vector<8x32xf32>
    %62 = arith.mulf %61, %60 : vector<8x32xf32>
    %63 = vector.broadcast %58 : vector<1x32xf32> to vector<8x32xf32>
    %64 = arith.addf %63, %62 : vector<8x32xf32>
    %65 = vector.extract_strided_slice %57 {offsets = [1, 0], sizes = [1, 32], strides = [1, 1]} : vector<3x32xf32> to vector<1x32xf32>
    %66 = vector.extract_strided_slice %55 {offsets = [1, 0], sizes = [8, 32], strides = [1, 1]} : vector<10x32xf32> to vector<8x32xf32>
    %67 = vector.broadcast %65 : vector<1x32xf32> to vector<8x32xf32>
    %68 = arith.mulf %67, %66 : vector<8x32xf32>
    %69 = arith.addf %64, %68 : vector<8x32xf32>
    %70 = vector.extract_strided_slice %57 {offsets = [2, 0], sizes = [1, 32], strides = [1, 1]} : vector<3x32xf32> to vector<1x32xf32>
    %71 = vector.extract_strided_slice %55 {offsets = [2, 0], sizes = [8, 32], strides = [1, 1]} : vector<10x32xf32> to vector<8x32xf32>
    %72 = vector.broadcast %70 : vector<1x32xf32> to vector<8x32xf32>
    %73 = arith.mulf %72, %71 : vector<8x32xf32>
    %74 = arith.addf %69, %73 : vector<8x32xf32>
    %75 = arith.negf %74 : vector<8x32xf32>
    %76 = math.exp %75 : vector<8x32xf32>
    %cst_32 = arith.constant 1.000000e+00 : f32
    %77 = vector.broadcast %cst_32 : f32 to vector<8x32xf32>
    %78 = arith.addf %77, %76 : vector<8x32xf32>
    %79 = arith.divf %77, %78 : vector<8x32xf32>
    %80 = arith.truncf %79 : vector<8x32xf32> to vector<8x32xbf16>
    %c0_33 = arith.constant 0 : index
    %c0_34 = arith.constant 0 : index
    %81 = vector.load %arg12[%c0_33, %c0_34] : memref<32x32xbf16, #tpu.memory_space<vmem>>, vector<32x32xbf16>
    %cst_35 = arith.constant dense<0.000000e+00> : vector<8x32xf32>
    %82 = tpu.matmul %80, %81, %cst_35 {dimension_numbers = #tpu.dot_dimension_numbers<[1], [0], [0], [1], [0, 0, 1, 1], [], []>} : vector<8x32xbf16>, vector<32x32xbf16>, vector<8x32xf32> -> vector<8x32xf32>
    %c0_36 = arith.constant 0 : index
    %c0_37 = arith.constant 0 : index
    %83 = vector.load %arg13[%c0_36, %c0_37] : memref<1x32xf32, #tpu.memory_space<vmem>>, vector<1x32xf32>
    %84 = vector.broadcast %83 : vector<1x32xf32> to vector<8x32xf32>
    %85 = arith.addf %82, %84 : vector<8x32xf32>
    %c0_38 = arith.constant 0 : index
    %c0_39 = arith.constant 0 : index
    %86 = vector.load %arg23[%c0_38, %c0_39] : memref<8x32xf32, #tpu.memory_space<vmem>>, vector<8x32xf32>
    tpu.vector_store %arg23[%c0_38, %c0_39], %85 {strides = array<i32>} : memref<8x32xf32, #tpu.memory_space<vmem>>, vector<8x32xf32>,
    %87 = arith.mulf %85, %79 : vector<8x32xf32>
    %c0_40 = arith.constant 0 : index
    %c0_41 = arith.constant 0 : index
    %c0_42 = arith.constant 0 : index
    %88 = vector.load %arg10[%c0_40, %c0_41, %c0_42] : memref<8x32x64xbf16, #tpu.memory_space<vmem>>, vector<1x32x64xbf16>
    %89 = vector.shape_cast %88 : vector<1x32x64xbf16> to vector<32x64xbf16>
    %cst_43 = arith.constant dense<0.000000e+00> : vector<8x64xf32>
    %90 = tpu.matmul %80, %89, %cst_43 {dimension_numbers = #tpu.dot_dimension_numbers<[1], [0], [0], [1], [0, 0, 1, 1], [], []>} : vector<8x32xbf16>, vector<32x64xbf16>, vector<8x64xf32> -> vector<8x64xf32>
    %c0_44 = arith.constant 0 : index
    %c0_45 = arith.constant 0 : index
    %c0_46 = arith.constant 0 : index
    %91 = vector.load %arg11[%c0_44, %c0_45, %c0_46] : memref<8x1x64xf32, #tpu.memory_space<vmem>>, vector<1x1x64xf32>
    %92 = vector.shape_cast %91 : vector<1x1x64xf32> to vector<1x64xf32>
    %93 = vector.broadcast %92 : vector<1x64xf32> to vector<8x64xf32>
    %94 = arith.addf %90, %93 : vector<8x64xf32>
    %95 = vector.extract_strided_slice %94 {offsets = [0, 0], sizes = [8, 32], strides = [1, 1]} : vector<8x64xf32> to vector<8x32xf32>
    %96 = arith.mulf %87, %95 : vector<8x32xf32>
    %c0_47 = arith.constant 0 : index
    %c0_48 = arith.constant 0 : index
    %97 = vector.load %arg21[%c0_47, %c0_48] : memref<64x32xf32, #tpu.memory_space<vmem>>, vector<8x32xf32>
    tpu.vector_store %arg21[%c0_47, %c0_48], %96 {strides = array<i32>} : memref<64x32xf32, #tpu.memory_space<vmem>>, vector<8x32xf32>,
    %98 = vector.extract_strided_slice %94 {offsets = [0, 32], sizes = [8, 32], strides = [1, 1]} : vector<8x64xf32> to vector<8x32xf32>
    %c0_49 = arith.constant 0 : index
    %c0_50 = arith.constant 0 : index
    %99 = vector.load %arg22[%c0_49, %c0_50] : memref<64x32xf32, #tpu.memory_space<vmem>>, vector<8x32xf32>
    tpu.vector_store %arg22[%c0_49, %c0_50], %98 {strides = array<i32>} : memref<64x32xf32, #tpu.memory_space<vmem>>, vector<8x32xf32>,
    %c1 = arith.constant 1 : index
    %c0_51 = arith.constant 0 : index
    %c0_52 = arith.constant 0 : index
    %100 = vector.load %arg10[%c1, %c0_51, %c0_52] : memref<8x32x64xbf16, #tpu.memory_space<vmem>>, vector<1x32x64xbf16>
    %101 = vector.shape_cast %100 : vector<1x32x64xbf16> to vector<32x64xbf16>
    %cst_53 = arith.constant dense<0.000000e+00> : vector<8x64xf32>
    %102 = tpu.matmul %80, %101, %cst_53 {dimension_numbers = #tpu.dot_dimension_numbers<[1], [0], [0], [1], [0, 0, 1, 1], [], []>} : vector<8x32xbf16>, vector<32x64xbf16>, vector<8x64xf32> -> vector<8x64xf32>
    %c1_54 = arith.constant 1 : index
    %c0_55 = arith.constant 0 : index
    %c0_56 = arith.constant 0 : index
    %103 = vector.load %arg11[%c1_54, %c0_55, %c0_56] : memref<8x1x64xf32, #tpu.memory_space<vmem>>, vector<1x1x64xf32>
    %104 = vector.shape_cast %103 : vector<1x1x64xf32> to vector<1x64xf32>
    %105 = vector.broadcast %104 : vector<1x64xf32> to vector<8x64xf32>
    %106 = arith.addf %102, %105 : vector<8x64xf32>
    %107 = vector.extract_strided_slice %106 {offsets = [0, 0], sizes = [8, 32], strides = [1, 1]} : vector<8x64xf32> to vector<8x32xf32>
    %108 = arith.mulf %87, %107 : vector<8x32xf32>
    %c8 = arith.constant 8 : index
    %c0_57 = arith.constant 0 : index
    %109 = vector.load %arg21[%c8, %c0_57] : memref<64x32xf32, #tpu.memory_space<vmem>>, vector<8x32xf32>
    tpu.vector_store %arg21[%c8, %c0_57], %108 {strides = array<i32>} : memref<64x32xf32, #tpu.memory_space<vmem>>, vector<8x32xf32>,
    %110 = vector.extract_strided_slice %106 {offsets = [0, 32], sizes = [8, 32], strides = [1, 1]} : vector<8x64xf32> to vector<8x32xf32>
    %c8_58 = arith.constant 8 : index
    %c0_59 = arith.constant 0 : index
    %111 = vector.load %arg22[%c8_58, %c0_59] : memref<64x32xf32, #tpu.memory_space<vmem>>, vector<8x32xf32>
    tpu.vector_store %arg22[%c8_58, %c0_59], %110 {strides = array<i32>} : memref<64x32xf32, #tpu.memory_space<vmem>>, vector<8x32xf32>,
    %c2 = arith.constant 2 : index
    %c0_60 = arith.constant 0 : index
    %c0_61 = arith.constant 0 : index
    %112 = vector.load %arg10[%c2, %c0_60, %c0_61] : memref<8x32x64xbf16, #tpu.memory_space<vmem>>, vector<1x32x64xbf16>
    %113 = vector.shape_cast %112 : vector<1x32x64xbf16> to vector<32x64xbf16>
    %cst_62 = arith.constant dense<0.000000e+00> : vector<8x64xf32>
    %114 = tpu.matmul %80, %113, %cst_62 {dimension_numbers = #tpu.dot_dimension_numbers<[1], [0], [0], [1], [0, 0, 1, 1], [], []>} : vector<8x32xbf16>, vector<32x64xbf16>, vector<8x64xf32> -> vector<8x64xf32>
    %c2_63 = arith.constant 2 : index
    %c0_64 = arith.constant 0 : index
    %c0_65 = arith.constant 0 : index
    %115 = vector.load %arg11[%c2_63, %c0_64, %c0_65] : memref<8x1x64xf32, #tpu.memory_space<vmem>>, vector<1x1x64xf32>
    %116 = vector.shape_cast %115 : vector<1x1x64xf32> to vector<1x64xf32>
    %117 = vector.broadcast %116 : vector<1x64xf32> to vector<8x64xf32>
    %118 = arith.addf %114, %117 : vector<8x64xf32>
    %119 = vector.extract_strided_slice %118 {offsets = [0, 0], sizes = [8, 32], strides = [1, 1]} : vector<8x64xf32> to vector<8x32xf32>
    %120 = arith.mulf %87, %119 : vector<8x32xf32>
    %c16 = arith.constant 16 : index
    %c0_66 = arith.constant 0 : index
    %121 = vector.load %arg21[%c16, %c0_66] : memref<64x32xf32, #tpu.memory_space<vmem>>, vector<8x32xf32>
    tpu.vector_store %arg21[%c16, %c0_66], %120 {strides = array<i32>} : memref<64x32xf32, #tpu.memory_space<vmem>>, vector<8x32xf32>,
    %122 = vector.extract_strided_slice %118 {offsets = [0, 32], sizes = [8, 32], strides = [1, 1]} : vector<8x64xf32> to vector<8x32xf32>
    %c16_67 = arith.constant 16 : index
    %c0_68 = arith.constant 0 : index
    %123 = vector.load %arg22[%c16_67, %c0_68] : memref<64x32xf32, #tpu.memory_space<vmem>>, vector<8x32xf32>
    tpu.vector_store %arg22[%c16_67, %c0_68], %122 {strides = array<i32>} : memref<64x32xf32, #tpu.memory_space<vmem>>, vector<8x32xf32>,
    %c3 = arith.constant 3 : index
    %c0_69 = arith.constant 0 : index
    %c0_70 = arith.constant 0 : index
    %124 = vector.load %arg10[%c3, %c0_69, %c0_70] : memref<8x32x64xbf16, #tpu.memory_space<vmem>>, vector<1x32x64xbf16>
    %125 = vector.shape_cast %124 : vector<1x32x64xbf16> to vector<32x64xbf16>
    %cst_71 = arith.constant dense<0.000000e+00> : vector<8x64xf32>
    %126 = tpu.matmul %80, %125, %cst_71 {dimension_numbers = #tpu.dot_dimension_numbers<[1], [0], [0], [1], [0, 0, 1, 1], [], []>} : vector<8x32xbf16>, vector<32x64xbf16>, vector<8x64xf32> -> vector<8x64xf32>
    %c3_72 = arith.constant 3 : index
    %c0_73 = arith.constant 0 : index
    %c0_74 = arith.constant 0 : index
    %127 = vector.load %arg11[%c3_72, %c0_73, %c0_74] : memref<8x1x64xf32, #tpu.memory_space<vmem>>, vector<1x1x64xf32>
    %128 = vector.shape_cast %127 : vector<1x1x64xf32> to vector<1x64xf32>
    %129 = vector.broadcast %128 : vector<1x64xf32> to vector<8x64xf32>
    %130 = arith.addf %126, %129 : vector<8x64xf32>
    %131 = vector.extract_strided_slice %130 {offsets = [0, 0], sizes = [8, 32], strides = [1, 1]} : vector<8x64xf32> to vector<8x32xf32>
    %132 = arith.mulf %87, %131 : vector<8x32xf32>
    %c24 = arith.constant 24 : index
    %c0_75 = arith.constant 0 : index
    %133 = vector.load %arg21[%c24, %c0_75] : memref<64x32xf32, #tpu.memory_space<vmem>>, vector<8x32xf32>
    tpu.vector_store %arg21[%c24, %c0_75], %132 {strides = array<i32>} : memref<64x32xf32, #tpu.memory_space<vmem>>, vector<8x32xf32>,
    %134 = vector.extract_strided_slice %130 {offsets = [0, 32], sizes = [8, 32], strides = [1, 1]} : vector<8x64xf32> to vector<8x32xf32>
    %c24_76 = arith.constant 24 : index
    %c0_77 = arith.constant 0 : index
    %135 = vector.load %arg22[%c24_76, %c0_77] : memref<64x32xf32, #tpu.memory_space<vmem>>, vector<8x32xf32>
    tpu.vector_store %arg22[%c24_76, %c0_77], %134 {strides = array<i32>} : memref<64x32xf32, #tpu.memory_space<vmem>>, vector<8x32xf32>,
    %c4 = arith.constant 4 : index
    %c0_78 = arith.constant 0 : index
    %c0_79 = arith.constant 0 : index
    %136 = vector.load %arg10[%c4, %c0_78, %c0_79] : memref<8x32x64xbf16, #tpu.memory_space<vmem>>, vector<1x32x64xbf16>
    %137 = vector.shape_cast %136 : vector<1x32x64xbf16> to vector<32x64xbf16>
    %cst_80 = arith.constant dense<0.000000e+00> : vector<8x64xf32>
    %138 = tpu.matmul %80, %137, %cst_80 {dimension_numbers = #tpu.dot_dimension_numbers<[1], [0], [0], [1], [0, 0, 1, 1], [], []>} : vector<8x32xbf16>, vector<32x64xbf16>, vector<8x64xf32> -> vector<8x64xf32>
    %c4_81 = arith.constant 4 : index
    %c0_82 = arith.constant 0 : index
    %c0_83 = arith.constant 0 : index
    %139 = vector.load %arg11[%c4_81, %c0_82, %c0_83] : memref<8x1x64xf32, #tpu.memory_space<vmem>>, vector<1x1x64xf32>
    %140 = vector.shape_cast %139 : vector<1x1x64xf32> to vector<1x64xf32>
    %141 = vector.broadcast %140 : vector<1x64xf32> to vector<8x64xf32>
    %142 = arith.addf %138, %141 : vector<8x64xf32>
    %143 = vector.extract_strided_slice %142 {offsets = [0, 0], sizes = [8, 32], strides = [1, 1]} : vector<8x64xf32> to vector<8x32xf32>
    %144 = arith.mulf %87, %143 : vector<8x32xf32>
    %c32 = arith.constant 32 : index
    %c0_84 = arith.constant 0 : index
    %145 = vector.load %arg21[%c32, %c0_84] : memref<64x32xf32, #tpu.memory_space<vmem>>, vector<8x32xf32>
    tpu.vector_store %arg21[%c32, %c0_84], %144 {strides = array<i32>} : memref<64x32xf32, #tpu.memory_space<vmem>>, vector<8x32xf32>,
    %146 = vector.extract_strided_slice %142 {offsets = [0, 32], sizes = [8, 32], strides = [1, 1]} : vector<8x64xf32> to vector<8x32xf32>
    %c32_85 = arith.constant 32 : index
    %c0_86 = arith.constant 0 : index
    %147 = vector.load %arg22[%c32_85, %c0_86] : memref<64x32xf32, #tpu.memory_space<vmem>>, vector<8x32xf32>
    tpu.vector_store %arg22[%c32_85, %c0_86], %146 {strides = array<i32>} : memref<64x32xf32, #tpu.memory_space<vmem>>, vector<8x32xf32>,
    %c5 = arith.constant 5 : index
    %c0_87 = arith.constant 0 : index
    %c0_88 = arith.constant 0 : index
    %148 = vector.load %arg10[%c5, %c0_87, %c0_88] : memref<8x32x64xbf16, #tpu.memory_space<vmem>>, vector<1x32x64xbf16>
    %149 = vector.shape_cast %148 : vector<1x32x64xbf16> to vector<32x64xbf16>
    %cst_89 = arith.constant dense<0.000000e+00> : vector<8x64xf32>
    %150 = tpu.matmul %80, %149, %cst_89 {dimension_numbers = #tpu.dot_dimension_numbers<[1], [0], [0], [1], [0, 0, 1, 1], [], []>} : vector<8x32xbf16>, vector<32x64xbf16>, vector<8x64xf32> -> vector<8x64xf32>
    %c5_90 = arith.constant 5 : index
    %c0_91 = arith.constant 0 : index
    %c0_92 = arith.constant 0 : index
    %151 = vector.load %arg11[%c5_90, %c0_91, %c0_92] : memref<8x1x64xf32, #tpu.memory_space<vmem>>, vector<1x1x64xf32>
    %152 = vector.shape_cast %151 : vector<1x1x64xf32> to vector<1x64xf32>
    %153 = vector.broadcast %152 : vector<1x64xf32> to vector<8x64xf32>
    %154 = arith.addf %150, %153 : vector<8x64xf32>
    %155 = vector.extract_strided_slice %154 {offsets = [0, 0], sizes = [8, 32], strides = [1, 1]} : vector<8x64xf32> to vector<8x32xf32>
    %156 = arith.mulf %87, %155 : vector<8x32xf32>
    %c40 = arith.constant 40 : index
    %c0_93 = arith.constant 0 : index
    %157 = vector.load %arg21[%c40, %c0_93] : memref<64x32xf32, #tpu.memory_space<vmem>>, vector<8x32xf32>
    tpu.vector_store %arg21[%c40, %c0_93], %156 {strides = array<i32>} : memref<64x32xf32, #tpu.memory_space<vmem>>, vector<8x32xf32>,
    %158 = vector.extract_strided_slice %154 {offsets = [0, 32], sizes = [8, 32], strides = [1, 1]} : vector<8x64xf32> to vector<8x32xf32>
    %c40_94 = arith.constant 40 : index
    %c0_95 = arith.constant 0 : index
    %159 = vector.load %arg22[%c40_94, %c0_95] : memref<64x32xf32, #tpu.memory_space<vmem>>, vector<8x32xf32>
    tpu.vector_store %arg22[%c40_94, %c0_95], %158 {strides = array<i32>} : memref<64x32xf32, #tpu.memory_space<vmem>>, vector<8x32xf32>,
    %c6 = arith.constant 6 : index
    %c0_96 = arith.constant 0 : index
    %c0_97 = arith.constant 0 : index
    %160 = vector.load %arg10[%c6, %c0_96, %c0_97] : memref<8x32x64xbf16, #tpu.memory_space<vmem>>, vector<1x32x64xbf16>
    %161 = vector.shape_cast %160 : vector<1x32x64xbf16> to vector<32x64xbf16>
    %cst_98 = arith.constant dense<0.000000e+00> : vector<8x64xf32>
    %162 = tpu.matmul %80, %161, %cst_98 {dimension_numbers = #tpu.dot_dimension_numbers<[1], [0], [0], [1], [0, 0, 1, 1], [], []>} : vector<8x32xbf16>, vector<32x64xbf16>, vector<8x64xf32> -> vector<8x64xf32>
    %c6_99 = arith.constant 6 : index
    %c0_100 = arith.constant 0 : index
    %c0_101 = arith.constant 0 : index
    %163 = vector.load %arg11[%c6_99, %c0_100, %c0_101] : memref<8x1x64xf32, #tpu.memory_space<vmem>>, vector<1x1x64xf32>
    %164 = vector.shape_cast %163 : vector<1x1x64xf32> to vector<1x64xf32>
    %165 = vector.broadcast %164 : vector<1x64xf32> to vector<8x64xf32>
    %166 = arith.addf %162, %165 : vector<8x64xf32>
    %167 = vector.extract_strided_slice %166 {offsets = [0, 0], sizes = [8, 32], strides = [1, 1]} : vector<8x64xf32> to vector<8x32xf32>
    %168 = arith.mulf %87, %167 : vector<8x32xf32>
    %c48 = arith.constant 48 : index
    %c0_102 = arith.constant 0 : index
    %169 = vector.load %arg21[%c48, %c0_102] : memref<64x32xf32, #tpu.memory_space<vmem>>, vector<8x32xf32>
    tpu.vector_store %arg21[%c48, %c0_102], %168 {strides = array<i32>} : memref<64x32xf32, #tpu.memory_space<vmem>>, vector<8x32xf32>,
    %170 = vector.extract_strided_slice %166 {offsets = [0, 32], sizes = [8, 32], strides = [1, 1]} : vector<8x64xf32> to vector<8x32xf32>
    %c48_103 = arith.constant 48 : index
    %c0_104 = arith.constant 0 : index
    %171 = vector.load %arg22[%c48_103, %c0_104] : memref<64x32xf32, #tpu.memory_space<vmem>>, vector<8x32xf32>
    tpu.vector_store %arg22[%c48_103, %c0_104], %170 {strides = array<i32>} : memref<64x32xf32, #tpu.memory_space<vmem>>, vector<8x32xf32>,
    %c7 = arith.constant 7 : index
    %c0_105 = arith.constant 0 : index
    %c0_106 = arith.constant 0 : index
    %172 = vector.load %arg10[%c7, %c0_105, %c0_106] : memref<8x32x64xbf16, #tpu.memory_space<vmem>>, vector<1x32x64xbf16>
    %173 = vector.shape_cast %172 : vector<1x32x64xbf16> to vector<32x64xbf16>
    %cst_107 = arith.constant dense<0.000000e+00> : vector<8x64xf32>
    %174 = tpu.matmul %80, %173, %cst_107 {dimension_numbers = #tpu.dot_dimension_numbers<[1], [0], [0], [1], [0, 0, 1, 1], [], []>} : vector<8x32xbf16>, vector<32x64xbf16>, vector<8x64xf32> -> vector<8x64xf32>
    %c7_108 = arith.constant 7 : index
    %c0_109 = arith.constant 0 : index
    %c0_110 = arith.constant 0 : index
    %175 = vector.load %arg11[%c7_108, %c0_109, %c0_110] : memref<8x1x64xf32, #tpu.memory_space<vmem>>, vector<1x1x64xf32>
    %176 = vector.shape_cast %175 : vector<1x1x64xf32> to vector<1x64xf32>
    %177 = vector.broadcast %176 : vector<1x64xf32> to vector<8x64xf32>
    %178 = arith.addf %174, %177 : vector<8x64xf32>
    %179 = vector.extract_strided_slice %178 {offsets = [0, 0], sizes = [8, 32], strides = [1, 1]} : vector<8x64xf32> to vector<8x32xf32>
    %180 = arith.mulf %87, %179 : vector<8x32xf32>
    %c56 = arith.constant 56 : index
    %c0_111 = arith.constant 0 : index
    %181 = vector.load %arg21[%c56, %c0_111] : memref<64x32xf32, #tpu.memory_space<vmem>>, vector<8x32xf32>
    tpu.vector_store %arg21[%c56, %c0_111], %180 {strides = array<i32>} : memref<64x32xf32, #tpu.memory_space<vmem>>, vector<8x32xf32>,
    %182 = vector.extract_strided_slice %178 {offsets = [0, 32], sizes = [8, 32], strides = [1, 1]} : vector<8x64xf32> to vector<8x32xf32>
    %c56_112 = arith.constant 56 : index
    %c0_113 = arith.constant 0 : index
    %183 = vector.load %arg22[%c56_112, %c0_113] : memref<64x32xf32, #tpu.memory_space<vmem>>, vector<8x32xf32>
    tpu.vector_store %arg22[%c56_112, %c0_113], %182 {strides = array<i32>} : memref<64x32xf32, #tpu.memory_space<vmem>>, vector<8x32xf32>,
    %c0_i32_114 = arith.constant 0 : i32
    %184 = arith.cmpi eq, %arg1, %c0_i32_114 : i32
    %185 = arith.extui %184 : i1 to i32
    %c0_i32_115 = arith.constant 0 : i32
    %186 = arith.cmpi ne, %185, %c0_i32_115 : i32
    scf.if %186 {
      %cst_429 = arith.constant 0.000000e+00 : f32
      %763 = vector.broadcast %cst_429 : f32 to vector<8x32xf32>
      %c0_430 = arith.constant 0 : index
      %c0_431 = arith.constant 0 : index
      %764 = vector.load %arg25[%c0_430, %c0_431] : memref<8x32xf32, #tpu.memory_space<vmem>>, vector<8x32xf32>
      tpu.vector_store %arg25[%c0_430, %c0_431], %763 {strides = array<i32>} : memref<8x32xf32, #tpu.memory_space<vmem>>, vector<8x32xf32>,
    } else {
    }
    %c0_116 = arith.constant 0 : index
    %c0_117 = arith.constant 0 : index
    %187 = vector.load %arg14[%c0_116, %c0_117] : memref<8x32xf32, #tpu.memory_space<vmem>>, vector<8x32xf32>
    %c0_118 = arith.constant 0 : index
    %c0_119 = arith.constant 0 : index
    %188 = vector.load %arg25[%c0_118, %c0_119] : memref<8x32xf32, #tpu.memory_space<vmem>>, vector<8x32xf32>
    %c0_i32_120 = arith.constant 0 : i32
    %c8_i32 = arith.constant 8 : i32
    %189 = arith.muli %c0_i32_120, %c8_i32 : i32
    %190 = tpu.assume_multiple %189, 8 : i32
    %c0_i32_121 = arith.constant 0 : i32
    %191 = arith.addi %190, %c0_i32_121 : i32
    %192 = arith.index_cast %191 : i32 to index
    %c0_122 = arith.constant 0 : index
    %193 = vector.load %arg23[%192, %c0_122] : memref<8x32xf32, #tpu.memory_space<vmem>>, vector<1x32xf32>
    %194 = vector.broadcast %193 : vector<1x32xf32> to vector<8x32xf32>
    %195 = arith.mulf %194, %187 : vector<8x32xf32>
    %196 = math.exp %195 : vector<8x32xf32>
    %c0_i32_123 = arith.constant 0 : i32
    %197 = arith.addi %191, %c0_i32_123 : i32
    %198 = arith.index_cast %197 : i32 to index
    %c0_124 = arith.constant 0 : index
    %199 = vector.load %arg21[%198, %c0_124] : memref<64x32xf32, #tpu.memory_space<vmem>>, vector<1x32xf32>
    %c8_i32_125 = arith.constant 8 : i32
    %200 = arith.addi %191, %c8_i32_125 : i32
    %201 = arith.index_cast %200 : i32 to index
    %c0_126 = arith.constant 0 : index
    %202 = vector.load %arg21[%201, %c0_126] : memref<64x32xf32, #tpu.memory_space<vmem>>, vector<1x32xf32>
    %c16_i32 = arith.constant 16 : i32
    %203 = arith.addi %191, %c16_i32 : i32
    %204 = arith.index_cast %203 : i32 to index
    %c0_127 = arith.constant 0 : index
    %205 = vector.load %arg21[%204, %c0_127] : memref<64x32xf32, #tpu.memory_space<vmem>>, vector<1x32xf32>
    %c24_i32 = arith.constant 24 : i32
    %206 = arith.addi %191, %c24_i32 : i32
    %207 = arith.index_cast %206 : i32 to index
    %c0_128 = arith.constant 0 : index
    %208 = vector.load %arg21[%207, %c0_128] : memref<64x32xf32, #tpu.memory_space<vmem>>, vector<1x32xf32>
    %c32_i32 = arith.constant 32 : i32
    %209 = arith.addi %191, %c32_i32 : i32
    %210 = arith.index_cast %209 : i32 to index
    %c0_129 = arith.constant 0 : index
    %211 = vector.load %arg21[%210, %c0_129] : memref<64x32xf32, #tpu.memory_space<vmem>>, vector<1x32xf32>
    %c40_i32 = arith.constant 40 : i32
    %212 = arith.addi %191, %c40_i32 : i32
    %213 = arith.index_cast %212 : i32 to index
    %c0_130 = arith.constant 0 : index
    %214 = vector.load %arg21[%213, %c0_130] : memref<64x32xf32, #tpu.memory_space<vmem>>, vector<1x32xf32>
    %c48_i32 = arith.constant 48 : i32
    %215 = arith.addi %191, %c48_i32 : i32
    %216 = arith.index_cast %215 : i32 to index
    %c0_131 = arith.constant 0 : index
    %217 = vector.load %arg21[%216, %c0_131] : memref<64x32xf32, #tpu.memory_space<vmem>>, vector<1x32xf32>
    %c56_i32 = arith.constant 56 : i32
    %218 = arith.addi %191, %c56_i32 : i32
    %219 = arith.index_cast %218 : i32 to index
    %c0_132 = arith.constant 0 : index
    %220 = vector.load %arg21[%219, %c0_132] : memref<64x32xf32, #tpu.memory_space<vmem>>, vector<1x32xf32>
    %221 = tpu.concatenate %199, %202, %205, %208, %211, %214, %217, %220 in 0 : vector<1x32xf32>, vector<1x32xf32>, vector<1x32xf32>, vector<1x32xf32>, vector<1x32xf32>, vector<1x32xf32>, vector<1x32xf32>, vector<1x32xf32> -> vector<8x32xf32>
    %c0_i32_133 = arith.constant 0 : i32
    %222 = arith.addi %191, %c0_i32_133 : i32
    %223 = arith.index_cast %222 : i32 to index
    %c0_134 = arith.constant 0 : index
    %224 = vector.load %arg22[%223, %c0_134] : memref<64x32xf32, #tpu.memory_space<vmem>>, vector<1x32xf32>
    %c8_i32_135 = arith.constant 8 : i32
    %225 = arith.addi %191, %c8_i32_135 : i32
    %226 = arith.index_cast %225 : i32 to index
    %c0_136 = arith.constant 0 : index
    %227 = vector.load %arg22[%226, %c0_136] : memref<64x32xf32, #tpu.memory_space<vmem>>, vector<1x32xf32>
    %c16_i32_137 = arith.constant 16 : i32
    %228 = arith.addi %191, %c16_i32_137 : i32
    %229 = arith.index_cast %228 : i32 to index
    %c0_138 = arith.constant 0 : index
    %230 = vector.load %arg22[%229, %c0_138] : memref<64x32xf32, #tpu.memory_space<vmem>>, vector<1x32xf32>
    %c24_i32_139 = arith.constant 24 : i32
    %231 = arith.addi %191, %c24_i32_139 : i32
    %232 = arith.index_cast %231 : i32 to index
    %c0_140 = arith.constant 0 : index
    %233 = vector.load %arg22[%232, %c0_140] : memref<64x32xf32, #tpu.memory_space<vmem>>, vector<1x32xf32>
    %c32_i32_141 = arith.constant 32 : i32
    %234 = arith.addi %191, %c32_i32_141 : i32
    %235 = arith.index_cast %234 : i32 to index
    %c0_142 = arith.constant 0 : index
    %236 = vector.load %arg22[%235, %c0_142] : memref<64x32xf32, #tpu.memory_space<vmem>>, vector<1x32xf32>
    %c40_i32_143 = arith.constant 40 : i32
    %237 = arith.addi %191, %c40_i32_143 : i32
    %238 = arith.index_cast %237 : i32 to index
    %c0_144 = arith.constant 0 : index
    %239 = vector.load %arg22[%238, %c0_144] : memref<64x32xf32, #tpu.memory_space<vmem>>, vector<1x32xf32>
    %c48_i32_145 = arith.constant 48 : i32
    %240 = arith.addi %191, %c48_i32_145 : i32
    %241 = arith.index_cast %240 : i32 to index
    %c0_146 = arith.constant 0 : index
    %242 = vector.load %arg22[%241, %c0_146] : memref<64x32xf32, #tpu.memory_space<vmem>>, vector<1x32xf32>
    %c56_i32_147 = arith.constant 56 : i32
    %243 = arith.addi %191, %c56_i32_147 : i32
    %244 = arith.index_cast %243 : i32 to index
    %c0_148 = arith.constant 0 : index
    %245 = vector.load %arg22[%244, %c0_148] : memref<64x32xf32, #tpu.memory_space<vmem>>, vector<1x32xf32>
    %246 = tpu.concatenate %224, %227, %230, %233, %236, %239, %242, %245 in 0 : vector<1x32xf32>, vector<1x32xf32>, vector<1x32xf32>, vector<1x32xf32>, vector<1x32xf32>, vector<1x32xf32>, vector<1x32xf32>, vector<1x32xf32> -> vector<8x32xf32>
    %247 = arith.mulf %196, %188 : vector<8x32xf32>
    %248 = arith.addf %247, %221 : vector<8x32xf32>
    %249 = arith.mulf %246, %248 : vector<8x32xf32>
    %cst_149 = arith.constant dense<0.000000e+00> : vector<32xf32>
    %250 = vector.multi_reduction <add>, %249, %cst_149 [0] : vector<8x32xf32> to vector<32xf32>
    %251 = vector.shape_cast %250 : vector<32xf32> to vector<1x32xf32>
    %c1_i32_150 = arith.constant 1 : i32
    %252 = arith.addi %190, %c1_i32_150 : i32
    %253 = arith.index_cast %252 : i32 to index
    %c0_151 = arith.constant 0 : index
    %254 = vector.load %arg23[%253, %c0_151] : memref<8x32xf32, #tpu.memory_space<vmem>>, vector<1x32xf32>
    %255 = vector.broadcast %254 : vector<1x32xf32> to vector<8x32xf32>
    %256 = arith.mulf %255, %187 : vector<8x32xf32>
    %257 = math.exp %256 : vector<8x32xf32>
    %c0_i32_152 = arith.constant 0 : i32
    %258 = arith.addi %252, %c0_i32_152 : i32
    %259 = arith.index_cast %258 : i32 to index
    %c0_153 = arith.constant 0 : index
    %260 = vector.load %arg21[%259, %c0_153] : memref<64x32xf32, #tpu.memory_space<vmem>>, vector<1x32xf32>
    %c8_i32_154 = arith.constant 8 : i32
    %261 = arith.addi %252, %c8_i32_154 : i32
    %262 = arith.index_cast %261 : i32 to index
    %c0_155 = arith.constant 0 : index
    %263 = vector.load %arg21[%262, %c0_155] : memref<64x32xf32, #tpu.memory_space<vmem>>, vector<1x32xf32>
    %c16_i32_156 = arith.constant 16 : i32
    %264 = arith.addi %252, %c16_i32_156 : i32
    %265 = arith.index_cast %264 : i32 to index
    %c0_157 = arith.constant 0 : index
    %266 = vector.load %arg21[%265, %c0_157] : memref<64x32xf32, #tpu.memory_space<vmem>>, vector<1x32xf32>
    %c24_i32_158 = arith.constant 24 : i32
    %267 = arith.addi %252, %c24_i32_158 : i32
    %268 = arith.index_cast %267 : i32 to index
    %c0_159 = arith.constant 0 : index
    %269 = vector.load %arg21[%268, %c0_159] : memref<64x32xf32, #tpu.memory_space<vmem>>, vector<1x32xf32>
    %c32_i32_160 = arith.constant 32 : i32
    %270 = arith.addi %252, %c32_i32_160 : i32
    %271 = arith.index_cast %270 : i32 to index
    %c0_161 = arith.constant 0 : index
    %272 = vector.load %arg21[%271, %c0_161] : memref<64x32xf32, #tpu.memory_space<vmem>>, vector<1x32xf32>
    %c40_i32_162 = arith.constant 40 : i32
    %273 = arith.addi %252, %c40_i32_162 : i32
    %274 = arith.index_cast %273 : i32 to index
    %c0_163 = arith.constant 0 : index
    %275 = vector.load %arg21[%274, %c0_163] : memref<64x32xf32, #tpu.memory_space<vmem>>, vector<1x32xf32>
    %c48_i32_164 = arith.constant 48 : i32
    %276 = arith.addi %252, %c48_i32_164 : i32
    %277 = arith.index_cast %276 : i32 to index
    %c0_165 = arith.constant 0 : index
    %278 = vector.load %arg21[%277, %c0_165] : memref<64x32xf32, #tpu.memory_space<vmem>>, vector<1x32xf32>
    %c56_i32_166 = arith.constant 56 : i32
    %279 = arith.addi %252, %c56_i32_166 : i32
    %280 = arith.index_cast %279 : i32 to index
    %c0_167 = arith.constant 0 : index
    %281 = vector.load %arg21[%280, %c0_167] : memref<64x32xf32, #tpu.memory_space<vmem>>, vector<1x32xf32>
    %282 = tpu.concatenate %260, %263, %266, %269, %272, %275, %278, %281 in 0 : vector<1x32xf32>, vector<1x32xf32>, vector<1x32xf32>, vector<1x32xf32>, vector<1x32xf32>, vector<1x32xf32>, vector<1x32xf32>, vector<1x32xf32> -> vector<8x32xf32>
    %c0_i32_168 = arith.constant 0 : i32
    %283 = arith.addi %252, %c0_i32_168 : i32
    %284 = arith.index_cast %283 : i32 to index
    %c0_169 = arith.constant 0 : index
    %285 = vector.load %arg22[%284, %c0_169] : memref<64x32xf32, #tpu.memory_space<vmem>>, vector<1x32xf32>
    %c8_i32_170 = arith.constant 8 : i32
    %286 = arith.addi %252, %c8_i32_170 : i32
    %287 = arith.index_cast %286 : i32 to index
    %c0_171 = arith.constant 0 : index
    %288 = vector.load %arg22[%287, %c0_171] : memref<64x32xf32, #tpu.memory_space<vmem>>, vector<1x32xf32>
    %c16_i32_172 = arith.constant 16 : i32
    %289 = arith.addi %252, %c16_i32_172 : i32
    %290 = arith.index_cast %289 : i32 to index
    %c0_173 = arith.constant 0 : index
    %291 = vector.load %arg22[%290, %c0_173] : memref<64x32xf32, #tpu.memory_space<vmem>>, vector<1x32xf32>
    %c24_i32_174 = arith.constant 24 : i32
    %292 = arith.addi %252, %c24_i32_174 : i32
    %293 = arith.index_cast %292 : i32 to index
    %c0_175 = arith.constant 0 : index
    %294 = vector.load %arg22[%293, %c0_175] : memref<64x32xf32, #tpu.memory_space<vmem>>, vector<1x32xf32>
    %c32_i32_176 = arith.constant 32 : i32
    %295 = arith.addi %252, %c32_i32_176 : i32
    %296 = arith.index_cast %295 : i32 to index
    %c0_177 = arith.constant 0 : index
    %297 = vector.load %arg22[%296, %c0_177] : memref<64x32xf32, #tpu.memory_space<vmem>>, vector<1x32xf32>
    %c40_i32_178 = arith.constant 40 : i32
    %298 = arith.addi %252, %c40_i32_178 : i32
    %299 = arith.index_cast %298 : i32 to index
    %c0_179 = arith.constant 0 : index
    %300 = vector.load %arg22[%299, %c0_179] : memref<64x32xf32, #tpu.memory_space<vmem>>, vector<1x32xf32>
    %c48_i32_180 = arith.constant 48 : i32
    %301 = arith.addi %252, %c48_i32_180 : i32
    %302 = arith.index_cast %301 : i32 to index
    %c0_181 = arith.constant 0 : index
    %303 = vector.load %arg22[%302, %c0_181] : memref<64x32xf32, #tpu.memory_space<vmem>>, vector<1x32xf32>
    %c56_i32_182 = arith.constant 56 : i32
    %304 = arith.addi %252, %c56_i32_182 : i32
    %305 = arith.index_cast %304 : i32 to index
    %c0_183 = arith.constant 0 : index
    %306 = vector.load %arg22[%305, %c0_183] : memref<64x32xf32, #tpu.memory_space<vmem>>, vector<1x32xf32>
    %307 = tpu.concatenate %285, %288, %291, %294, %297, %300, %303, %306 in 0 : vector<1x32xf32>, vector<1x32xf32>, vector<1x32xf32>, vector<1x32xf32>, vector<1x32xf32>, vector<1x32xf32>, vector<1x32xf32>, vector<1x32xf32> -> vector<8x32xf32>
    %308 = arith.mulf %257, %248 : vector<8x32xf32>
    %309 = arith.addf %308, %282 : vector<8x32xf32>
    %310 = arith.mulf %307, %309 : vector<8x32xf32>
    %cst_184 = arith.constant dense<0.000000e+00> : vector<32xf32>
    %311 = vector.multi_reduction <add>, %310, %cst_184 [0] : vector<8x32xf32> to vector<32xf32>
    %312 = vector.shape_cast %311 : vector<32xf32> to vector<1x32xf32>
    %c2_i32 = arith.constant 2 : i32
    %313 = arith.addi %190, %c2_i32 : i32
    %314 = arith.index_cast %313 : i32 to index
    %c0_185 = arith.constant 0 : index
    %315 = vector.load %arg23[%314, %c0_185] : memref<8x32xf32, #tpu.memory_space<vmem>>, vector<1x32xf32>
    %316 = vector.broadcast %315 : vector<1x32xf32> to vector<8x32xf32>
    %317 = arith.mulf %316, %187 : vector<8x32xf32>
    %318 = math.exp %317 : vector<8x32xf32>
    %c0_i32_186 = arith.constant 0 : i32
    %319 = arith.addi %313, %c0_i32_186 : i32
    %320 = arith.index_cast %319 : i32 to index
    %c0_187 = arith.constant 0 : index
    %321 = vector.load %arg21[%320, %c0_187] : memref<64x32xf32, #tpu.memory_space<vmem>>, vector<1x32xf32>
    %c8_i32_188 = arith.constant 8 : i32
    %322 = arith.addi %313, %c8_i32_188 : i32
    %323 = arith.index_cast %322 : i32 to index
    %c0_189 = arith.constant 0 : index
    %324 = vector.load %arg21[%323, %c0_189] : memref<64x32xf32, #tpu.memory_space<vmem>>, vector<1x32xf32>
    %c16_i32_190 = arith.constant 16 : i32
    %325 = arith.addi %313, %c16_i32_190 : i32
    %326 = arith.index_cast %325 : i32 to index
    %c0_191 = arith.constant 0 : index
    %327 = vector.load %arg21[%326, %c0_191] : memref<64x32xf32, #tpu.memory_space<vmem>>, vector<1x32xf32>
    %c24_i32_192 = arith.constant 24 : i32
    %328 = arith.addi %313, %c24_i32_192 : i32
    %329 = arith.index_cast %328 : i32 to index
    %c0_193 = arith.constant 0 : index
    %330 = vector.load %arg21[%329, %c0_193] : memref<64x32xf32, #tpu.memory_space<vmem>>, vector<1x32xf32>
    %c32_i32_194 = arith.constant 32 : i32
    %331 = arith.addi %313, %c32_i32_194 : i32
    %332 = arith.index_cast %331 : i32 to index
    %c0_195 = arith.constant 0 : index
    %333 = vector.load %arg21[%332, %c0_195] : memref<64x32xf32, #tpu.memory_space<vmem>>, vector<1x32xf32>
    %c40_i32_196 = arith.constant 40 : i32
    %334 = arith.addi %313, %c40_i32_196 : i32
    %335 = arith.index_cast %334 : i32 to index
    %c0_197 = arith.constant 0 : index
    %336 = vector.load %arg21[%335, %c0_197] : memref<64x32xf32, #tpu.memory_space<vmem>>, vector<1x32xf32>
    %c48_i32_198 = arith.constant 48 : i32
    %337 = arith.addi %313, %c48_i32_198 : i32
    %338 = arith.index_cast %337 : i32 to index
    %c0_199 = arith.constant 0 : index
    %339 = vector.load %arg21[%338, %c0_199] : memref<64x32xf32, #tpu.memory_space<vmem>>, vector<1x32xf32>
    %c56_i32_200 = arith.constant 56 : i32
    %340 = arith.addi %313, %c56_i32_200 : i32
    %341 = arith.index_cast %340 : i32 to index
    %c0_201 = arith.constant 0 : index
    %342 = vector.load %arg21[%341, %c0_201] : memref<64x32xf32, #tpu.memory_space<vmem>>, vector<1x32xf32>
    %343 = tpu.concatenate %321, %324, %327, %330, %333, %336, %339, %342 in 0 : vector<1x32xf32>, vector<1x32xf32>, vector<1x32xf32>, vector<1x32xf32>, vector<1x32xf32>, vector<1x32xf32>, vector<1x32xf32>, vector<1x32xf32> -> vector<8x32xf32>
    %c0_i32_202 = arith.constant 0 : i32
    %344 = arith.addi %313, %c0_i32_202 : i32
    %345 = arith.index_cast %344 : i32 to index
    %c0_203 = arith.constant 0 : index
    %346 = vector.load %arg22[%345, %c0_203] : memref<64x32xf32, #tpu.memory_space<vmem>>, vector<1x32xf32>
    %c8_i32_204 = arith.constant 8 : i32
    %347 = arith.addi %313, %c8_i32_204 : i32
    %348 = arith.index_cast %347 : i32 to index
    %c0_205 = arith.constant 0 : index
    %349 = vector.load %arg22[%348, %c0_205] : memref<64x32xf32, #tpu.memory_space<vmem>>, vector<1x32xf32>
    %c16_i32_206 = arith.constant 16 : i32
    %350 = arith.addi %313, %c16_i32_206 : i32
    %351 = arith.index_cast %350 : i32 to index
    %c0_207 = arith.constant 0 : index
    %352 = vector.load %arg22[%351, %c0_207] : memref<64x32xf32, #tpu.memory_space<vmem>>, vector<1x32xf32>
    %c24_i32_208 = arith.constant 24 : i32
    %353 = arith.addi %313, %c24_i32_208 : i32
    %354 = arith.index_cast %353 : i32 to index
    %c0_209 = arith.constant 0 : index
    %355 = vector.load %arg22[%354, %c0_209] : memref<64x32xf32, #tpu.memory_space<vmem>>, vector<1x32xf32>
    %c32_i32_210 = arith.constant 32 : i32
    %356 = arith.addi %313, %c32_i32_210 : i32
    %357 = arith.index_cast %356 : i32 to index
    %c0_211 = arith.constant 0 : index
    %358 = vector.load %arg22[%357, %c0_211] : memref<64x32xf32, #tpu.memory_space<vmem>>, vector<1x32xf32>
    %c40_i32_212 = arith.constant 40 : i32
    %359 = arith.addi %313, %c40_i32_212 : i32
    %360 = arith.index_cast %359 : i32 to index
    %c0_213 = arith.constant 0 : index
    %361 = vector.load %arg22[%360, %c0_213] : memref<64x32xf32, #tpu.memory_space<vmem>>, vector<1x32xf32>
    %c48_i32_214 = arith.constant 48 : i32
    %362 = arith.addi %313, %c48_i32_214 : i32
    %363 = arith.index_cast %362 : i32 to index
    %c0_215 = arith.constant 0 : index
    %364 = vector.load %arg22[%363, %c0_215] : memref<64x32xf32, #tpu.memory_space<vmem>>, vector<1x32xf32>
    %c56_i32_216 = arith.constant 56 : i32
    %365 = arith.addi %313, %c56_i32_216 : i32
    %366 = arith.index_cast %365 : i32 to index
    %c0_217 = arith.constant 0 : index
    %367 = vector.load %arg22[%366, %c0_217] : memref<64x32xf32, #tpu.memory_space<vmem>>, vector<1x32xf32>
    %368 = tpu.concatenate %346, %349, %352, %355, %358, %361, %364, %367 in 0 : vector<1x32xf32>, vector<1x32xf32>, vector<1x32xf32>, vector<1x32xf32>, vector<1x32xf32>, vector<1x32xf32>, vector<1x32xf32>, vector<1x32xf32> -> vector<8x32xf32>
    %369 = arith.mulf %318, %309 : vector<8x32xf32>
    %370 = arith.addf %369, %343 : vector<8x32xf32>
    %371 = arith.mulf %368, %370 : vector<8x32xf32>
    %cst_218 = arith.constant dense<0.000000e+00> : vector<32xf32>
    %372 = vector.multi_reduction <add>, %371, %cst_218 [0] : vector<8x32xf32> to vector<32xf32>
    %373 = vector.shape_cast %372 : vector<32xf32> to vector<1x32xf32>
    %c3_i32 = arith.constant 3 : i32
    %374 = arith.addi %190, %c3_i32 : i32
    %375 = arith.index_cast %374 : i32 to index
    %c0_219 = arith.constant 0 : index
    %376 = vector.load %arg23[%375, %c0_219] : memref<8x32xf32, #tpu.memory_space<vmem>>, vector<1x32xf32>
    %377 = vector.broadcast %376 : vector<1x32xf32> to vector<8x32xf32>
    %378 = arith.mulf %377, %187 : vector<8x32xf32>
    %379 = math.exp %378 : vector<8x32xf32>
    %c0_i32_220 = arith.constant 0 : i32
    %380 = arith.addi %374, %c0_i32_220 : i32
    %381 = arith.index_cast %380 : i32 to index
    %c0_221 = arith.constant 0 : index
    %382 = vector.load %arg21[%381, %c0_221] : memref<64x32xf32, #tpu.memory_space<vmem>>, vector<1x32xf32>
    %c8_i32_222 = arith.constant 8 : i32
    %383 = arith.addi %374, %c8_i32_222 : i32
    %384 = arith.index_cast %383 : i32 to index
    %c0_223 = arith.constant 0 : index
    %385 = vector.load %arg21[%384, %c0_223] : memref<64x32xf32, #tpu.memory_space<vmem>>, vector<1x32xf32>
    %c16_i32_224 = arith.constant 16 : i32
    %386 = arith.addi %374, %c16_i32_224 : i32
    %387 = arith.index_cast %386 : i32 to index
    %c0_225 = arith.constant 0 : index
    %388 = vector.load %arg21[%387, %c0_225] : memref<64x32xf32, #tpu.memory_space<vmem>>, vector<1x32xf32>
    %c24_i32_226 = arith.constant 24 : i32
    %389 = arith.addi %374, %c24_i32_226 : i32
    %390 = arith.index_cast %389 : i32 to index
    %c0_227 = arith.constant 0 : index
    %391 = vector.load %arg21[%390, %c0_227] : memref<64x32xf32, #tpu.memory_space<vmem>>, vector<1x32xf32>
    %c32_i32_228 = arith.constant 32 : i32
    %392 = arith.addi %374, %c32_i32_228 : i32
    %393 = arith.index_cast %392 : i32 to index
    %c0_229 = arith.constant 0 : index
    %394 = vector.load %arg21[%393, %c0_229] : memref<64x32xf32, #tpu.memory_space<vmem>>, vector<1x32xf32>
    %c40_i32_230 = arith.constant 40 : i32
    %395 = arith.addi %374, %c40_i32_230 : i32
    %396 = arith.index_cast %395 : i32 to index
    %c0_231 = arith.constant 0 : index
    %397 = vector.load %arg21[%396, %c0_231] : memref<64x32xf32, #tpu.memory_space<vmem>>, vector<1x32xf32>
    %c48_i32_232 = arith.constant 48 : i32
    %398 = arith.addi %374, %c48_i32_232 : i32
    %399 = arith.index_cast %398 : i32 to index
    %c0_233 = arith.constant 0 : index
    %400 = vector.load %arg21[%399, %c0_233] : memref<64x32xf32, #tpu.memory_space<vmem>>, vector<1x32xf32>
    %c56_i32_234 = arith.constant 56 : i32
    %401 = arith.addi %374, %c56_i32_234 : i32
    %402 = arith.index_cast %401 : i32 to index
    %c0_235 = arith.constant 0 : index
    %403 = vector.load %arg21[%402, %c0_235] : memref<64x32xf32, #tpu.memory_space<vmem>>, vector<1x32xf32>
    %404 = tpu.concatenate %382, %385, %388, %391, %394, %397, %400, %403 in 0 : vector<1x32xf32>, vector<1x32xf32>, vector<1x32xf32>, vector<1x32xf32>, vector<1x32xf32>, vector<1x32xf32>, vector<1x32xf32>, vector<1x32xf32> -> vector<8x32xf32>
    %c0_i32_236 = arith.constant 0 : i32
    %405 = arith.addi %374, %c0_i32_236 : i32
    %406 = arith.index_cast %405 : i32 to index
    %c0_237 = arith.constant 0 : index
    %407 = vector.load %arg22[%406, %c0_237] : memref<64x32xf32, #tpu.memory_space<vmem>>, vector<1x32xf32>
    %c8_i32_238 = arith.constant 8 : i32
    %408 = arith.addi %374, %c8_i32_238 : i32
    %409 = arith.index_cast %408 : i32 to index
    %c0_239 = arith.constant 0 : index
    %410 = vector.load %arg22[%409, %c0_239] : memref<64x32xf32, #tpu.memory_space<vmem>>, vector<1x32xf32>
    %c16_i32_240 = arith.constant 16 : i32
    %411 = arith.addi %374, %c16_i32_240 : i32
    %412 = arith.index_cast %411 : i32 to index
    %c0_241 = arith.constant 0 : index
    %413 = vector.load %arg22[%412, %c0_241] : memref<64x32xf32, #tpu.memory_space<vmem>>, vector<1x32xf32>
    %c24_i32_242 = arith.constant 24 : i32
    %414 = arith.addi %374, %c24_i32_242 : i32
    %415 = arith.index_cast %414 : i32 to index
    %c0_243 = arith.constant 0 : index
    %416 = vector.load %arg22[%415, %c0_243] : memref<64x32xf32, #tpu.memory_space<vmem>>, vector<1x32xf32>
    %c32_i32_244 = arith.constant 32 : i32
    %417 = arith.addi %374, %c32_i32_244 : i32
    %418 = arith.index_cast %417 : i32 to index
    %c0_245 = arith.constant 0 : index
    %419 = vector.load %arg22[%418, %c0_245] : memref<64x32xf32, #tpu.memory_space<vmem>>, vector<1x32xf32>
    %c40_i32_246 = arith.constant 40 : i32
    %420 = arith.addi %374, %c40_i32_246 : i32
    %421 = arith.index_cast %420 : i32 to index
    %c0_247 = arith.constant 0 : index
    %422 = vector.load %arg22[%421, %c0_247] : memref<64x32xf32, #tpu.memory_space<vmem>>, vector<1x32xf32>
    %c48_i32_248 = arith.constant 48 : i32
    %423 = arith.addi %374, %c48_i32_248 : i32
    %424 = arith.index_cast %423 : i32 to index
    %c0_249 = arith.constant 0 : index
    %425 = vector.load %arg22[%424, %c0_249] : memref<64x32xf32, #tpu.memory_space<vmem>>, vector<1x32xf32>
    %c56_i32_250 = arith.constant 56 : i32
    %426 = arith.addi %374, %c56_i32_250 : i32
    %427 = arith.index_cast %426 : i32 to index
    %c0_251 = arith.constant 0 : index
    %428 = vector.load %arg22[%427, %c0_251] : memref<64x32xf32, #tpu.memory_space<vmem>>, vector<1x32xf32>
    %429 = tpu.concatenate %407, %410, %413, %416, %419, %422, %425, %428 in 0 : vector<1x32xf32>, vector<1x32xf32>, vector<1x32xf32>, vector<1x32xf32>, vector<1x32xf32>, vector<1x32xf32>, vector<1x32xf32>, vector<1x32xf32> -> vector<8x32xf32>
    %430 = arith.mulf %379, %370 : vector<8x32xf32>
    %431 = arith.addf %430, %404 : vector<8x32xf32>
    %432 = arith.mulf %429, %431 : vector<8x32xf32>
    %cst_252 = arith.constant dense<0.000000e+00> : vector<32xf32>
    %433 = vector.multi_reduction <add>, %432, %cst_252 [0] : vector<8x32xf32> to vector<32xf32>
    %434 = vector.shape_cast %433 : vector<32xf32> to vector<1x32xf32>
    %c4_i32 = arith.constant 4 : i32
    %435 = arith.addi %190, %c4_i32 : i32
    %436 = arith.index_cast %435 : i32 to index
    %c0_253 = arith.constant 0 : index
    %437 = vector.load %arg23[%436, %c0_253] : memref<8x32xf32, #tpu.memory_space<vmem>>, vector<1x32xf32>
    %438 = vector.broadcast %437 : vector<1x32xf32> to vector<8x32xf32>
    %439 = arith.mulf %438, %187 : vector<8x32xf32>
    %440 = math.exp %439 : vector<8x32xf32>
    %c0_i32_254 = arith.constant 0 : i32
    %441 = arith.addi %435, %c0_i32_254 : i32
    %442 = arith.index_cast %441 : i32 to index
    %c0_255 = arith.constant 0 : index
    %443 = vector.load %arg21[%442, %c0_255] : memref<64x32xf32, #tpu.memory_space<vmem>>, vector<1x32xf32>
    %c8_i32_256 = arith.constant 8 : i32
    %444 = arith.addi %435, %c8_i32_256 : i32
    %445 = arith.index_cast %444 : i32 to index
    %c0_257 = arith.constant 0 : index
    %446 = vector.load %arg21[%445, %c0_257] : memref<64x32xf32, #tpu.memory_space<vmem>>, vector<1x32xf32>
    %c16_i32_258 = arith.constant 16 : i32
    %447 = arith.addi %435, %c16_i32_258 : i32
    %448 = arith.index_cast %447 : i32 to index
    %c0_259 = arith.constant 0 : index
    %449 = vector.load %arg21[%448, %c0_259] : memref<64x32xf32, #tpu.memory_space<vmem>>, vector<1x32xf32>
    %c24_i32_260 = arith.constant 24 : i32
    %450 = arith.addi %435, %c24_i32_260 : i32
    %451 = arith.index_cast %450 : i32 to index
    %c0_261 = arith.constant 0 : index
    %452 = vector.load %arg21[%451, %c0_261] : memref<64x32xf32, #tpu.memory_space<vmem>>, vector<1x32xf32>
    %c32_i32_262 = arith.constant 32 : i32
    %453 = arith.addi %435, %c32_i32_262 : i32
    %454 = arith.index_cast %453 : i32 to index
    %c0_263 = arith.constant 0 : index
    %455 = vector.load %arg21[%454, %c0_263] : memref<64x32xf32, #tpu.memory_space<vmem>>, vector<1x32xf32>
    %c40_i32_264 = arith.constant 40 : i32
    %456 = arith.addi %435, %c40_i32_264 : i32
    %457 = arith.index_cast %456 : i32 to index
    %c0_265 = arith.constant 0 : index
    %458 = vector.load %arg21[%457, %c0_265] : memref<64x32xf32, #tpu.memory_space<vmem>>, vector<1x32xf32>
    %c48_i32_266 = arith.constant 48 : i32
    %459 = arith.addi %435, %c48_i32_266 : i32
    %460 = arith.index_cast %459 : i32 to index
    %c0_267 = arith.constant 0 : index
    %461 = vector.load %arg21[%460, %c0_267] : memref<64x32xf32, #tpu.memory_space<vmem>>, vector<1x32xf32>
    %c56_i32_268 = arith.constant 56 : i32
    %462 = arith.addi %435, %c56_i32_268 : i32
    %463 = arith.index_cast %462 : i32 to index
    %c0_269 = arith.constant 0 : index
    %464 = vector.load %arg21[%463, %c0_269] : memref<64x32xf32, #tpu.memory_space<vmem>>, vector<1x32xf32>
    %465 = tpu.concatenate %443, %446, %449, %452, %455, %458, %461, %464 in 0 : vector<1x32xf32>, vector<1x32xf32>, vector<1x32xf32>, vector<1x32xf32>, vector<1x32xf32>, vector<1x32xf32>, vector<1x32xf32>, vector<1x32xf32> -> vector<8x32xf32>
    %c0_i32_270 = arith.constant 0 : i32
    %466 = arith.addi %435, %c0_i32_270 : i32
    %467 = arith.index_cast %466 : i32 to index
    %c0_271 = arith.constant 0 : index
    %468 = vector.load %arg22[%467, %c0_271] : memref<64x32xf32, #tpu.memory_space<vmem>>, vector<1x32xf32>
    %c8_i32_272 = arith.constant 8 : i32
    %469 = arith.addi %435, %c8_i32_272 : i32
    %470 = arith.index_cast %469 : i32 to index
    %c0_273 = arith.constant 0 : index
    %471 = vector.load %arg22[%470, %c0_273] : memref<64x32xf32, #tpu.memory_space<vmem>>, vector<1x32xf32>
    %c16_i32_274 = arith.constant 16 : i32
    %472 = arith.addi %435, %c16_i32_274 : i32
    %473 = arith.index_cast %472 : i32 to index
    %c0_275 = arith.constant 0 : index
    %474 = vector.load %arg22[%473, %c0_275] : memref<64x32xf32, #tpu.memory_space<vmem>>, vector<1x32xf32>
    %c24_i32_276 = arith.constant 24 : i32
    %475 = arith.addi %435, %c24_i32_276 : i32
    %476 = arith.index_cast %475 : i32 to index
    %c0_277 = arith.constant 0 : index
    %477 = vector.load %arg22[%476, %c0_277] : memref<64x32xf32, #tpu.memory_space<vmem>>, vector<1x32xf32>
    %c32_i32_278 = arith.constant 32 : i32
    %478 = arith.addi %435, %c32_i32_278 : i32
    %479 = arith.index_cast %478 : i32 to index
    %c0_279 = arith.constant 0 : index
    %480 = vector.load %arg22[%479, %c0_279] : memref<64x32xf32, #tpu.memory_space<vmem>>, vector<1x32xf32>
    %c40_i32_280 = arith.constant 40 : i32
    %481 = arith.addi %435, %c40_i32_280 : i32
    %482 = arith.index_cast %481 : i32 to index
    %c0_281 = arith.constant 0 : index
    %483 = vector.load %arg22[%482, %c0_281] : memref<64x32xf32, #tpu.memory_space<vmem>>, vector<1x32xf32>
    %c48_i32_282 = arith.constant 48 : i32
    %484 = arith.addi %435, %c48_i32_282 : i32
    %485 = arith.index_cast %484 : i32 to index
    %c0_283 = arith.constant 0 : index
    %486 = vector.load %arg22[%485, %c0_283] : memref<64x32xf32, #tpu.memory_space<vmem>>, vector<1x32xf32>
    %c56_i32_284 = arith.constant 56 : i32
    %487 = arith.addi %435, %c56_i32_284 : i32
    %488 = arith.index_cast %487 : i32 to index
    %c0_285 = arith.constant 0 : index
    %489 = vector.load %arg22[%488, %c0_285] : memref<64x32xf32, #tpu.memory_space<vmem>>, vector<1x32xf32>
    %490 = tpu.concatenate %468, %471, %474, %477, %480, %483, %486, %489 in 0 : vector<1x32xf32>, vector<1x32xf32>, vector<1x32xf32>, vector<1x32xf32>, vector<1x32xf32>, vector<1x32xf32>, vector<1x32xf32>, vector<1x32xf32> -> vector<8x32xf32>
    %491 = arith.mulf %440, %431 : vector<8x32xf32>
    %492 = arith.addf %491, %465 : vector<8x32xf32>
    %493 = arith.mulf %490, %492 : vector<8x32xf32>
    %cst_286 = arith.constant dense<0.000000e+00> : vector<32xf32>
    %494 = vector.multi_reduction <add>, %493, %cst_286 [0] : vector<8x32xf32> to vector<32xf32>
    %495 = vector.shape_cast %494 : vector<32xf32> to vector<1x32xf32>
    %c5_i32 = arith.constant 5 : i32
    %496 = arith.addi %190, %c5_i32 : i32
    %497 = arith.index_cast %496 : i32 to index
    %c0_287 = arith.constant 0 : index
    %498 = vector.load %arg23[%497, %c0_287] : memref<8x32xf32, #tpu.memory_space<vmem>>, vector<1x32xf32>
    %499 = vector.broadcast %498 : vector<1x32xf32> to vector<8x32xf32>
    %500 = arith.mulf %499, %187 : vector<8x32xf32>
    %501 = math.exp %500 : vector<8x32xf32>
    %c0_i32_288 = arith.constant 0 : i32
    %502 = arith.addi %496, %c0_i32_288 : i32
    %503 = arith.index_cast %502 : i32 to index
    %c0_289 = arith.constant 0 : index
    %504 = vector.load %arg21[%503, %c0_289] : memref<64x32xf32, #tpu.memory_space<vmem>>, vector<1x32xf32>
    %c8_i32_290 = arith.constant 8 : i32
    %505 = arith.addi %496, %c8_i32_290 : i32
    %506 = arith.index_cast %505 : i32 to index
    %c0_291 = arith.constant 0 : index
    %507 = vector.load %arg21[%506, %c0_291] : memref<64x32xf32, #tpu.memory_space<vmem>>, vector<1x32xf32>
    %c16_i32_292 = arith.constant 16 : i32
    %508 = arith.addi %496, %c16_i32_292 : i32
    %509 = arith.index_cast %508 : i32 to index
    %c0_293 = arith.constant 0 : index
    %510 = vector.load %arg21[%509, %c0_293] : memref<64x32xf32, #tpu.memory_space<vmem>>, vector<1x32xf32>
    %c24_i32_294 = arith.constant 24 : i32
    %511 = arith.addi %496, %c24_i32_294 : i32
    %512 = arith.index_cast %511 : i32 to index
    %c0_295 = arith.constant 0 : index
    %513 = vector.load %arg21[%512, %c0_295] : memref<64x32xf32, #tpu.memory_space<vmem>>, vector<1x32xf32>
    %c32_i32_296 = arith.constant 32 : i32
    %514 = arith.addi %496, %c32_i32_296 : i32
    %515 = arith.index_cast %514 : i32 to index
    %c0_297 = arith.constant 0 : index
    %516 = vector.load %arg21[%515, %c0_297] : memref<64x32xf32, #tpu.memory_space<vmem>>, vector<1x32xf32>
    %c40_i32_298 = arith.constant 40 : i32
    %517 = arith.addi %496, %c40_i32_298 : i32
    %518 = arith.index_cast %517 : i32 to index
    %c0_299 = arith.constant 0 : index
    %519 = vector.load %arg21[%518, %c0_299] : memref<64x32xf32, #tpu.memory_space<vmem>>, vector<1x32xf32>
    %c48_i32_300 = arith.constant 48 : i32
    %520 = arith.addi %496, %c48_i32_300 : i32
    %521 = arith.index_cast %520 : i32 to index
    %c0_301 = arith.constant 0 : index
    %522 = vector.load %arg21[%521, %c0_301] : memref<64x32xf32, #tpu.memory_space<vmem>>, vector<1x32xf32>
    %c56_i32_302 = arith.constant 56 : i32
    %523 = arith.addi %496, %c56_i32_302 : i32
    %524 = arith.index_cast %523 : i32 to index
    %c0_303 = arith.constant 0 : index
    %525 = vector.load %arg21[%524, %c0_303] : memref<64x32xf32, #tpu.memory_space<vmem>>, vector<1x32xf32>
    %526 = tpu.concatenate %504, %507, %510, %513, %516, %519, %522, %525 in 0 : vector<1x32xf32>, vector<1x32xf32>, vector<1x32xf32>, vector<1x32xf32>, vector<1x32xf32>, vector<1x32xf32>, vector<1x32xf32>, vector<1x32xf32> -> vector<8x32xf32>
    %c0_i32_304 = arith.constant 0 : i32
    %527 = arith.addi %496, %c0_i32_304 : i32
    %528 = arith.index_cast %527 : i32 to index
    %c0_305 = arith.constant 0 : index
    %529 = vector.load %arg22[%528, %c0_305] : memref<64x32xf32, #tpu.memory_space<vmem>>, vector<1x32xf32>
    %c8_i32_306 = arith.constant 8 : i32
    %530 = arith.addi %496, %c8_i32_306 : i32
    %531 = arith.index_cast %530 : i32 to index
    %c0_307 = arith.constant 0 : index
    %532 = vector.load %arg22[%531, %c0_307] : memref<64x32xf32, #tpu.memory_space<vmem>>, vector<1x32xf32>
    %c16_i32_308 = arith.constant 16 : i32
    %533 = arith.addi %496, %c16_i32_308 : i32
    %534 = arith.index_cast %533 : i32 to index
    %c0_309 = arith.constant 0 : index
    %535 = vector.load %arg22[%534, %c0_309] : memref<64x32xf32, #tpu.memory_space<vmem>>, vector<1x32xf32>
    %c24_i32_310 = arith.constant 24 : i32
    %536 = arith.addi %496, %c24_i32_310 : i32
    %537 = arith.index_cast %536 : i32 to index
    %c0_311 = arith.constant 0 : index
    %538 = vector.load %arg22[%537, %c0_311] : memref<64x32xf32, #tpu.memory_space<vmem>>, vector<1x32xf32>
    %c32_i32_312 = arith.constant 32 : i32
    %539 = arith.addi %496, %c32_i32_312 : i32
    %540 = arith.index_cast %539 : i32 to index
    %c0_313 = arith.constant 0 : index
    %541 = vector.load %arg22[%540, %c0_313] : memref<64x32xf32, #tpu.memory_space<vmem>>, vector<1x32xf32>
    %c40_i32_314 = arith.constant 40 : i32
    %542 = arith.addi %496, %c40_i32_314 : i32
    %543 = arith.index_cast %542 : i32 to index
    %c0_315 = arith.constant 0 : index
    %544 = vector.load %arg22[%543, %c0_315] : memref<64x32xf32, #tpu.memory_space<vmem>>, vector<1x32xf32>
    %c48_i32_316 = arith.constant 48 : i32
    %545 = arith.addi %496, %c48_i32_316 : i32
    %546 = arith.index_cast %545 : i32 to index
    %c0_317 = arith.constant 0 : index
    %547 = vector.load %arg22[%546, %c0_317] : memref<64x32xf32, #tpu.memory_space<vmem>>, vector<1x32xf32>
    %c56_i32_318 = arith.constant 56 : i32
    %548 = arith.addi %496, %c56_i32_318 : i32
    %549 = arith.index_cast %548 : i32 to index
    %c0_319 = arith.constant 0 : index
    %550 = vector.load %arg22[%549, %c0_319] : memref<64x32xf32, #tpu.memory_space<vmem>>, vector<1x32xf32>
    %551 = tpu.concatenate %529, %532, %535, %538, %541, %544, %547, %550 in 0 : vector<1x32xf32>, vector<1x32xf32>, vector<1x32xf32>, vector<1x32xf32>, vector<1x32xf32>, vector<1x32xf32>, vector<1x32xf32>, vector<1x32xf32> -> vector<8x32xf32>
    %552 = arith.mulf %501, %492 : vector<8x32xf32>
    %553 = arith.addf %552, %526 : vector<8x32xf32>
    %554 = arith.mulf %551, %553 : vector<8x32xf32>
    %cst_320 = arith.constant dense<0.000000e+00> : vector<32xf32>
    %555 = vector.multi_reduction <add>, %554, %cst_320 [0] : vector<8x32xf32> to vector<32xf32>
    %556 = vector.shape_cast %555 : vector<32xf32> to vector<1x32xf32>
    %c6_i32 = arith.constant 6 : i32
    %557 = arith.addi %190, %c6_i32 : i32
    %558 = arith.index_cast %557 : i32 to index
    %c0_321 = arith.constant 0 : index
    %559 = vector.load %arg23[%558, %c0_321] : memref<8x32xf32, #tpu.memory_space<vmem>>, vector<1x32xf32>
    %560 = vector.broadcast %559 : vector<1x32xf32> to vector<8x32xf32>
    %561 = arith.mulf %560, %187 : vector<8x32xf32>
    %562 = math.exp %561 : vector<8x32xf32>
    %c0_i32_322 = arith.constant 0 : i32
    %563 = arith.addi %557, %c0_i32_322 : i32
    %564 = arith.index_cast %563 : i32 to index
    %c0_323 = arith.constant 0 : index
    %565 = vector.load %arg21[%564, %c0_323] : memref<64x32xf32, #tpu.memory_space<vmem>>, vector<1x32xf32>
    %c8_i32_324 = arith.constant 8 : i32
    %566 = arith.addi %557, %c8_i32_324 : i32
    %567 = arith.index_cast %566 : i32 to index
    %c0_325 = arith.constant 0 : index
    %568 = vector.load %arg21[%567, %c0_325] : memref<64x32xf32, #tpu.memory_space<vmem>>, vector<1x32xf32>
    %c16_i32_326 = arith.constant 16 : i32
    %569 = arith.addi %557, %c16_i32_326 : i32
    %570 = arith.index_cast %569 : i32 to index
    %c0_327 = arith.constant 0 : index
    %571 = vector.load %arg21[%570, %c0_327] : memref<64x32xf32, #tpu.memory_space<vmem>>, vector<1x32xf32>
    %c24_i32_328 = arith.constant 24 : i32
    %572 = arith.addi %557, %c24_i32_328 : i32
    %573 = arith.index_cast %572 : i32 to index
    %c0_329 = arith.constant 0 : index
    %574 = vector.load %arg21[%573, %c0_329] : memref<64x32xf32, #tpu.memory_space<vmem>>, vector<1x32xf32>
    %c32_i32_330 = arith.constant 32 : i32
    %575 = arith.addi %557, %c32_i32_330 : i32
    %576 = arith.index_cast %575 : i32 to index
    %c0_331 = arith.constant 0 : index
    %577 = vector.load %arg21[%576, %c0_331] : memref<64x32xf32, #tpu.memory_space<vmem>>, vector<1x32xf32>
    %c40_i32_332 = arith.constant 40 : i32
    %578 = arith.addi %557, %c40_i32_332 : i32
    %579 = arith.index_cast %578 : i32 to index
    %c0_333 = arith.constant 0 : index
    %580 = vector.load %arg21[%579, %c0_333] : memref<64x32xf32, #tpu.memory_space<vmem>>, vector<1x32xf32>
    %c48_i32_334 = arith.constant 48 : i32
    %581 = arith.addi %557, %c48_i32_334 : i32
    %582 = arith.index_cast %581 : i32 to index
    %c0_335 = arith.constant 0 : index
    %583 = vector.load %arg21[%582, %c0_335] : memref<64x32xf32, #tpu.memory_space<vmem>>, vector<1x32xf32>
    %c56_i32_336 = arith.constant 56 : i32
    %584 = arith.addi %557, %c56_i32_336 : i32
    %585 = arith.index_cast %584 : i32 to index
    %c0_337 = arith.constant 0 : index
    %586 = vector.load %arg21[%585, %c0_337] : memref<64x32xf32, #tpu.memory_space<vmem>>, vector<1x32xf32>
    %587 = tpu.concatenate %565, %568, %571, %574, %577, %580, %583, %586 in 0 : vector<1x32xf32>, vector<1x32xf32>, vector<1x32xf32>, vector<1x32xf32>, vector<1x32xf32>, vector<1x32xf32>, vector<1x32xf32>, vector<1x32xf32> -> vector<8x32xf32>
    %c0_i32_338 = arith.constant 0 : i32
    %588 = arith.addi %557, %c0_i32_338 : i32
    %589 = arith.index_cast %588 : i32 to index
    %c0_339 = arith.constant 0 : index
    %590 = vector.load %arg22[%589, %c0_339] : memref<64x32xf32, #tpu.memory_space<vmem>>, vector<1x32xf32>
    %c8_i32_340 = arith.constant 8 : i32
    %591 = arith.addi %557, %c8_i32_340 : i32
    %592 = arith.index_cast %591 : i32 to index
    %c0_341 = arith.constant 0 : index
    %593 = vector.load %arg22[%592, %c0_341] : memref<64x32xf32, #tpu.memory_space<vmem>>, vector<1x32xf32>
    %c16_i32_342 = arith.constant 16 : i32
    %594 = arith.addi %557, %c16_i32_342 : i32
    %595 = arith.index_cast %594 : i32 to index
    %c0_343 = arith.constant 0 : index
    %596 = vector.load %arg22[%595, %c0_343] : memref<64x32xf32, #tpu.memory_space<vmem>>, vector<1x32xf32>
    %c24_i32_344 = arith.constant 24 : i32
    %597 = arith.addi %557, %c24_i32_344 : i32
    %598 = arith.index_cast %597 : i32 to index
    %c0_345 = arith.constant 0 : index
    %599 = vector.load %arg22[%598, %c0_345] : memref<64x32xf32, #tpu.memory_space<vmem>>, vector<1x32xf32>
    %c32_i32_346 = arith.constant 32 : i32
    %600 = arith.addi %557, %c32_i32_346 : i32
    %601 = arith.index_cast %600 : i32 to index
    %c0_347 = arith.constant 0 : index
    %602 = vector.load %arg22[%601, %c0_347] : memref<64x32xf32, #tpu.memory_space<vmem>>, vector<1x32xf32>
    %c40_i32_348 = arith.constant 40 : i32
    %603 = arith.addi %557, %c40_i32_348 : i32
    %604 = arith.index_cast %603 : i32 to index
    %c0_349 = arith.constant 0 : index
    %605 = vector.load %arg22[%604, %c0_349] : memref<64x32xf32, #tpu.memory_space<vmem>>, vector<1x32xf32>
    %c48_i32_350 = arith.constant 48 : i32
    %606 = arith.addi %557, %c48_i32_350 : i32
    %607 = arith.index_cast %606 : i32 to index
    %c0_351 = arith.constant 0 : index
    %608 = vector.load %arg22[%607, %c0_351] : memref<64x32xf32, #tpu.memory_space<vmem>>, vector<1x32xf32>
    %c56_i32_352 = arith.constant 56 : i32
    %609 = arith.addi %557, %c56_i32_352 : i32
    %610 = arith.index_cast %609 : i32 to index
    %c0_353 = arith.constant 0 : index
    %611 = vector.load %arg22[%610, %c0_353] : memref<64x32xf32, #tpu.memory_space<vmem>>, vector<1x32xf32>
    %612 = tpu.concatenate %590, %593, %596, %599, %602, %605, %608, %611 in 0 : vector<1x32xf32>, vector<1x32xf32>, vector<1x32xf32>, vector<1x32xf32>, vector<1x32xf32>, vector<1x32xf32>, vector<1x32xf32>, vector<1x32xf32> -> vector<8x32xf32>
    %613 = arith.mulf %562, %553 : vector<8x32xf32>
    %614 = arith.addf %613, %587 : vector<8x32xf32>
    %615 = arith.mulf %612, %614 : vector<8x32xf32>
    %cst_354 = arith.constant dense<0.000000e+00> : vector<32xf32>
    %616 = vector.multi_reduction <add>, %615, %cst_354 [0] : vector<8x32xf32> to vector<32xf32>
    %617 = vector.shape_cast %616 : vector<32xf32> to vector<1x32xf32>
    %c7_i32 = arith.constant 7 : i32
    %618 = arith.addi %190, %c7_i32 : i32
    %619 = arith.index_cast %618 : i32 to index
    %c0_355 = arith.constant 0 : index
    %620 = vector.load %arg23[%619, %c0_355] : memref<8x32xf32, #tpu.memory_space<vmem>>, vector<1x32xf32>
    %621 = vector.broadcast %620 : vector<1x32xf32> to vector<8x32xf32>
    %622 = arith.mulf %621, %187 : vector<8x32xf32>
    %623 = math.exp %622 : vector<8x32xf32>
    %c0_i32_356 = arith.constant 0 : i32
    %624 = arith.addi %618, %c0_i32_356 : i32
    %625 = arith.index_cast %624 : i32 to index
    %c0_357 = arith.constant 0 : index
    %626 = vector.load %arg21[%625, %c0_357] : memref<64x32xf32, #tpu.memory_space<vmem>>, vector<1x32xf32>
    %c8_i32_358 = arith.constant 8 : i32
    %627 = arith.addi %618, %c8_i32_358 : i32
    %628 = arith.index_cast %627 : i32 to index
    %c0_359 = arith.constant 0 : index
    %629 = vector.load %arg21[%628, %c0_359] : memref<64x32xf32, #tpu.memory_space<vmem>>, vector<1x32xf32>
    %c16_i32_360 = arith.constant 16 : i32
    %630 = arith.addi %618, %c16_i32_360 : i32
    %631 = arith.index_cast %630 : i32 to index
    %c0_361 = arith.constant 0 : index
    %632 = vector.load %arg21[%631, %c0_361] : memref<64x32xf32, #tpu.memory_space<vmem>>, vector<1x32xf32>
    %c24_i32_362 = arith.constant 24 : i32
    %633 = arith.addi %618, %c24_i32_362 : i32
    %634 = arith.index_cast %633 : i32 to index
    %c0_363 = arith.constant 0 : index
    %635 = vector.load %arg21[%634, %c0_363] : memref<64x32xf32, #tpu.memory_space<vmem>>, vector<1x32xf32>
    %c32_i32_364 = arith.constant 32 : i32
    %636 = arith.addi %618, %c32_i32_364 : i32
    %637 = arith.index_cast %636 : i32 to index
    %c0_365 = arith.constant 0 : index
    %638 = vector.load %arg21[%637, %c0_365] : memref<64x32xf32, #tpu.memory_space<vmem>>, vector<1x32xf32>
    %c40_i32_366 = arith.constant 40 : i32
    %639 = arith.addi %618, %c40_i32_366 : i32
    %640 = arith.index_cast %639 : i32 to index
    %c0_367 = arith.constant 0 : index
    %641 = vector.load %arg21[%640, %c0_367] : memref<64x32xf32, #tpu.memory_space<vmem>>, vector<1x32xf32>
    %c48_i32_368 = arith.constant 48 : i32
    %642 = arith.addi %618, %c48_i32_368 : i32
    %643 = arith.index_cast %642 : i32 to index
    %c0_369 = arith.constant 0 : index
    %644 = vector.load %arg21[%643, %c0_369] : memref<64x32xf32, #tpu.memory_space<vmem>>, vector<1x32xf32>
    %c56_i32_370 = arith.constant 56 : i32
    %645 = arith.addi %618, %c56_i32_370 : i32
    %646 = arith.index_cast %645 : i32 to index
    %c0_371 = arith.constant 0 : index
    %647 = vector.load %arg21[%646, %c0_371] : memref<64x32xf32, #tpu.memory_space<vmem>>, vector<1x32xf32>
    %648 = tpu.concatenate %626, %629, %632, %635, %638, %641, %644, %647 in 0 : vector<1x32xf32>, vector<1x32xf32>, vector<1x32xf32>, vector<1x32xf32>, vector<1x32xf32>, vector<1x32xf32>, vector<1x32xf32>, vector<1x32xf32> -> vector<8x32xf32>
    %c0_i32_372 = arith.constant 0 : i32
    %649 = arith.addi %618, %c0_i32_372 : i32
    %650 = arith.index_cast %649 : i32 to index
    %c0_373 = arith.constant 0 : index
    %651 = vector.load %arg22[%650, %c0_373] : memref<64x32xf32, #tpu.memory_space<vmem>>, vector<1x32xf32>
    %c8_i32_374 = arith.constant 8 : i32
    %652 = arith.addi %618, %c8_i32_374 : i32
    %653 = arith.index_cast %652 : i32 to index
    %c0_375 = arith.constant 0 : index
    %654 = vector.load %arg22[%653, %c0_375] : memref<64x32xf32, #tpu.memory_space<vmem>>, vector<1x32xf32>
    %c16_i32_376 = arith.constant 16 : i32
    %655 = arith.addi %618, %c16_i32_376 : i32
    %656 = arith.index_cast %655 : i32 to index
    %c0_377 = arith.constant 0 : index
    %657 = vector.load %arg22[%656, %c0_377] : memref<64x32xf32, #tpu.memory_space<vmem>>, vector<1x32xf32>
    %c24_i32_378 = arith.constant 24 : i32
    %658 = arith.addi %618, %c24_i32_378 : i32
    %659 = arith.index_cast %658 : i32 to index
    %c0_379 = arith.constant 0 : index
    %660 = vector.load %arg22[%659, %c0_379] : memref<64x32xf32, #tpu.memory_space<vmem>>, vector<1x32xf32>
    %c32_i32_380 = arith.constant 32 : i32
    %661 = arith.addi %618, %c32_i32_380 : i32
    %662 = arith.index_cast %661 : i32 to index
    %c0_381 = arith.constant 0 : index
    %663 = vector.load %arg22[%662, %c0_381] : memref<64x32xf32, #tpu.memory_space<vmem>>, vector<1x32xf32>
    %c40_i32_382 = arith.constant 40 : i32
    %664 = arith.addi %618, %c40_i32_382 : i32
    %665 = arith.index_cast %664 : i32 to index
    %c0_383 = arith.constant 0 : index
    %666 = vector.load %arg22[%665, %c0_383] : memref<64x32xf32, #tpu.memory_space<vmem>>, vector<1x32xf32>
    %c48_i32_384 = arith.constant 48 : i32
    %667 = arith.addi %618, %c48_i32_384 : i32
    %668 = arith.index_cast %667 : i32 to index
    %c0_385 = arith.constant 0 : index
    %669 = vector.load %arg22[%668, %c0_385] : memref<64x32xf32, #tpu.memory_space<vmem>>, vector<1x32xf32>
    %c56_i32_386 = arith.constant 56 : i32
    %670 = arith.addi %618, %c56_i32_386 : i32
    %671 = arith.index_cast %670 : i32 to index
    %c0_387 = arith.constant 0 : index
    %672 = vector.load %arg22[%671, %c0_387] : memref<64x32xf32, #tpu.memory_space<vmem>>, vector<1x32xf32>
    %673 = tpu.concatenate %651, %654, %657, %660, %663, %666, %669, %672 in 0 : vector<1x32xf32>, vector<1x32xf32>, vector<1x32xf32>, vector<1x32xf32>, vector<1x32xf32>, vector<1x32xf32>, vector<1x32xf32>, vector<1x32xf32> -> vector<8x32xf32>
    %674 = arith.mulf %623, %614 : vector<8x32xf32>
    %675 = arith.addf %674, %648 : vector<8x32xf32>
    %676 = arith.mulf %673, %675 : vector<8x32xf32>
    %cst_388 = arith.constant dense<0.000000e+00> : vector<32xf32>
    %677 = vector.multi_reduction <add>, %676, %cst_388 [0] : vector<8x32xf32> to vector<32xf32>
    %678 = vector.shape_cast %677 : vector<32xf32> to vector<1x32xf32>
    %679 = tpu.concatenate %251, %312, %373, %434, %495, %556, %617, %678 in 0 : vector<1x32xf32>, vector<1x32xf32>, vector<1x32xf32>, vector<1x32xf32>, vector<1x32xf32>, vector<1x32xf32>, vector<1x32xf32>, vector<1x32xf32> -> vector<8x32xf32>
    %680 = arith.index_cast %190 : i32 to index
    %c0_389 = arith.constant 0 : index
    %681 = vector.load %arg24[%680, %c0_389] : memref<8x32xf32, #tpu.memory_space<vmem>>, vector<8x32xf32>
    tpu.vector_store %arg24[%680, %c0_389], %679 {strides = array<i32>} : memref<8x32xf32, #tpu.memory_space<vmem>>, vector<8x32xf32>,
    %c1_i32_390 = arith.constant 1 : i32
    %c0_391 = arith.constant 0 : index
    %c0_392 = arith.constant 0 : index
    %682 = vector.load %arg25[%c0_391, %c0_392] : memref<8x32xf32, #tpu.memory_space<vmem>>, vector<8x32xf32>
    tpu.vector_store %arg25[%c0_391, %c0_392], %675 {strides = array<i32>} : memref<8x32xf32, #tpu.memory_space<vmem>>, vector<8x32xf32>,
    %c0_393 = arith.constant 0 : index
    %c0_394 = arith.constant 0 : index
    %683 = vector.load %arg24[%c0_393, %c0_394] : memref<8x32xf32, #tpu.memory_space<vmem>>, vector<8x32xf32>
    %c0_395 = arith.constant 0 : index
    %c0_396 = arith.constant 0 : index
    %684 = vector.load %arg15[%c0_395, %c0_396] : memref<1x32xf32, #tpu.memory_space<vmem>>, vector<1x32xf32>
    %685 = vector.broadcast %684 : vector<1x32xf32> to vector<8x32xf32>
    %686 = arith.mulf %685, %79 : vector<8x32xf32>
    %687 = arith.addf %683, %686 : vector<8x32xf32>
    %688 = arith.truncf %24 : vector<8x32xf32> to vector<8x32xbf16>
    %c0_397 = arith.constant 0 : index
    %c0_398 = arith.constant 0 : index
    %689 = vector.load %arg16[%c0_397, %c0_398] : memref<32x32xbf16, #tpu.memory_space<vmem>>, vector<32x32xbf16>
    %cst_399 = arith.constant dense<0.000000e+00> : vector<8x32xf32>
    %690 = tpu.matmul %688, %689, %cst_399 {dimension_numbers = #tpu.dot_dimension_numbers<[1], [0], [0], [1], [0, 0, 1, 1], [], []>} : vector<8x32xbf16>, vector<32x32xbf16>, vector<8x32xf32> -> vector<8x32xf32>
    %c0_400 = arith.constant 0 : index
    %c0_401 = arith.constant 0 : index
    %691 = vector.load %arg17[%c0_400, %c0_401] : memref<1x32xf32, #tpu.memory_space<vmem>>, vector<1x32xf32>
    %692 = vector.broadcast %691 : vector<1x32xf32> to vector<8x32xf32>
    %693 = arith.addf %690, %692 : vector<8x32xf32>
    %694 = arith.negf %693 : vector<8x32xf32>
    %695 = math.exp %694 : vector<8x32xf32>
    %cst_402 = arith.constant 1.000000e+00 : f32
    %696 = vector.broadcast %cst_402 : f32 to vector<8x32xf32>
    %697 = arith.addf %696, %695 : vector<8x32xf32>
    %698 = arith.divf %696, %697 : vector<8x32xf32>
    %699 = arith.mulf %698, %687 : vector<8x32xf32>
    %cst_403 = arith.constant 5.000000e-01 : f32
    %700 = vector.broadcast %cst_403 : f32 to vector<8x32xf32>
    %701 = arith.mulf %700, %699 : vector<8x32xf32>
    %cst_404 = arith.constant 0.707106769 : f32
    %702 = vector.broadcast %cst_404 : f32 to vector<8x32xf32>
    %703 = arith.mulf %699, %702 : vector<8x32xf32>
    %704 = math.absf %703 : vector<8x32xf32>
    %cst_405 = arith.constant 0.327591091 : f32
    %705 = vector.broadcast %cst_405 : f32 to vector<8x32xf32>
    %706 = arith.mulf %705, %704 : vector<8x32xf32>
    %cst_406 = arith.constant 1.000000e+00 : f32
    %707 = vector.broadcast %cst_406 : f32 to vector<8x32xf32>
    %708 = arith.addf %707, %706 : vector<8x32xf32>
    %cst_407 = arith.constant 1.000000e+00 : f32
    %709 = vector.broadcast %cst_407 : f32 to vector<8x32xf32>
    %710 = arith.divf %709, %708 : vector<8x32xf32>
    %cst_408 = arith.constant 1.06140542 : f32
    %711 = vector.broadcast %cst_408 : f32 to vector<8x32xf32>
    %712 = arith.mulf %711, %710 : vector<8x32xf32>
    %cst_409 = arith.constant -1.45315206 : f32
    %713 = vector.broadcast %cst_409 : f32 to vector<8x32xf32>
    %714 = arith.addf %712, %713 : vector<8x32xf32>
    %715 = arith.mulf %714, %710 : vector<8x32xf32>
    %cst_410 = arith.constant 1.42141378 : f32
    %716 = vector.broadcast %cst_410 : f32 to vector<8x32xf32>
    %717 = arith.addf %715, %716 : vector<8x32xf32>
    %718 = arith.mulf %717, %710 : vector<8x32xf32>
    %cst_411 = arith.constant -0.284496725 : f32
    %719 = vector.broadcast %cst_411 : f32 to vector<8x32xf32>
    %720 = arith.addf %718, %719 : vector<8x32xf32>
    %721 = arith.mulf %720, %710 : vector<8x32xf32>
    %cst_412 = arith.constant 0.254829586 : f32
    %722 = vector.broadcast %cst_412 : f32 to vector<8x32xf32>
    %723 = arith.addf %721, %722 : vector<8x32xf32>
    %724 = arith.mulf %723, %710 : vector<8x32xf32>
    %cst_413 = arith.constant 0.000000e+00 : f32
    %725 = vector.broadcast %cst_413 : f32 to vector<8x32xf32>
    %726 = arith.subf %725, %704 : vector<8x32xf32>
    %727 = arith.mulf %726, %704 : vector<8x32xf32>
    %728 = math.exp %727 : vector<8x32xf32>
    %729 = arith.mulf %724, %728 : vector<8x32xf32>
    %cst_414 = arith.constant 1.000000e+00 : f32
    %730 = vector.broadcast %cst_414 : f32 to vector<8x32xf32>
    %731 = arith.subf %730, %729 : vector<8x32xf32>
    %cst_415 = arith.constant 0.000000e+00 : f32
    %732 = vector.broadcast %cst_415 : f32 to vector<8x32xf32>
    %733 = arith.cmpf olt, %703, %732 : vector<8x32xf32>
    %cst_416 = arith.constant 0.000000e+00 : f32
    %734 = vector.broadcast %cst_416 : f32 to vector<8x32xf32>
    %735 = arith.subf %734, %731 : vector<8x32xf32>
    %736 = arith.select %733, %735, %731 : vector<8x32xi1>, vector<8x32xf32>
    %cst_417 = arith.constant 1.000000e+00 : f32
    %737 = vector.broadcast %cst_417 : f32 to vector<8x32xf32>
    %738 = arith.addf %737, %736 : vector<8x32xf32>
    %739 = arith.mulf %701, %738 : vector<8x32xf32>
    %740 = arith.truncf %739 : vector<8x32xf32> to vector<8x32xbf16>
    %c0_418 = arith.constant 0 : index
    %c0_419 = arith.constant 0 : index
    %741 = vector.load %arg18[%c0_418, %c0_419] : memref<32x16xbf16, #tpu.memory_space<vmem>>, vector<32x16xbf16>
    %cst_420 = arith.constant dense<0.000000e+00> : vector<8x16xf32>
    %742 = tpu.matmul %740, %741, %cst_420 {dimension_numbers = #tpu.dot_dimension_numbers<[1], [0], [0], [1], [0, 0, 1, 1], [], []>} : vector<8x32xbf16>, vector<32x16xbf16>, vector<8x16xf32> -> vector<8x16xf32>
    %c0_421 = arith.constant 0 : index
    %c0_422 = arith.constant 0 : index
    %743 = vector.load %arg19[%c0_421, %c0_422] : memref<1x16xf32, #tpu.memory_space<vmem>>, vector<1x16xf32>
    %744 = vector.broadcast %743 : vector<1x16xf32> to vector<8x16xf32>
    %745 = arith.addf %742, %744 : vector<8x16xf32>
    %746 = arith.addf %16, %745 : vector<8x16xf32>
    %747 = arith.mulf %746, %746 : vector<8x16xf32>
    %cst_423 = arith.constant dense<0.000000e+00> : vector<8xf32>
    %748 = vector.multi_reduction <add>, %747, %cst_423 [1] : vector<8x16xf32> to vector<8xf32>
    %749 = vector.shape_cast %748 : vector<8xf32> to vector<8x1xf32>
    %cst_424 = arith.constant 1.600000e+01 : f32
    %750 = vector.broadcast %cst_424 : f32 to vector<8x1xf32>
    %751 = arith.divf %749, %750 : vector<8x1xf32>
    %752 = math.sqrt %751 : vector<8x1xf32>
    %cst_425 = arith.constant 9.99999974E-6 : f32
    %753 = vector.broadcast %cst_425 : f32 to vector<8x1xf32>
    %754 = arith.addf %752, %753 : vector<8x1xf32>
    %755 = tpu.reciprocal %754 {approx = true} : vector<8x1xf32> -> vector<8x1xf32>
    %756 = vector.broadcast %1 : f32 to vector<8x1xf32>
    %757 = arith.mulf %756, %755 : vector<8x1xf32>
    %758 = vector.broadcast %757 : vector<8x1xf32> to vector<8x16xf32>
    %759 = arith.mulf %746, %758 : vector<8x16xf32>
    %c0_426 = arith.constant 0 : index
    %c0_427 = arith.constant 0 : index
    %c0_428 = arith.constant 0 : index
    %760 = vector.load %arg20[%c0_426, %c0_427, %c0_428] : memref<1x8x16xf32, #tpu.memory_space<vmem>>, vector<1x8x16xf32>
    %761 = vector.shape_cast %760 : vector<1x8x16xf32> to vector<8x16xf32>
    %762 = vector.shape_cast %759 : vector<8x16xf32> to vector<1x8x16xf32>
    tpu.vector_store %arg20[%c0_426, %c0_427, %c0_428], %762 {strides = array<i32>} : memref<1x8x16xf32, #tpu.memory_space<vmem>>, vector<1x8x16xf32>,
    return
  }
  func.func @transform_0(%arg0: i32, %arg1: i32) -> i32 {
    %c0_i32 = arith.constant 0 : i32
    %c0_i32_0 = arith.constant 0 : i32
    return %c0_i32 : i32
  }
  func.func @transform_1(%arg0: i32, %arg1: i32) -> i32 {
    %c0_i32 = arith.constant 0 : i32
    %c0_i32_0 = arith.constant 0 : i32
    return %c0_i32 : i32
  }
  func.func @transform_2(%arg0: i32, %arg1: i32) -> (i32, i32, i32) {
    %c0_i32 = arith.constant 0 : i32
    %c0_i32_0 = arith.constant 0 : i32
    return %arg0, %arg1, %c0_i32 : i32, i32, i32
  }
  func.func @transform_3(%arg0: i32, %arg1: i32) -> (i32, i32, i32) {
    %c1_i32 = arith.constant 1 : i32
    %0 = arith.addi %arg1, %c1_i32 : i32
    %c1_i32_0 = arith.constant 1 : i32
    %1 = arith.muli %0, %c1_i32_0 : i32
    %c1_i32_1 = arith.constant 1 : i32
    %2 = arith.minsi %1, %c1_i32_1 : i32
    %c0_i32 = arith.constant 0 : i32
    %c0_i32_2 = arith.constant 0 : i32
    return %arg0, %2, %c0_i32 : i32, i32, i32
  }
  func.func @transform_4(%arg0: i32, %arg1: i32) -> (i32, i32) {
    %c0_i32 = arith.constant 0 : i32
    %c0_i32_0 = arith.constant 0 : i32
    %c0_i32_1 = arith.constant 0 : i32
    return %c0_i32, %c0_i32_0 : i32, i32
  }
  func.func @transform_5(%arg0: i32, %arg1: i32) -> (i32, i32) {
    %c0_i32 = arith.constant 0 : i32
    %c0_i32_0 = arith.constant 0 : i32
    %c0_i32_1 = arith.constant 0 : i32
    return %c0_i32, %c0_i32_0 : i32, i32
  }
  func.func @transform_6(%arg0: i32, %arg1: i32) -> (i32, i32) {
    %c0_i32 = arith.constant 0 : i32
    %c0_i32_0 = arith.constant 0 : i32
    %c0_i32_1 = arith.constant 0 : i32
    return %c0_i32, %c0_i32_0 : i32, i32
  }
  func.func @transform_7(%arg0: i32, %arg1: i32) -> (i32, i32) {
    %c0_i32 = arith.constant 0 : i32
    %c0_i32_0 = arith.constant 0 : i32
    %c0_i32_1 = arith.constant 0 : i32
    return %c0_i32, %c0_i32_0 : i32, i32
  }
  func.func @transform_8(%arg0: i32, %arg1: i32) -> (i32, i32, i32) {
    %c0_i32 = arith.constant 0 : i32
    %c0_i32_0 = arith.constant 0 : i32
    %c0_i32_1 = arith.constant 0 : i32
    %c0_i32_2 = arith.constant 0 : i32
    return %c0_i32, %c0_i32_0, %c0_i32_1 : i32, i32, i32
  }
  func.func @transform_9(%arg0: i32, %arg1: i32) -> (i32, i32, i32) {
    %c0_i32 = arith.constant 0 : i32
    %c0_i32_0 = arith.constant 0 : i32
    %c0_i32_1 = arith.constant 0 : i32
    %c0_i32_2 = arith.constant 0 : i32
    return %c0_i32, %c0_i32_0, %c0_i32_1 : i32, i32, i32
  }
  func.func @transform_10(%arg0: i32, %arg1: i32) -> (i32, i32) {
    %c0_i32 = arith.constant 0 : i32
    %c0_i32_0 = arith.constant 0 : i32
    %c0_i32_1 = arith.constant 0 : i32
    return %c0_i32, %c0_i32_0 : i32, i32
  }
  func.func @transform_11(%arg0: i32, %arg1: i32) -> (i32, i32) {
    %c0_i32 = arith.constant 0 : i32
    %c0_i32_0 = arith.constant 0 : i32
    %c0_i32_1 = arith.constant 0 : i32
    return %c0_i32, %c0_i32_0 : i32, i32
  }
  func.func @transform_12(%arg0: i32, %arg1: i32) -> (i32, i32) {
    %c0_i32 = arith.constant 0 : i32
    %c0_i32_0 = arith.constant 0 : i32
    %c0_i32_1 = arith.constant 0 : i32
    return %c0_i32, %c0_i32_0 : i32, i32
  }
  func.func @transform_13(%arg0: i32, %arg1: i32) -> (i32, i32) {
    %c0_i32 = arith.constant 0 : i32
    %c0_i32_0 = arith.constant 0 : i32
    %c0_i32_1 = arith.constant 0 : i32
    return %c0_i32, %c0_i32_0 : i32, i32
  }
  func.func @transform_14(%arg0: i32, %arg1: i32) -> (i32, i32) {
    %c0_i32 = arith.constant 0 : i32
    %c0_i32_0 = arith.constant 0 : i32
    %c0_i32_1 = arith.constant 0 : i32
    return %c0_i32, %c0_i32_0 : i32, i32
  }
  func.func @transform_15(%arg0: i32, %arg1: i32) -> (i32, i32) {
    %c0_i32 = arith.constant 0 : i32
    %c0_i32_0 = arith.constant 0 : i32
    %c0_i32_1 = arith.constant 0 : i32
    return %c0_i32, %c0_i32_0 : i32, i32
  }
  func.func @transform_16(%arg0: i32, %arg1: i32) -> (i32, i32) {
    %c0_i32 = arith.constant 0 : i32
    %c0_i32_0 = arith.constant 0 : i32
    %c0_i32_1 = arith.constant 0 : i32
    return %c0_i32, %c0_i32_0 : i32, i32
  }
  func.func @transform_17(%arg0: i32, %arg1: i32) -> (i32, i32) {
    %c0_i32 = arith.constant 0 : i32
    %c0_i32_0 = arith.constant 0 : i32
    %c0_i32_1 = arith.constant 0 : i32
    return %c0_i32, %c0_i32_0 : i32, i32
  }
  func.func @transform_18(%arg0: i32, %arg1: i32) -> (i32, i32, i32) {
    %c0_i32 = arith.constant 0 : i32
    %c0_i32_0 = arith.constant 0 : i32
    return %arg0, %arg1, %c0_i32 : i32, i32, i32
  }
}

</mosaic_0001>

<llo_original>
// kernel: tpu_custom_call.1
$region0: #{tpu_custom_call.1}
  #allocation0 [shape = 'u32[]', space=smem, size = 0x4, offset = 0x4, fixed_abs, tag = 'smem constant byte address 0x4 - core index']
  #allocation1 [shape = 'u32[144,128]{1,0:T(1,128)}', space=vmem, size = 0x12000, scoped, tag = 'internal scratch']
  %s0 = inlined_call_operand.hbm [shape: f32[16,128], index: 0, kind: input, shape index: {}]
  %s1 = inlined_call_operand.hbm [shape: f32[8,128], index: 1, kind: output, shape index: {}]
  %s2 = sld [smem:[#allocation0]]
  $region18: #{tpu_custom_call.1} parent=0
    _
  %s4 = ssub.s32 1, %s2
  %s5 = scalar_select 0, %s4, %s2
  $region1: #{tpu_custom_call.1} parent=0
    #allocation2 [shape = 'u8[8192]{0}', space=vmem, size = 0x2000, scoped, tag = 'input window, operand 0, single buffered']
    #allocation3 [shape = 's32[1]{0}', space=sflag, size = 0x4, scoped, tag = 'scoped memory for tpu_custom_call.1']
    #allocation4 [shape = 's32[1]{0}', space=sflag, size = 0x4, scoped, tag = 'scoped memory for tpu_custom_call.1']
    #allocation5 [shape = 'u8[4096]{0}', space=vmem, size = 0x1000, scoped, tag = 'output window, operand 0, single buffered']
    %6 = vsyncpa [#allocation3], 0
    %7 = vsyncpa [#allocation4], 0
    // Predicated region
    $region2: #{tpu_custom_call.1} parent=1 // pred_check
      _
    $region3: #{tpu_custom_call.1} parent=1 // pred_check_branch
      %9 = sbr.rel (0) target = $region5
    $region4: #{tpu_custom_call.1} parent=1 // pred_region
      %s11 = ssub.s32 256, 256
      %12 = vsyncadd [#allocation3], %s11
      %s13 = sshll.u32 [#allocation2], 4
      %s14 = int_to_ptr.vmem [resolvable:$true] %s13
      %19 = dma.hbm_to_vmem [thread:$0]  %s0, 256, %s14, [#allocation3], 128, 128, 8
    $region5: #{tpu_custom_call.1} parent=1 // pred_fallthru
      _
    // Predicated region
    $region6: #{tpu_custom_call.1} parent=1 // pred_check
      _
    $region7: #{tpu_custom_call.1} parent=1 // pred_check_branch
      %21 = sbr.rel (0) target = $region9
    $region8: #{tpu_custom_call.1} parent=1 // pred_region
      %22 = dma.done [#allocation3], 256
    $region9: #{tpu_custom_call.1} parent=1 // pred_fallthru
      _
    %v23 = vld [vmem:[#allocation2] ss:$2 sm:$0xff]
    %24 = vst [vmem:[#allocation5] sm:$0xff] %v23
    // Predicated region
    $region10: #{tpu_custom_call.1} parent=1 // pred_check
      _
    $region11: #{tpu_custom_call.1} parent=1 // pred_check_branch
      %26 = sbr.rel (0) target = $region13
    $region12: #{tpu_custom_call.1} parent=1 // pred_region
      %s28 = ssub.s32 128, 128
      %29 = vsyncadd [#allocation4], %s28
      %s31 = sshll.u32 [#allocation5], 4
      %s32 = int_to_ptr.vmem [resolvable:$true] %s31
      %34 = dma.vmem_to_hbm [thread:$0]  %s32, 128, %s1, [#allocation4]
    $region13: #{tpu_custom_call.1} parent=1 // pred_fallthru
      _
    // Predicated region
    $region14: #{tpu_custom_call.1} parent=1 // pred_check
      _
    $region15: #{tpu_custom_call.1} parent=1 // pred_check_branch
      %36 = sbr.rel (0) target = $region17
    $region16: #{tpu_custom_call.1} parent=1 // pred_region
      %37 = dma.done [#allocation4], 128
    $region17: #{tpu_custom_call.1} parent=1 // pred_fallthru
      _
    %38 = vsyncpa [#allocation3], 1
    %39 = vsyncpa [#allocation4], 1

// kernel: tpu_custom_call.1
$region0: #{tpu_custom_call.1}
  #allocation0 [shape = 'u32[]', space=smem, size = 0x4, offset = 0x4, fixed_abs, tag = 'smem constant byte address 0x4 - core index']
  #allocation1 [shape = 'u32[144,128]{1,0:T(1,128)}', space=vmem, size = 0x12000, scoped, tag = 'internal scratch']
  #allocation2 [shape = 'f32[64,32]{1,0:T(8,128)}', space=vmem, size = 0x8000, scoped, tag = 'scratch operand']
  #allocation3 [shape = 'f32[64,32]{1,0:T(8,128)}', space=vmem, size = 0x8000, scoped, tag = 'scratch operand']
  #allocation4 [shape = 'f32[8,32]{1,0:T(8,128)}', space=vmem, size = 0x1000, scoped, tag = 'scratch operand']
  #allocation5 [shape = 'f32[8,32]{1,0:T(8,128)}', space=vmem, size = 0x1000, scoped, tag = 'scratch operand']
  #allocation6 [shape = 'f32[8,32]{1,0:T(8,128)}', space=vmem, size = 0x1000, scoped, tag = 'scratch operand']
  #allocation7 [shape = 'f32[8,32]{1,0:T(8,128)}', space=vmem, size = 0x1000, scoped, tag = 'scratch operand']
  #allocation8 [shape = 'f32[1]{0:T(128)S(6)}', space=smem, size = 0x200, scoped, tag = 'scoped memory for tpu_custom_call.1']
  #allocation9 [shape = 'f32[1]{0:T(128)S(6)}', space=smem, size = 0x200, scoped, tag = 'scoped memory for tpu_custom_call.1']
  %s0 = inlined_call_operand.<no memory space> [shape: f32[1], index: 0, kind: input, shape index: {}]
  %s1 = inlined_call_operand.<no memory space> [shape: f32[1], index: 1, kind: input, shape index: {}]
  %s2 = inlined_call_operand.hbm [shape: f32[2,16,16], index: 2, kind: input, shape index: {}]
  %s3 = inlined_call_operand.vmem [shape: f32[2,16,16], index: 3, kind: input, shape index: {}]
  %s4 = inlined_call_operand.hbm [shape: bf16[16,64], index: 4, kind: input, shape index: {}]
  %s5 = inlined_call_operand.vmem [shape: f32[1,64], index: 5, kind: input, shape index: {}]
  %s6 = inlined_call_operand.hbm [shape: f32[3,32], index: 6, kind: input, shape index: {}]
  %s7 = inlined_call_operand.hbm [shape: f32[1,32], index: 7, kind: input, shape index: {}]
  %s8 = inlined_call_operand.hbm [shape: bf16[8,32,64], index: 8, kind: input, shape index: {}]
  %s9 = inlined_call_operand.hbm [shape: f32[8,1,64], index: 9, kind: input, shape index: {}]
  %s10 = inlined_call_operand.vmem [shape: bf16[32,32], index: 10, kind: input, shape index: {}]
  %s11 = inlined_call_operand.hbm [shape: f32[1,32], index: 11, kind: input, shape index: {}]
  %s12 = inlined_call_operand.hbm [shape: f32[8,32], index: 12, kind: input, shape index: {}]
  %s13 = inlined_call_operand.hbm [shape: f32[1,32], index: 13, kind: input, shape index: {}]
  %s14 = inlined_call_operand.vmem [shape: bf16[32,32], index: 14, kind: input, shape index: {}]
  %s15 = inlined_call_operand.vmem [shape: f32[1,32], index: 15, kind: input, shape index: {}]
  %s16 = inlined_call_operand.vmem [shape: bf16[32,16], index: 16, kind: input, shape index: {}]
  %s17 = inlined_call_operand.vmem [shape: f32[1,16], index: 17, kind: input, shape index: {}]
  %s18 = inlined_call_operand.hbm [shape: f32[2,16,16], index: 18, kind: output, shape index: {}]
  %s19 = sld [smem:[#allocation0]]
  $region145: #{tpu_custom_call.1} parent=0
    _
  %s21 = ssub.s32 1, %s19
  %s22 = scalar_select 0, %s21, %s19
  %23 = sst [smem:[#allocation8]] %s0
  %24 = sst [smem:[#allocation9]] %s1
  $region1: #{tpu_custom_call.1} parent=0
    #allocation10 [shape = 'u8[8192]{0}', space=vmem, size = 0x2000, scoped, tag = 'input window, operand 2']
    #allocation11 [shape = 's32[2]{0}', space=sflag, size = 0x8, scoped, tag = 'scoped memory for tpu_custom_call.1']
    #allocation12 [shape = 's32[2]{0}', space=sflag, size = 0x8, scoped, tag = 'scoped memory for tpu_custom_call.1']
    #allocation13 [shape = 'u8[4096]{0}', space=vmem, size = 0x1000, scoped, tag = 'input window, operand 4, single buffered']
    #allocation14 [shape = 's32[1]{0}', space=sflag, size = 0x4, scoped, tag = 'scoped memory for tpu_custom_call.1']
    #allocation15 [shape = 'u8[2048]{0}', space=vmem, size = 0x800, scoped, tag = 'input window, operand 6, single buffered']
    #allocation16 [shape = 'u8[512]{0}', space=vmem, size = 0x400, scoped, tag = 'input window, operand 7, single buffered']
    #allocation17 [shape = 's32[1]{0}', space=sflag, size = 0x4, scoped, tag = 'scoped memory for tpu_custom_call.1']
    #allocation18 [shape = 'u8[65536]{0}', space=vmem, size = 0x10000, scoped, tag = 'input window, operand 8, single buffered']
    #allocation19 [shape = 'u8[4096]{0}', space=vmem, size = 0x1000, scoped, tag = 'input window, operand 9, single buffered']
    #allocation20 [shape = 's32[1]{0}', space=sflag, size = 0x4, scoped, tag = 'scoped memory for tpu_custom_call.1']
    #allocation21 [shape = 'u8[512]{0}', space=vmem, size = 0x400, scoped, tag = 'input window, operand 11, single buffered']
    #allocation22 [shape = 'u8[4096]{0}', space=vmem, size = 0x1000, scoped, tag = 'input window, operand 12, single buffered']
    #allocation23 [shape = 's32[1]{0}', space=sflag, size = 0x4, scoped, tag = 'scoped memory for tpu_custom_call.1']
    #allocation24 [shape = 'u8[512]{0}', space=vmem, size = 0x400, scoped, tag = 'input window, operand 13, single buffered']
    #allocation25 [shape = 'u8[8192]{0}', space=vmem, size = 0x2000, scoped, tag = 'output window, operand 0']
    %25 = vsyncpa [#allocation11], 0
    %s26 = scalar_lea.sflag [#allocation11], 1
    %27 = vsyncpa %s26, 0
    %28 = vsyncpa [#allocation14], 0
    %29 = vsyncpa [#allocation17], 0
    %30 = vsyncpa [#allocation20], 0
    %31 = vsyncpa [#allocation23], 0
    %32 = vsyncpa [#allocation12], 0
    %s33 = scalar_lea.sflag [#allocation12], 1
    %34 = vsyncpa %s33, 0
    loop: start=0, step=1, limit=6
    $region2: #{tpu_custom_call.1} parent=1 // loop_pre_header
      _
    $region3: #{tpu_custom_call.1} parent=1 // loop_header
      %s36 = sphi 0, %s40
      %p37 = scmp.ge.s32.totalorder %s36, 6
      %s43 = sphi 0, %s55
      %s44 = sphi 0, %s51
      %s45 = sphi 0, %s43
      %s46 = sphi 0, %s44
      %s47 = sphi 0, %s45
      %s48 = sphi 0, %s46
      %s56 = sphi 0, %s56
      %s58 = sphi 0, %s56
      %s59 = sphi 0, %s58
      %s73 = sphi 0, %s59
      %s77 = sphi 0, %s77
      %s79 = sphi 0, %s77
      %s80 = sphi 0, %s79
      %s94 = sphi 0, %s80
      %s102 = sphi 0, %s104
      %s105 = sphi 0, %s102
      %s106 = sphi 0, %s105
      %s122 = sphi 0, %s106
      %s136 = sphi 0, %s138
      %s139 = sphi 0, %s136
      %s140 = sphi 0, %s139
      %s156 = sphi 0, %s140
      %s160 = sphi 0, %s160
      %s162 = sphi 0, %s160
      %s163 = sphi 0, %s162
      %s177 = sphi 0, %s163
      %s181 = sphi 0, %s181
      %s183 = sphi 0, %s181
      %s184 = sphi 0, %s183
      %s198 = sphi 0, %s184
      %s202 = sphi 0, %s202
      %s204 = sphi 0, %s202
      %s205 = sphi 0, %s204
      %s219 = sphi 0, %s205
      %s223 = sphi 0, %s223
      %s225 = sphi 0, %s223
      %s226 = sphi 0, %s225
      %s240 = sphi 0, %s226
      %s244 = sphi 0, %s244
      %s246 = sphi 0, %s244
      %s247 = sphi 0, %s246
      %s261 = sphi 0, %s247
      %s265 = sphi 0, %s265
      %s267 = sphi 0, %s265
      %s268 = sphi 0, %s267
      %s282 = sphi 0, %s268
      %s286 = sphi 0, %s286
      %s288 = sphi 0, %s286
      %s289 = sphi 0, %s288
      %s303 = sphi 0, %s289
      %s307 = sphi 0, %s307
      %s309 = sphi 0, %s307
      %s310 = sphi 0, %s309
      %s324 = sphi 0, %s310
      %s328 = sphi 0, %s328
      %s330 = sphi 0, %s328
      %s331 = sphi 0, %s330
      %s345 = sphi 0, %s331
      %s349 = sphi 0, %s349
      %s351 = sphi 0, %s349
      %s352 = sphi 0, %s351
      %s366 = sphi 0, %s352
      %s370 = sphi 0, %s370
      %s372 = sphi 0, %s370
      %s373 = sphi 0, %s372
      %s387 = sphi 0, %s373
      %s391 = sphi 0, %s391
      %s393 = sphi 0, %s391
      %s394 = sphi 0, %s393
      %s408 = sphi 0, %s394
      %s412 = sphi 0, %s412
      %s414 = sphi 0, %s412
      %s415 = sphi 0, %s414
      %s429 = sphi 0, %s415
      %s433 = sphi 0, %s433
      %s435 = sphi 0, %s433
      %s436 = sphi 0, %s435
      %s450 = sphi 0, %s436
      %s458 = sphi 0, %s460
      %s461 = sphi 0, %s458
      %s462 = sphi 0, %s461
      %s478 = sphi 0, %s462
    $region4: #{tpu_custom_call.1} parent=1 // loop_header_branch
      %39 = sbr.rel (%p37) target = $region8
    $region5: #{tpu_custom_call.1} parent=1 // loop_body
      %s41 = ssub.s32 %s36, 1
      %s42 = ssub.s32 %s36, 2
      %s49 = sadd.s32 1, %s44
      %p50 = scmp.ge.s32.totalorder %s49, 2
      %s51 = scalar_select %p50, 0, %s49
      %s52 = sadd.s32 1, %s43
      %s53 = scalar_select %p50, %s52, %s43
      %p54 = scmp.ge.s32.totalorder %s53, 2
      %s55 = scalar_select %p54, 0, %s53
      %s57 = sadd.s32 %s56, 1
      %p60 = scmp.eq.s32.totalorder %s36, 3
      %p61 = scmp.ne.s32.totalorder %s56, %s58
      %p62 = scmp.eq.s32.totalorder %s36, 0
      %p63 = por %p61, %p62
      %p64 = scmp.ne.s32.totalorder %s56, %s58
      %p65 = scmp.eq.s32.totalorder %s41, 3
      %p66 = por %p64, %p65
      %p67 = scmp.ne.s32.totalorder %s58, %s59
      %p68 = scmp.eq.s32.totalorder %s41, 0
      %p69 = por %p67, %p68
      %p70 = scmp.ne.s32.totalorder %s58, %s59
      %p71 = scmp.eq.s32.totalorder %s42, 3
      %p72 = por %p70, %p71
      %p74 = scmp.ne.s32.totalorder %s59, %s73
      %p75 = scmp.eq.s32.totalorder %s42, 0
      %p76 = por %p74, %p75
      %s78 = sadd.s32 %s77, 1
      %p81 = scmp.eq.s32.totalorder %s36, 3
      %p82 = scmp.ne.s32.totalorder %s77, %s79
      %p83 = scmp.eq.s32.totalorder %s36, 0
      %p84 = por %p82, %p83
      %p85 = scmp.ne.s32.totalorder %s77, %s79
      %p86 = scmp.eq.s32.totalorder %s41, 3
      %p87 = por %p85, %p86
      %p88 = scmp.ne.s32.totalorder %s79, %s80
      %p89 = scmp.eq.s32.totalorder %s41, 0
      %p90 = por %p88, %p89
      %p91 = scmp.ne.s32.totalorder %s79, %s80
      %p92 = scmp.eq.s32.totalorder %s42, 3
      %p93 = por %p91, %p92
      %p95 = scmp.ne.s32.totalorder %s80, %s94
      %p96 = scmp.eq.s32.totalorder %s42, 0
      %p97 = por %p95, %p96
      %s98 = ssub.s32 %s43, %s55
      %s99 = ssub.s32 %s44, %s51
      %s100 = sor.u32 %s98, %s99
      %p101 = scmp.eq.s32.totalorder %s100, 0
      %s103 = sadd.s32 %s102, 1
      %s104 = scalar_select %p101, %s102, %s103
      %p107 = pneg %p101
      %p108 = scmp.eq.s32.totalorder %s36, 3
      %p109 = por %p107, %p108
      %p110 = scmp.ne.s32.totalorder %s102, %s105
      %p111 = scmp.eq.s32.totalorder %s36, 0
      %p112 = por %p110, %p111
      %p113 = scmp.ne.s32.totalorder %s102, %s105
      %p114 = scmp.eq.s32.totalorder %s41, 3
      %p115 = por %p113, %p114
      %p116 = scmp.ne.s32.totalorder %s105, %s106
      %p117 = scmp.eq.s32.totalorder %s41, 0
      %p118 = por %p116, %p117
      %p119 = scmp.ne.s32.totalorder %s105, %s106
      %p120 = scmp.eq.s32.totalorder %s42, 3
      %p121 = por %p119, %p120
      %p123 = scmp.ne.s32.totalorder %s106, %s122
      %p124 = scmp.eq.s32.totalorder %s42, 0
      %p125 = por %p123, %p124
      %s126 = sadd.s32 %s44, 1
      %p127 = scmp.lt.s32.totalorder %s126, 1
      %s128 = scalar_select %p127, %s126, 1
      %s129 = sadd.s32 %s51, 1
      %p130 = scmp.lt.s32.totalorder %s129, 1
      %s131 = scalar_select %p130, %s129, 1
      %s132 = ssub.s32 %s43, %s55
      %s133 = ssub.s32 %s128, %s131
      %s134 = sor.u32 %s132, %s133
      %p135 = scmp.eq.s32.totalorder %s134, 0
      %s137 = sadd.s32 %s136, 1
      %s138 = scalar_select %p135, %s136, %s137
      %p141 = pneg %p135
      %p142 = scmp.eq.s32.totalorder %s36, 3
      %p143 = por %p141, %p142
      %p144 = scmp.ne.s32.totalorder %s136, %s139
      %p145 = scmp.eq.s32.totalorder %s36, 0
      %p146 = por %p144, %p145
      %p147 = scmp.ne.s32.totalorder %s136, %s139
      %p148 = scmp.eq.s32.totalorder %s41, 3
      %p149 = por %p147, %p148
      %p150 = scmp.ne.s32.totalorder %s139, %s140
      %p151 = scmp.eq.s32.totalorder %s41, 0
      %p152 = por %p150, %p151
      %p153 = scmp.ne.s32.totalorder %s139, %s140
      %p154 = scmp.eq.s32.totalorder %s42, 3
      %p155 = por %p153, %p154
      %p157 = scmp.ne.s32.totalorder %s140, %s156
      %p158 = scmp.eq.s32.totalorder %s42, 0
      %p159 = por %p157, %p158
      %s161 = sadd.s32 %s160, 1
      %p164 = scmp.eq.s32.totalorder %s36, 3
      %p165 = scmp.ne.s32.totalorder %s160, %s162
      %p166 = scmp.eq.s32.totalorder %s36, 0
      %p167 = por %p165, %p166
      %p168 = scmp.ne.s32.totalorder %s160, %s162
      %p169 = scmp.eq.s32.totalorder %s41, 3
      %p170 = por %p168, %p169
      %p171 = scmp.ne.s32.totalorder %s162, %s163
      %p172 = scmp.eq.s32.totalorder %s41, 0
      %p173 = por %p171, %p172
      %p174 = scmp.ne.s32.totalorder %s162, %s163
      %p175 = scmp.eq.s32.totalorder %s42, 3
      %p176 = por %p174, %p175
      %p178 = scmp.ne.s32.totalorder %s163, %s177
      %p179 = scmp.eq.s32.totalorder %s42, 0
      %p180 = por %p178, %p179
      %s182 = sadd.s32 %s181, 1
      %p185 = scmp.eq.s32.totalorder %s36, 3
      %p186 = scmp.ne.s32.totalorder %s181, %s183
      %p187 = scmp.eq.s32.totalorder %s36, 0
      %p188 = por %p186, %p187
      %p189 = scmp.ne.s32.totalorder %s181, %s183
      %p190 = scmp.eq.s32.totalorder %s41, 3
      %p191 = por %p189, %p190
      %p192 = scmp.ne.s32.totalorder %s183, %s184
      %p193 = scmp.eq.s32.totalorder %s41, 0
      %p194 = por %p192, %p193
      %p195 = scmp.ne.s32.totalorder %s183, %s184
      %p196 = scmp.eq.s32.totalorder %s42, 3
      %p197 = por %p195, %p196
      %p199 = scmp.ne.s32.totalorder %s184, %s198
      %p200 = scmp.eq.s32.totalorder %s42, 0
      %p201 = por %p199, %p200
      %s203 = sadd.s32 %s202, 1
      %p206 = scmp.eq.s32.totalorder %s36, 3
      %p207 = scmp.ne.s32.totalorder %s202, %s204
      %p208 = scmp.eq.s32.totalorder %s36, 0
      %p209 = por %p207, %p208
      %p210 = scmp.ne.s32.totalorder %s202, %s204
      %p211 = scmp.eq.s32.totalorder %s41, 3
      %p212 = por %p210, %p211
      %p213 = scmp.ne.s32.totalorder %s204, %s205
      %p214 = scmp.eq.s32.totalorder %s41, 0
      %p215 = por %p213, %p214
      %p216 = scmp.ne.s32.totalorder %s204, %s205
      %p217 = scmp.eq.s32.totalorder %s42, 3
      %p218 = por %p216, %p217
      %p220 = scmp.ne.s32.totalorder %s205, %s219
      %p221 = scmp.eq.s32.totalorder %s42, 0
      %p222 = por %p220, %p221
      %s224 = sadd.s32 %s223, 1
      %p227 = scmp.eq.s32.totalorder %s36, 3
      %p228 = scmp.ne.s32.totalorder %s223, %s225
      %p229 = scmp.eq.s32.totalorder %s36, 0
      %p230 = por %p228, %p229
      %p231 = scmp.ne.s32.totalorder %s223, %s225
      %p232 = scmp.eq.s32.totalorder %s41, 3
      %p233 = por %p231, %p232
      %p234 = scmp.ne.s32.totalorder %s225, %s226
      %p235 = scmp.eq.s32.totalorder %s41, 0
      %p236 = por %p234, %p235
      %p237 = scmp.ne.s32.totalorder %s225, %s226
      %p238 = scmp.eq.s32.totalorder %s42, 3
      %p239 = por %p237, %p238
      %p241 = scmp.ne.s32.totalorder %s226, %s240
      %p242 = scmp.eq.s32.totalorder %s42, 0
      %p243 = por %p241, %p242
      %s245 = sadd.s32 %s244, 1
      %p248 = scmp.eq.s32.totalorder %s36, 3
      %p249 = scmp.ne.s32.totalorder %s244, %s246
      %p250 = scmp.eq.s32.totalorder %s36, 0
      %p251 = por %p249, %p250
      %p252 = scmp.ne.s32.totalorder %s244, %s246
      %p253 = scmp.eq.s32.totalorder %s41, 3
      %p254 = por %p252, %p253
      %p255 = scmp.ne.s32.totalorder %s246, %s247
      %p256 = scmp.eq.s32.totalorder %s41, 0
      %p257 = por %p255, %p256
      %p258 = scmp.ne.s32.totalorder %s246, %s247
      %p259 = scmp.eq.s32.totalorder %s42, 3
      %p260 = por %p258, %p259
      %p262 = scmp.ne.s32.totalorder %s247, %s261
      %p263 = scmp.eq.s32.totalorder %s42, 0
      %p264 = por %p262, %p263
      %s266 = sadd.s32 %s265, 1
      %p269 = scmp.eq.s32.totalorder %s36, 3
      %p270 = scmp.ne.s32.totalorder %s265, %s267
      %p271 = scmp.eq.s32.totalorder %s36, 0
      %p272 = por %p270, %p271
      %p273 = scmp.ne.s32.totalorder %s265, %s267
      %p274 = scmp.eq.s32.totalorder %s41, 3
      %p275 = por %p273, %p274
      %p276 = scmp.ne.s32.totalorder %s267, %s268
      %p277 = scmp.eq.s32.totalorder %s41, 0
      %p278 = por %p276, %p277
      %p279 = scmp.ne.s32.totalorder %s267, %s268
      %p280 = scmp.eq.s32.totalorder %s42, 3
      %p281 = por %p279, %p280
      %p283 = scmp.ne.s32.totalorder %s268, %s282
      %p284 = scmp.eq.s32.totalorder %s42, 0
      %p285 = por %p283, %p284
      %s287 = sadd.s32 %s286, 1
      %p290 = scmp.eq.s32.totalorder %s36, 3
      %p291 = scmp.ne.s32.totalorder %s286, %s288
      %p292 = scmp.eq.s32.totalorder %s36, 0
      %p293 = por %p291, %p292
      %p294 = scmp.ne.s32.totalorder %s286, %s288
      %p295 = scmp.eq.s32.totalorder %s41, 3
      %p296 = por %p294, %p295
      %p297 = scmp.ne.s32.totalorder %s288, %s289
      %p298 = scmp.eq.s32.totalorder %s41, 0
      %p299 = por %p297, %p298
      %p300 = scmp.ne.s32.totalorder %s288, %s289
      %p301 = scmp.eq.s32.totalorder %s42, 3
      %p302 = por %p300, %p301
      %p304 = scmp.ne.s32.totalorder %s289, %s303
      %p305 = scmp.eq.s32.totalorder %s42, 0
      %p306 = por %p304, %p305
      %s308 = sadd.s32 %s307, 1
      %p311 = scmp.eq.s32.totalorder %s36, 3
      %p312 = scmp.ne.s32.totalorder %s307, %s309
      %p313 = scmp.eq.s32.totalorder %s36, 0
      %p314 = por %p312, %p313
      %p315 = scmp.ne.s32.totalorder %s307, %s309
      %p316 = scmp.eq.s32.totalorder %s41, 3
      %p317 = por %p315, %p316
      %p318 = scmp.ne.s32.totalorder %s309, %s310
      %p319 = scmp.eq.s32.totalorder %s41, 0
      %p320 = por %p318, %p319
      %p321 = scmp.ne.s32.totalorder %s309, %s310
      %p322 = scmp.eq.s32.totalorder %s42, 3
      %p323 = por %p321, %p322
      %p325 = scmp.ne.s32.totalorder %s310, %s324
      %p326 = scmp.eq.s32.totalorder %s42, 0
      %p327 = por %p325, %p326
      %s329 = sadd.s32 %s328, 1
      %p332 = scmp.eq.s32.totalorder %s36, 3
      %p333 = scmp.ne.s32.totalorder %s328, %s330
      %p334 = scmp.eq.s32.totalorder %s36, 0
      %p335 = por %p333, %p334
      %p336 = scmp.ne.s32.totalorder %s328, %s330
      %p337 = scmp.eq.s32.totalorder %s41, 3
      %p338 = por %p336, %p337
      %p339 = scmp.ne.s32.totalorder %s330, %s331
      %p340 = scmp.eq.s32.totalorder %s41, 0
      %p341 = por %p339, %p340
      %p342 = scmp.ne.s32.totalorder %s330, %s331
      %p343 = scmp.eq.s32.totalorder %s42, 3
      %p344 = por %p342, %p343
      %p346 = scmp.ne.s32.totalorder %s331, %s345
      %p347 = scmp.eq.s32.totalorder %s42, 0
      %p348 = por %p346, %p347
      %s350 = sadd.s32 %s349, 1
      %p353 = scmp.eq.s32.totalorder %s36, 3
      %p354 = scmp.ne.s32.totalorder %s349, %s351
      %p355 = scmp.eq.s32.totalorder %s36, 0
      %p356 = por %p354, %p355
      %p357 = scmp.ne.s32.totalorder %s349, %s351
      %p358 = scmp.eq.s32.totalorder %s41, 3
      %p359 = por %p357, %p358
      %p360 = scmp.ne.s32.totalorder %s351, %s352
      %p361 = scmp.eq.s32.totalorder %s41, 0
      %p362 = por %p360, %p361
      %p363 = scmp.ne.s32.totalorder %s351, %s352
      %p364 = scmp.eq.s32.totalorder %s42, 3
      %p365 = por %p363, %p364
      %p367 = scmp.ne.s32.totalorder %s352, %s366
      %p368 = scmp.eq.s32.totalorder %s42, 0
      %p369 = por %p367, %p368
      %s371 = sadd.s32 %s370, 1
      %p374 = scmp.eq.s32.totalorder %s36, 3
      %p375 = scmp.ne.s32.totalorder %s370, %s372
      %p376 = scmp.eq.s32.totalorder %s36, 0
      %p377 = por %p375, %p376
      %p378 = scmp.ne.s32.totalorder %s370, %s372
      %p379 = scmp.eq.s32.totalorder %s41, 3
      %p380 = por %p378, %p379
      %p381 = scmp.ne.s32.totalorder %s372, %s373
      %p382 = scmp.eq.s32.totalorder %s41, 0
      %p383 = por %p381, %p382
      %p384 = scmp.ne.s32.totalorder %s372, %s373
      %p385 = scmp.eq.s32.totalorder %s42, 3
      %p386 = por %p384, %p385
      %p388 = scmp.ne.s32.totalorder %s373, %s387
      %p389 = scmp.eq.s32.totalorder %s42, 0
      %p390 = por %p388, %p389
      %s392 = sadd.s32 %s391, 1
      %p395 = scmp.eq.s32.totalorder %s36, 3
      %p396 = scmp.ne.s32.totalorder %s391, %s393
      %p397 = scmp.eq.s32.totalorder %s36, 0
      %p398 = por %p396, %p397
      %p399 = scmp.ne.s32.totalorder %s391, %s393
      %p400 = scmp.eq.s32.totalorder %s41, 3
      %p401 = por %p399, %p400
      %p402 = scmp.ne.s32.totalorder %s393, %s394
      %p403 = scmp.eq.s32.totalorder %s41, 0
      %p404 = por %p402, %p403
      %p405 = scmp.ne.s32.totalorder %s393, %s394
      %p406 = scmp.eq.s32.totalorder %s42, 3
      %p407 = por %p405, %p406
      %p409 = scmp.ne.s32.totalorder %s394, %s408
      %p410 = scmp.eq.s32.totalorder %s42, 0
      %p411 = por %p409, %p410
      %s413 = sadd.s32 %s412, 1
      %p416 = scmp.eq.s32.totalorder %s36, 3
      %p417 = scmp.ne.s32.totalorder %s412, %s414
      %p418 = scmp.eq.s32.totalorder %s36, 0
      %p419 = por %p417, %p418
      %p420 = scmp.ne.s32.totalorder %s412, %s414
      %p421 = scmp.eq.s32.totalorder %s41, 3
      %p422 = por %p420, %p421
      %p423 = scmp.ne.s32.totalorder %s414, %s415
      %p424 = scmp.eq.s32.totalorder %s41, 0
      %p425 = por %p423, %p424
      %p426 = scmp.ne.s32.totalorder %s414, %s415
      %p427 = scmp.eq.s32.totalorder %s42, 3
      %p428 = por %p426, %p427
      %p430 = scmp.ne.s32.totalorder %s415, %s429
      %p431 = scmp.eq.s32.totalorder %s42, 0
      %p432 = por %p430, %p431
      %s434 = sadd.s32 %s433, 1
      %p437 = scmp.eq.s32.totalorder %s36, 3
      %p438 = scmp.ne.s32.totalorder %s433, %s435
      %p439 = scmp.eq.s32.totalorder %s36, 0
      %p440 = por %p438, %p439
      %p441 = scmp.ne.s32.totalorder %s433, %s435
      %p442 = scmp.eq.s32.totalorder %s41, 3
      %p443 = por %p441, %p442
      %p444 = scmp.ne.s32.totalorder %s435, %s436
      %p445 = scmp.eq.s32.totalorder %s41, 0
      %p446 = por %p444, %p445
      %p447 = scmp.ne.s32.totalorder %s435, %s436
      %p448 = scmp.eq.s32.totalorder %s42, 3
      %p449 = por %p447, %p448
      %p451 = scmp.ne.s32.totalorder %s436, %s450
      %p452 = scmp.eq.s32.totalorder %s42, 0
      %p453 = por %p451, %p452
      %s454 = ssub.s32 %s43, %s55
      %s455 = ssub.s32 %s44, %s51
      %s456 = sor.u32 %s454, %s455
      %p457 = scmp.eq.s32.totalorder %s456, 0
      %s459 = sadd.s32 %s458, 1
      %s460 = scalar_select %p457, %s458, %s459
      %p463 = pneg %p457
      %p464 = scmp.eq.s32.totalorder %s36, 3
      %p465 = por %p463, %p464
      %p466 = scmp.ne.s32.totalorder %s458, %s461
      %p467 = scmp.eq.s32.totalorder %s36, 0
      %p468 = por %p466, %p467
      %p469 = scmp.ne.s32.totalorder %s458, %s461
      %p470 = scmp.eq.s32.totalorder %s41, 3
      %p471 = por %p469, %p470
      %p472 = scmp.ne.s32.totalorder %s461, %s462
      %p473 = scmp.eq.s32.totalorder %s41, 0
      %p474 = por %p472, %p473
      %p475 = scmp.ne.s32.totalorder %s461, %s462
      %p476 = scmp.eq.s32.totalorder %s42, 3
      %p477 = por %p475, %p476
      %p479 = scmp.ne.s32.totalorder %s462, %s478
      %p480 = scmp.eq.s32.totalorder %s42, 0
      %p481 = por %p479, %p480
      %p482 = scmp.le.s32.totalorder 1, %s36
      %p483 = scmp.lt.s32.totalorder %s36, 5
      %p484 = pnand %p482, %p483
      %p485 = pneg %p484
      // Predicated region
      $region9: #{tpu_custom_call.1} parent=5 // pred_check
        _
      $region10: #{tpu_custom_call.1} parent=5 // pred_check_branch
        %487 = sbr.rel (%p484) target = $region12
      $region11: #{tpu_custom_call.1} parent=5 // pred_region
        %s488 = ssub.s32 %s36, 1
        // Predicated region
        $region13: #{tpu_custom_call.1} parent=11 // pred_check
          %p489 = pneg %p69
        $region14: #{tpu_custom_call.1} parent=11 // pred_check_branch
          %491 = sbr.rel (%p489) target = $region16
        $region15: #{tpu_custom_call.1} parent=11 // pred_region
          _
        $region16: #{tpu_custom_call.1} parent=11 // pred_fallthru
          _
        // Predicated region
        $region17: #{tpu_custom_call.1} parent=11 // pred_check
          %p492 = pneg %p90
        $region18: #{tpu_custom_call.1} parent=11 // pred_check_branch
          %494 = sbr.rel (%p492) target = $region20
        $region19: #{tpu_custom_call.1} parent=11 // pred_region
          _
        $region20: #{tpu_custom_call.1} parent=11 // pred_fallthru
          _
        // Predicated region
        $region21: #{tpu_custom_call.1} parent=11 // pred_check
          %p495 = pneg %p173
        $region22: #{tpu_custom_call.1} parent=11 // pred_check_branch
          %497 = sbr.rel (%p495) target = $region24
        $region23: #{tpu_custom_call.1} parent=11 // pred_region
          %s499 = ssub.s32 128, 128
          %500 = vsyncadd [#allocation14], %s499
          %s501 = sshll.u32 [#allocation13], 4
          %s502 = int_to_ptr.vmem [resolvable:$true] %s501
          %507 = dma.hbm_to_vmem [thread:$0]  %s4, 128, %s502, [#allocation14], 64, 64, 4
        $region24: #{tpu_custom_call.1} parent=11 // pred_fallthru
          _
        // Predicated region
        $region25: #{tpu_custom_call.1} parent=11 // pred_check
          %p508 = pneg %p194
        $region26: #{tpu_custom_call.1} parent=11 // pred_check_branch
          %510 = sbr.rel (%p508) target = $region28
        $region27: #{tpu_custom_call.1} parent=11 // pred_region
          _
        $region28: #{tpu_custom_call.1} parent=11 // pred_fallthru
          _
        // Predicated region
        $region29: #{tpu_custom_call.1} parent=11 // pred_check
          %p511 = pneg %p215
        $region30: #{tpu_custom_call.1} parent=11 // pred_check_branch
          %513 = sbr.rel (%p511) target = $region32
        $region31: #{tpu_custom_call.1} parent=11 // pred_region
          %s515 = ssub.s32 64, 64
          %516 = vsyncadd [#allocation14], %s515
          %s518 = sshll.u32 [#allocation15], 4
          %s519 = int_to_ptr.vmem [resolvable:$true] %s518
          %521 = dma.hbm_to_vmem [thread:$0]  %s6, 64, %s519, [#allocation14]
        $region32: #{tpu_custom_call.1} parent=11 // pred_fallthru
          _
        // Predicated region
        $region33: #{tpu_custom_call.1} parent=11 // pred_check
          %p522 = pneg %p236
        $region34: #{tpu_custom_call.1} parent=11 // pred_check_branch
          %524 = sbr.rel (%p522) target = $region36
        $region35: #{tpu_custom_call.1} parent=11 // pred_region
          %s526 = ssub.s32 16, 16
          %527 = vsyncadd [#allocation17], %s526
          %s529 = sshll.u32 [#allocation16], 4
          %s530 = int_to_ptr.vmem [resolvable:$true] %s529
          %532 = dma.hbm_to_vmem [thread:$0]  %s7, 16, %s530, [#allocation17]
        $region36: #{tpu_custom_call.1} parent=11 // pred_fallthru
          _
        // Predicated region
        $region37: #{tpu_custom_call.1} parent=11 // pred_check
          %p533 = pneg %p257
        $region38: #{tpu_custom_call.1} parent=11 // pred_check_branch
          %535 = sbr.rel (%p533) target = $region40
        $region39: #{tpu_custom_call.1} parent=11 // pred_region
          %s537 = ssub.s32 2048, 2048
          %538 = vsyncadd [#allocation17], %s537
          %s539 = sshll.u32 [#allocation18], 4
          %s540 = int_to_ptr.vmem [resolvable:$true] %s539
          %545 = dma.hbm_to_vmem [thread:$0]  %s8, 2048, %s540, [#allocation17], 64, 64, 4
        $region40: #{tpu_custom_call.1} parent=11 // pred_fallthru
          _
        // Predicated region
        $region41: #{tpu_custom_call.1} parent=11 // pred_check
          %p546 = pneg %p278
        $region42: #{tpu_custom_call.1} parent=11 // pred_check_branch
          %548 = sbr.rel (%p546) target = $region44
        $region43: #{tpu_custom_call.1} parent=11 // pred_region
          %s550 = ssub.s32 128, 128
          %551 = vsyncadd [#allocation20], %s550
          %s552 = sshll.u32 [#allocation19], 4
          %s553 = int_to_ptr.vmem [resolvable:$true] %s552
          %558 = dma.hbm_to_vmem [thread:$0]  %s9, 128, %s553, [#allocation20], 16, 16, 1
        $region44: #{tpu_custom_call.1} parent=11 // pred_fallthru
          _
        // Predicated region
        $region45: #{tpu_custom_call.1} parent=11 // pred_check
          %p559 = pneg %p299
        $region46: #{tpu_custom_call.1} parent=11 // pred_check_branch
          %561 = sbr.rel (%p559) target = $region48
        $region47: #{tpu_custom_call.1} parent=11 // pred_region
          _
        $region48: #{tpu_custom_call.1} parent=11 // pred_fallthru
          _
        // Predicated region
        $region49: #{tpu_custom_call.1} parent=11 // pred_check
          %p562 = pneg %p320
        $region50: #{tpu_custom_call.1} parent=11 // pred_check_branch
          %564 = sbr.rel (%p562) target = $region52
        $region51: #{tpu_custom_call.1} parent=11 // pred_region
          %s566 = ssub.s32 16, 16
          %567 = vsyncadd [#allocation20], %s566
          %s569 = sshll.u32 [#allocation21], 4
          %s570 = int_to_ptr.vmem [resolvable:$true] %s569
          %572 = dma.hbm_to_vmem [thread:$0]  %s11, 16, %s570, [#allocation20]
        $region52: #{tpu_custom_call.1} parent=11 // pred_fallthru
          _
        // Predicated region
        $region53: #{tpu_custom_call.1} parent=11 // pred_check
          %p573 = pneg %p341
        $region54: #{tpu_custom_call.1} parent=11 // pred_check_branch
          %575 = sbr.rel (%p573) target = $region56
        $region55: #{tpu_custom_call.1} parent=11 // pred_region
          %s577 = ssub.s32 128, 128
          %578 = vsyncadd [#allocation23], %s577
          %s580 = sshll.u32 [#allocation22], 4
          %s581 = int_to_ptr.vmem [resolvable:$true] %s580
          %583 = dma.hbm_to_vmem [thread:$0]  %s12, 128, %s581, [#allocation23]
        $region56: #{tpu_custom_call.1} parent=11 // pred_fallthru
          _
        // Predicated region
        $region57: #{tpu_custom_call.1} parent=11 // pred_check
          %p584 = pneg %p362
        $region58: #{tpu_custom_call.1} parent=11 // pred_check_branch
          %586 = sbr.rel (%p584) target = $region60
        $region59: #{tpu_custom_call.1} parent=11 // pred_region
          %s588 = ssub.s32 16, 16
          %589 = vsyncadd [#allocation23], %s588
          %s591 = sshll.u32 [#allocation24], 4
          %s592 = int_to_ptr.vmem [resolvable:$true] %s591
          %594 = dma.hbm_to_vmem [thread:$0]  %s13, 16, %s592, [#allocation23]
        $region60: #{tpu_custom_call.1} parent=11 // pred_fallthru
          _
        // Predicated region
        $region61: #{tpu_custom_call.1} parent=11 // pred_check
          %p595 = pneg %p383
        $region62: #{tpu_custom_call.1} parent=11 // pred_check_branch
          %597 = sbr.rel (%p595) target = $region64
        $region63: #{tpu_custom_call.1} parent=11 // pred_region
          _
        $region64: #{tpu_custom_call.1} parent=11 // pred_fallthru
          _
        // Predicated region
        $region65: #{tpu_custom_call.1} parent=11 // pred_check
          %p598 = pneg %p404
        $region66: #{tpu_custom_call.1} parent=11 // pred_check_branch
          %600 = sbr.rel (%p598) target = $region68
        $region67: #{tpu_custom_call.1} parent=11 // pred_region
          _
        $region68: #{tpu_custom_call.1} parent=11 // pred_fallthru
          _
        // Predicated region
        $region69: #{tpu_custom_call.1} parent=11 // pred_check
          %p601 = pneg %p425
        $region70: #{tpu_custom_call.1} parent=11 // pred_check_branch
          %603 = sbr.rel (%p601) target = $region72
        $region71: #{tpu_custom_call.1} parent=11 // pred_region
          _
        $region72: #{tpu_custom_call.1} parent=11 // pred_fallthru
          _
        // Predicated region
        $region73: #{tpu_custom_call.1} parent=11 // pred_check
          %p604 = pneg %p446
        $region74: #{tpu_custom_call.1} parent=11 // pred_check_branch
          %606 = sbr.rel (%p604) target = $region76
        $region75: #{tpu_custom_call.1} parent=11 // pred_region
          _
        $region76: #{tpu_custom_call.1} parent=11 // pred_fallthru
          _
      $region12: #{tpu_custom_call.1} parent=5 // pred_fallthru
        _
      %p607 = scmp.lt.s32.totalorder %s36, 4
      // Predicated region
      $region77: #{tpu_custom_call.1} parent=5 // pred_check
        %p608 = pneg %p607
      $region78: #{tpu_custom_call.1} parent=5 // pred_check_branch
        %610 = sbr.rel (%p608) target = $region80
      $region79: #{tpu_custom_call.1} parent=5 // pred_region
        // Predicated region
        $region81: #{tpu_custom_call.1} parent=79 // pred_check
          %p611 = pneg %p112
        $region82: #{tpu_custom_call.1} parent=79 // pred_check_branch
          %613 = sbr.rel (%p611) target = $region84
        $region83: #{tpu_custom_call.1} parent=79 // pred_region
          %s614 = sand.u32 %s102, 1
          %s615 = scalar_lea.sflag [#allocation11], %s614
          %s616 = sand.u32 %s102, 1
          %s617 = smul.addr %s616, 8
          %s618 = scalar_lea.vmem [#allocation10], %s617
          %s620 = ssub.s32 128, 128
          %621 = vsyncadd %s615, %s620
          %s622 = smul.addr %s43, 2
          %s623 = sadd.s32 %s44, %s622
          %s624 = smul.addr %s623, 128
          %s625 = scalar_lea.hbm %s2, %s624
          %s627 = sshll.u32 %s618, 4
          %s628 = int_to_ptr.vmem [resolvable:$true] %s627
          %630 = dma.hbm_to_vmem [thread:$0]  %s625, 128, %s628, %s615
        $region84: #{tpu_custom_call.1} parent=79 // pred_fallthru
          _
        // Predicated region
        $region85: #{tpu_custom_call.1} parent=79 // pred_check
          %p631 = pneg %p146
        $region86: #{tpu_custom_call.1} parent=79 // pred_check_branch
          %633 = sbr.rel (%p631) target = $region88
        $region87: #{tpu_custom_call.1} parent=79 // pred_region
          %s634 = sadd.s32 %s44, 1
          %p635 = scmp.lt.s32.totalorder %s634, 1
          %s636 = scalar_select %p635, %s634, 1
          %p637 = scmp.lt.s32.totalorder %s43, 1
          %s638 = scalar_select %p637, %s43, 1
          %p639 = scmp.lt.s32.totalorder %s636, 1
          %s640 = scalar_select %p639, %s636, 1
          %s641 = smul.addr %s638, 2
          %s642 = sadd.s32 %s640, %s641
          %s643 = smul.addr %s642, 8
          %s644 = scalar_lea.vmem %s3, %s643
          %s645 = sadd.s32 %s44, 1
          %p646 = scmp.lt.s32.totalorder %s645, 1
          %s647 = scalar_select %p646, %s645, 1
        $region88: #{tpu_custom_call.1} parent=79 // pred_fallthru
          _
      $region80: #{tpu_custom_call.1} parent=5 // pred_fallthru
        _
      %p648 = scmp.le.s32.totalorder 1, %s36
      %p649 = scmp.lt.s32.totalorder %s36, 5
      %p650 = pnand %p648, %p649
      %p651 = pneg %p650
      // Predicated region
      $region89: #{tpu_custom_call.1} parent=5 // pred_check
        _
      $region90: #{tpu_custom_call.1} parent=5 // pred_check_branch
        %653 = sbr.rel (%p650) target = $region92
      $region91: #{tpu_custom_call.1} parent=5 // pred_region
        %s654 = ssub.s32 %s36, 1
        %s655 = sand.u32 %s105, 1
        %s656 = scalar_lea.sflag [#allocation11], %s655
        %s657 = sand.u32 %s105, 1
        %s658 = smul.addr %s657, 8
        %s659 = scalar_lea.vmem [#allocation10], %s658
        // Predicated region
        $region93: #{tpu_custom_call.1} parent=91 // pred_check
          %p660 = pneg %p118
        $region94: #{tpu_custom_call.1} parent=91 // pred_check_branch
          %662 = sbr.rel (%p660) target = $region96
        $region95: #{tpu_custom_call.1} parent=91 // pred_region
          %663 = dma.done %s656, 128
        $region96: #{tpu_custom_call.1} parent=91 // pred_fallthru
          _
        // Predicated region
        $region97: #{tpu_custom_call.1} parent=91 // pred_check
          %p664 = pneg %p173
        $region98: #{tpu_custom_call.1} parent=91 // pred_check_branch
          %666 = sbr.rel (%p664) target = $region100
        $region99: #{tpu_custom_call.1} parent=91 // pred_region
          %667 = dma.done [#allocation14], 128
        $region100: #{tpu_custom_call.1} parent=91 // pred_fallthru
          _
        // Predicated region
        $region101: #{tpu_custom_call.1} parent=91 // pred_check
          %p668 = pneg %p215
        $region102: #{tpu_custom_call.1} parent=91 // pred_check_branch
          %670 = sbr.rel (%p668) target = $region104
        $region103: #{tpu_custom_call.1} parent=91 // pred_region
          %671 = dma.done [#allocation14], 64
        $region104: #{tpu_custom_call.1} parent=91 // pred_fallthru
          _
        // Predicated region
        $region105: #{tpu_custom_call.1} parent=91 // pred_check
          %p672 = pneg %p236
        $region106: #{tpu_custom_call.1} parent=91 // pred_check_branch
          %674 = sbr.rel (%p672) target = $region108
        $region107: #{tpu_custom_call.1} parent=91 // pred_region
          %675 = dma.done [#allocation17], 16
        $region108: #{tpu_custom_call.1} parent=91 // pred_fallthru
          _
        // Predicated region
        $region109: #{tpu_custom_call.1} parent=91 // pred_check
          %p676 = pneg %p257
        $region110: #{tpu_custom_call.1} parent=91 // pred_check_branch
          %678 = sbr.rel (%p676) target = $region112
        $region111: #{tpu_custom_call.1} parent=91 // pred_region
          %679 = dma.done [#allocation17], 2048
        $region112: #{tpu_custom_call.1} parent=91 // pred_fallthru
          _
        // Predicated region
        $region113: #{tpu_custom_call.1} parent=91 // pred_check
          %p680 = pneg %p278
        $region114: #{tpu_custom_call.1} parent=91 // pred_check_branch
          %682 = sbr.rel (%p680) target = $region116
        $region115: #{tpu_custom_call.1} parent=91 // pred_region
          %683 = dma.done [#allocation20], 128
        $region116: #{tpu_custom_call.1} parent=91 // pred_fallthru
          _
        // Predicated region
        $region117: #{tpu_custom_call.1} parent=91 // pred_check
          %p684 = pneg %p320
        $region118: #{tpu_custom_call.1} parent=91 // pred_check_branch
          %686 = sbr.rel (%p684) target = $region120
        $region119: #{tpu_custom_call.1} parent=91 // pred_region
          %687 = dma.done [#allocation20], 16
        $region120: #{tpu_custom_call.1} parent=91 // pred_fallthru
          _
        // Predicated region
        $region121: #{tpu_custom_call.1} parent=91 // pred_check
          %p688 = pneg %p341
        $region122: #{tpu_custom_call.1} parent=91 // pred_check_branch
          %690 = sbr.rel (%p688) target = $region124
        $region123: #{tpu_custom_call.1} parent=91 // pred_region
          %691 = dma.done [#allocation23], 128
        $region124: #{tpu_custom_call.1} parent=91 // pred_fallthru
          _
        // Predicated region
        $region125: #{tpu_custom_call.1} parent=91 // pred_check
          %p692 = pneg %p362
        $region126: #{tpu_custom_call.1} parent=91 // pred_check_branch
          %694 = sbr.rel (%p692) target = $region128
        $region127: #{tpu_custom_call.1} parent=91 // pred_region
          %695 = dma.done [#allocation23], 16
        $region128: #{tpu_custom_call.1} parent=91 // pred_fallthru
          _
        %p696 = pneg %p69
        %p697 = pneg %p66
        %p698 = pneg %p90
        %p699 = pneg %p87
        %s700 = sand.u32 %s105, 1
        %s701 = scalar_lea.sflag [#allocation11], %s700
        %s702 = sand.u32 %s105, 1
        %s703 = smul.addr %s702, 8
        %s704 = scalar_lea.vmem [#allocation10], %s703
        %p705 = pneg %p118
        %p706 = pneg %p115
        %s707 = sadd.s32 %s46, 1
        %p708 = scmp.lt.s32.totalorder %s707, 1
        %s709 = scalar_select %p708, %s707, 1
        %p710 = scmp.lt.s32.totalorder %s45, 1
        %s711 = scalar_select %p710, %s45, 1
        %p712 = scmp.lt.s32.totalorder %s709, 1
        %s713 = scalar_select %p712, %s709, 1
        %s714 = smul.addr %s711, 2
        %s715 = sadd.s32 %s713, %s714
        %s716 = smul.addr %s715, 8
        %s717 = scalar_lea.vmem %s3, %s716
        %p718 = pneg %p152
        %p719 = pneg %p149
        %p720 = pneg %p173
        %p721 = pneg %p170
        %p722 = pneg %p194
        %p723 = pneg %p191
        %p724 = pneg %p215
        %p725 = pneg %p212
        %p726 = pneg %p236
        %p727 = pneg %p233
        %p728 = pneg %p257
        %p729 = pneg %p254
        %p730 = pneg %p278
        %p731 = pneg %p275
        %p732 = pneg %p299
        %p733 = pneg %p296
        %p734 = pneg %p320
        %p735 = pneg %p317
        %p736 = pneg %p341
        %p737 = pneg %p338
        %p738 = pneg %p362
        %p739 = pneg %p359
        %p740 = pneg %p383
        %p741 = pneg %p380
        %p742 = pneg %p404
        %p743 = pneg %p401
        %p744 = pneg %p425
        %p745 = pneg %p422
        %p746 = pneg %p446
        %p747 = pneg %p443
        %p748 = pneg %p474
        %p749 = pneg %p471
        %s750 = sand.u32 %s461, 1
        %s751 = scalar_lea.sflag [#allocation12], %s750
        %s752 = sand.u32 %s461, 1
        %s753 = smul.addr %s752, 8
        %s754 = scalar_lea.vmem [#allocation25], %s753
        %s755 = sadd.s32 %s46, 1
        %p756 = scmp.lt.s32.totalorder %s755, 1
        %s757 = scalar_select %p756, %s755, 1
        %p758 = scmp.lt.s32.totalorder %s45, 1
        %s759 = scalar_select %p758, %s45, 1
        %p760 = scmp.lt.s32.totalorder %s757, 1
        %s761 = scalar_select %p760, %s757, 1
        %s762 = smul.addr %s759, 2
        %s763 = sadd.s32 %s761, %s762
        %s764 = smul.addr %s763, 8
        %s765 = scalar_lea.vmem %s3, %s764
        %s766 = sadd.s32 %s46, 1
        %p767 = scmp.lt.s32.totalorder %s766, 1
        %s768 = scalar_select %p767, %s766, 1
        %s770 = sld [smem:[#allocation8]]
        %s771 = sld [smem:[#allocation9]]
        %v772 = vld [vmem:[%s659] sm:$0xff]
        %v773 = vmul.f32 %v772, %v772
        %vm774 = vcmask 130048
        %v775 = vsel %vm774, %v773, 0.0
        %776 = vadd.xlane.f32.xlu0 %v775
        %v777 = vpop.xlane.xlu0 %776
        %v778 = vrcp.pop 16.0
        %v779 = vmul.f32 %v777, %v778
        %v780 = vrsqrt.pop %v779
        %v781 = vmul.f32 %v779, %v780
        %vm782 = vcmp.eq.f32.partialorder %v779, inf
        %v783 = vsel %vm782, %v779, %v781
        %vm784 = vcmp.eq.f32.partialorder %v779, 0.0
        %v785 = vand.u32 %v779, 2147483648
        %v786 = vsel %vm784, %v785, %v783
        %v787 = vadd.f32 %v786, 1e-05
        %v788 = vrcp.pop %v787
        %v789 = vstv %s770
        %v790 = vmul.f32 %v789, %v788
        %v791 = vmul.f32 %v772, %v790
        %v792 = vpack.c.bf16 %v791, %v791
        %v793 = vld [vmem:[#allocation13] sm:$0xf]
        %v794 = vld [vmem:[#allocation13 + $0x4] sm:$0xf]
        %v795 = vld [vmem:[%s5] sm:$0x1]
        %v797 = vlaneseq
        %v798 = vshrl.u32 %v797, 7
        %v799 = vsub.s32 0, %v798
        %v800 = vrot.slane %v795, %v799
        %v804 = vunpack.c.l.b16 %v793
        %v805 = vunpack.c.l.b16 %v794
        %v806 = vpack.c.b16 %v805, %v804
        %v809 = vsel %vm774, %v792, 0
        %811 = vmatprep.subr.bf16.mxu0 0
        %812 = vmatpush1.bf16.msra.mxu0 %v806
        %813 = vmatprep.subr.bf16.mxu0 0
        %814 = vmatpush1.bf16.msra.mxu0 0
        %815 = vmatprep.subr.bf16.mxu0 0
        %816 = vmatpush1.bf16.msra.mxu0 0
        %817 = vmatprep.subr.bf16.mxu0 0
        %818 = vmatpush1.bf16.msra.mxu0 0
        %819 = vmatprep.subr.bf16.mxu0 0
        %820 = vmatpush1.bf16.msra.mxu0 0
        %821 = vmatprep.subr.bf16.mxu0 0
        %822 = vmatpush1.bf16.msra.mxu0 0
        %823 = vmatprep.subr.bf16.mxu0 0
        %824 = vmatpush1.bf16.msra.mxu0 0
        %825 = vmatprep.subr.bf16.mxu0 0
        %826 = vmatpush1.bf16.msra.mxu0 0
        %827 = vmatprep.subr.bf16.mxu0 0
        %828 = vmatpush1.bf16.msra.mxu0 0
        %829 = vmatprep.subr.bf16.mxu0 0
        %830 = vmatpush1.bf16.msra.mxu0 0
        %831 = vmatprep.subr.bf16.mxu0 0
        %832 = vmatpush1.bf16.msra.mxu0 0
        %833 = vmatprep.subr.bf16.mxu0 0
        %834 = vmatpush1.bf16.msra.mxu0 0
        %835 = vmatprep.subr.bf16.mxu0 0
        %836 = vmatpush1.bf16.msra.mxu0 0
        %837 = vmatprep.subr.bf16.mxu0 0
        %838 = vmatpush1.bf16.msra.mxu0 0
        %839 = vmatprep.subr.bf16.mxu0 0
        %840 = vmatpush1.bf16.msra.mxu0 0
        %841 = vmatprep.subr.bf16.mxu0 0
        %842 = vmatpush1.bf16.msra.mxu0 0
        %843 = vmatprep.mubr.bf16.mxu0 0
        %844 = vmatmul.mubr.bf16.gmra.mrb[0].mxu0 %v809
        %v845 = vpop.f32.mrb[0].mxu0
        %v846 = vadd.f32 %v800, %v845
        %v847 = vpop.f32.mrb[0].mxu0
        %v848 = vpop.f32.mrb[0].mxu0
        %v849 = vpop.f32.mrb[0].mxu0
        %850 = vdwg.mxu0
        %p851 = scmp.gt.s32.totalorder %s46, 0
        %v852 = vld [vmem:[#allocation7] sm:$0xff]
        %s853 = scalar_select %p851, 1, 0
        %v854 = vstv %s853
        %vm855 = vcmp.eq.s32.totalorder %v854, 1
        %v856 = vsel %vm855, %v852, 0.0
        %v857 = vld [vmem:[%s765] sm:$0xff]
        %v858 = vmul.f32 %v857, %v857
        %v859 = vsel %vm774, %v858, 0.0
        %860 = vadd.xlane.f32.xlu0 %v859
        %v861 = vpop.xlane.xlu0 %860
        %v862 = vmul.f32 %v861, %v778
        %v863 = vrsqrt.pop %v862
        %v864 = vmul.f32 %v862, %v863
        %vm865 = vcmp.eq.f32.partialorder %v862, inf
        %v866 = vsel %vm865, %v862, %v864
        %vm867 = vcmp.eq.f32.partialorder %v862, 0.0
        %v868 = vand.u32 %v862, 2147483648
        %v869 = vsel %vm867, %v868, %v866
        %v870 = vadd.f32 %v869, 1e-05
        %v871 = vrcp.pop %v870
        %v872 = vmul.f32 %v789, %v871
        %v873 = vmul.f32 %v857, %v872
        %v874 = vpack.c.bf16 %v873, %v873
        %v876 = vsel %vm774, %v874, 0
        %878 = vmatprep.subr.bf16.mxu0 0
        %879 = vmatpush1.bf16.msra.mxu0 %v806
        %880 = vmatprep.subr.bf16.mxu0 0
        %881 = vmatpush1.bf16.msra.mxu0 0
        %882 = vmatprep.subr.bf16.mxu0 0
        %883 = vmatpush1.bf16.msra.mxu0 0
        %884 = vmatprep.subr.bf16.mxu0 0
        %885 = vmatpush1.bf16.msra.mxu0 0
        %886 = vmatprep.subr.bf16.mxu0 0
        %887 = vmatpush1.bf16.msra.mxu0 0
        %888 = vmatprep.subr.bf16.mxu0 0
        %889 = vmatpush1.bf16.msra.mxu0 0
        %890 = vmatprep.subr.bf16.mxu0 0
        %891 = vmatpush1.bf16.msra.mxu0 0
        %892 = vmatprep.subr.bf16.mxu0 0
        %893 = vmatpush1.bf16.msra.mxu0 0
        %894 = vmatprep.subr.bf16.mxu0 0
        %895 = vmatpush1.bf16.msra.mxu0 0
        %896 = vmatprep.subr.bf16.mxu0 0
        %897 = vmatpush1.bf16.msra.mxu0 0
        %898 = vmatprep.subr.bf16.mxu0 0
        %899 = vmatpush1.bf16.msra.mxu0 0
        %900 = vmatprep.subr.bf16.mxu0 0
        %901 = vmatpush1.bf16.msra.mxu0 0
        %902 = vmatprep.subr.bf16.mxu0 0
        %903 = vmatpush1.bf16.msra.mxu0 0
        %904 = vmatprep.subr.bf16.mxu0 0
        %905 = vmatpush1.bf16.msra.mxu0 0
        %906 = vmatprep.subr.bf16.mxu0 0
        %907 = vmatpush1.bf16.msra.mxu0 0
        %908 = vmatprep.subr.bf16.mxu0 0
        %909 = vmatpush1.bf16.msra.mxu0 0
        %910 = vmatprep.mubr.bf16.mxu0 0
        %911 = vmatmul.mubr.bf16.gmra.mrb[0].mxu0 %v876
        %v912 = vpop.f32.mrb[0].mxu0
        %v913 = vadd.f32 %v800, %v912
        %v914 = vpop.f32.mrb[0].mxu0
        %v915 = vpop.f32.mrb[0].mxu0
        %v916 = vpop.f32.mrb[0].mxu0
        %917 = vdwg.mxu0
        %p918 = scmp.lt.s32.totalorder %s46, 1
        %s919 = scalar_select %p918, 1, 0
        %v920 = vstv %s919
        %vm921 = vcmp.eq.s32.totalorder %v920, 1
        %v922 = vsel %vm921, %v913, 0.0
        %v924 = vrot.slane %v856, 7
        %v927 = vrot.slane %v846, 7
        %v930 = vrot.slane %v922, 7
        %vm932 = vcmask 1040384
        %v933 = vsel %vm932, %v924, %v927
        %v934 = vsel %vm932, %v927, %v930
        %vm935 = vcmask 261120
        %936 = vst.msk [vmem:[#allocation7] sm:$0xff] %vm935, %v846
        %v937 = vld [vmem:[#allocation15] sm:$0x7]
        %v938 = vld [vmem:[#allocation16] sm:$0x1]
        %v939 = vlaneseq
        %v940 = vshrl.u32 %v939, 7
        %v941 = vsub.s32 0, %v940
        %v942 = vrot.slane %v937, %v941
        %v943 = vmul.f32 %v942, %v933
        %v945 = vlaneseq
        %v946 = vshrl.u32 %v945, 7
        %v947 = vsub.s32 0, %v946
        %v948 = vrot.slane %v938, %v947
        %v950 = vadd.f32 %v948, %v943
        %v951 = vlaneseq
        %v952 = vshrl.u32 %v951, 7
        %v953 = vsub.s32 1, %v952
        %v954 = vrot.slane %v937, %v953
        %v955 = vmul.f32 %v954, %v933
        %v956 = vmul.f32 %v954, %v934
        %vm959 = vcmask 1046528
        %v960 = vrot.slane %v955, 1
        %v961 = vrot.slane %v956, 1
        %v962 = vsel %vm959, %v960, %v961
        %v964 = vadd.f32 %v950, %v962
        %v965 = vlaneseq
        %v966 = vshrl.u32 %v965, 7
        %v967 = vsub.s32 2, %v966
        %v968 = vrot.slane %v937, %v967
        %v969 = vmul.f32 %v968, %v933
        %v970 = vmul.f32 %v968, %v934
        %vm973 = vcmask 1045504
        %v974 = vrot.slane %v969, 2
        %v975 = vrot.slane %v970, 2
        %v976 = vsel %vm973, %v974, %v975
        %v978 = vadd.f32 %v964, %v976
        %v979 = vxor.u32 %v978, 2147483648
        %v980 = vmul.f32 %v979, 1.442695
        %v981 = vpow.pop %v980
        %v982 = vadd.f32 %v981, 1.0
        %v983 = vrcp.pop %v982
        %v984 = vmul.f32 1.0, %v983
        %v985 = vpack.c.bf16 %v984, %v984
        %v986 = vld [vmem:[%s10] sm:$0xf]
        %v987 = vld [vmem:[%s10 + $0x4] sm:$0xf]
        %v988 = vld [vmem:[%s10 + $0x8] sm:$0xf]
        %v989 = vld [vmem:[%s10 + $0xc] sm:$0xf]
        %v990 = vld [vmem:[#allocation21] sm:$0x1]
        %v992 = vlaneseq
        %v993 = vshrl.u32 %v992, 7
        %v994 = vsub.s32 0, %v993
        %v995 = vrot.slane %v990, %v994
        %v1001 = vunpack.c.l.b16 %v986
        %v1002 = vunpack.c.l.b16 %v987
        %v1003 = vunpack.c.l.b16 %v988
        %v1004 = vunpack.c.l.b16 %v989
        %v1005 = vpack.c.b16 %v1002, %v1001
        %v1006 = vpack.c.b16 %v1004, %v1003
        %v1010 = vsel %vm935, %v985, 0
        %1012 = vmatprep.subr.bf16.mxu0 0
        %1013 = vmatpush1.bf16.msra.mxu0 %v1005
        %1014 = vmatprep.subr.bf16.mxu0 0
        %1015 = vmatpush1.bf16.msra.mxu0 %v1006
        %1016 = vmatprep.subr.bf16.mxu0 0
        %1017 = vmatpush1.bf16.msra.mxu0 0
        %1018 = vmatprep.subr.bf16.mxu0 0
        %1019 = vmatpush1.bf16.msra.mxu0 0
        %1020 = vmatprep.subr.bf16.mxu0 0
        %1021 = vmatpush1.bf16.msra.mxu0 0
        %1022 = vmatprep.subr.bf16.mxu0 0
        %1023 = vmatpush1.bf16.msra.mxu0 0
        %1024 = vmatprep.subr.bf16.mxu0 0
        %1025 = vmatpush1.bf16.msra.mxu0 0
        %1026 = vmatprep.subr.bf16.mxu0 0
        %1027 = vmatpush1.bf16.msra.mxu0 0
        %1028 = vmatprep.subr.bf16.mxu0 0
        %1029 = vmatpush1.bf16.msra.mxu0 0
        %1030 = vmatprep.subr.bf16.mxu0 0
        %1031 = vmatpush1.bf16.msra.mxu0 0
        %1032 = vmatprep.subr.bf16.mxu0 0
        %1033 = vmatpush1.bf16.msra.mxu0 0
        %1034 = vmatprep.subr.bf16.mxu0 0
        %1035 = vmatpush1.bf16.msra.mxu0 0
        %1036 = vmatprep.subr.bf16.mxu0 0
        %1037 = vmatpush1.bf16.msra.mxu0 0
        %1038 = vmatprep.subr.bf16.mxu0 0
        %1039 = vmatpush1.bf16.msra.mxu0 0
        %1040 = vmatprep.subr.bf16.mxu0 0
        %1041 = vmatpush1.bf16.msra.mxu0 0
        %1042 = vmatprep.subr.bf16.mxu0 0
        %1043 = vmatpush1.bf16.msra.mxu0 0
        %1044 = vmatprep.mubr.bf16.mxu0 0
        %1045 = vmatmul.mubr.bf16.gmra.mrb[0].mxu0 %v1010
        %v1046 = vpop.f32.mrb[0].mxu0
        %v1047 = vadd.f32 %v995, %v1046
        %v1048 = vpop.f32.mrb[0].mxu0
        %v1049 = vpop.f32.mrb[0].mxu0
        %v1050 = vpop.f32.mrb[0].mxu0
        %1051 = vdwg.mxu0
        %1052 = vst.msk [vmem:[#allocation4] sm:$0xff] %vm935, %v1047
        %v1053 = vmul.f32 %v1047, %v984
        %v1054 = vld [vmem:[#allocation18] sm:$0xf]
        %v1055 = vld [vmem:[#allocation18 + $0x4] sm:$0xf]
        %v1056 = vld [vmem:[#allocation18 + $0x8] sm:$0xf]
        %v1057 = vld [vmem:[#allocation18 + $0xc] sm:$0xf]
        %v1058 = vld [vmem:[#allocation19] sm:$0x1]
        %v1060 = vlaneseq
        %v1061 = vshrl.u32 %v1060, 7
        %v1062 = vsub.s32 0, %v1061
        %v1063 = vrot.slane %v1058, %v1062
        %v1069 = vunpack.c.l.b16 %v1054
        %v1070 = vunpack.c.l.b16 %v1055
        %v1071 = vunpack.c.l.b16 %v1056
        %v1072 = vunpack.c.l.b16 %v1057
        %v1073 = vpack.c.b16 %v1070, %v1069
        %v1074 = vpack.c.b16 %v1072, %v1071
        %1077 = vmatprep.subr.bf16.mxu0 0
        %1078 = vmatpush1.bf16.msra.mxu0 %v1073
        %1079 = vmatprep.subr.bf16.mxu0 0
        %1080 = vmatpush1.bf16.msra.mxu0 %v1074
        %1081 = vmatprep.subr.bf16.mxu0 0
        %1082 = vmatpush1.bf16.msra.mxu0 0
        %1083 = vmatprep.subr.bf16.mxu0 0
        %1084 = vmatpush1.bf16.msra.mxu0 0
        %1085 = vmatprep.subr.bf16.mxu0 0
        %1086 = vmatpush1.bf16.msra.mxu0 0
        %1087 = vmatprep.subr.bf16.mxu0 0
        %1088 = vmatpush1.bf16.msra.mxu0 0
        %1089 = vmatprep.subr.bf16.mxu0 0
        %1090 = vmatpush1.bf16.msra.mxu0 0
        %1091 = vmatprep.subr.bf16.mxu0 0
        %1092 = vmatpush1.bf16.msra.mxu0 0
        %1093 = vmatprep.subr.bf16.mxu0 0
        %1094 = vmatpush1.bf16.msra.mxu0 0
        %1095 = vmatprep.subr.bf16.mxu0 0
        %1096 = vmatpush1.bf16.msra.mxu0 0
        %1097 = vmatprep.subr.bf16.mxu0 0
        %1098 = vmatpush1.bf16.msra.mxu0 0
        %1099 = vmatprep.subr.bf16.mxu0 0
        %1100 = vmatpush1.bf16.msra.mxu0 0
        %1101 = vmatprep.subr.bf16.mxu0 0
        %1102 = vmatpush1.bf16.msra.mxu0 0
        %1103 = vmatprep.subr.bf16.mxu0 0
        %1104 = vmatpush1.bf16.msra.mxu0 0
        %1105 = vmatprep.subr.bf16.mxu0 0
        %1106 = vmatpush1.bf16.msra.mxu0 0
        %1107 = vmatprep.subr.bf16.mxu0 0
        %1108 = vmatpush1.bf16.msra.mxu0 0
        %1109 = vmatprep.mubr.bf16.mxu0 0
        %1110 = vmatmul.mubr.bf16.gmra.mrb[0].mxu0 %v1010
        %v1111 = vpop.f32.mrb[0].mxu0
        %v1112 = vadd.f32 %v1063, %v1111
        %v1113 = vpop.f32.mrb[0].mxu0
        %v1114 = vpop.f32.mrb[0].mxu0
        %v1115 = vpop.f32.mrb[0].mxu0
        %1116 = vdwg.mxu0
        %v1117 = vmul.f32 %v1053, %v1112
        %1118 = vst.msk [vmem:[#allocation2] sm:$0xff] %vm935, %v1117
        %1120 = vrot.lane.b32.xlu0 %v1112, 96
        %v1121 = vpop.permute.xlu0 %1120
        %1123 = vst.msk [vmem:[#allocation3] sm:$0xff] %vm935, %v1121
        %s1124 = scalar_lea.vmem [#allocation18], 16
        %v1125 = vld [vmem:[%s1124] sm:$0xf]
        %v1126 = vld [vmem:[%s1124 + $0x4] sm:$0xf]
        %v1127 = vld [vmem:[%s1124 + $0x8] sm:$0xf]
        %v1128 = vld [vmem:[%s1124 + $0xc] sm:$0xf]
        %s1129 = scalar_lea.vmem [#allocation19], 1
        %v1130 = vld [vmem:[%s1129] sm:$0x1]
        %v1132 = vlaneseq
        %v1133 = vshrl.u32 %v1132, 7
        %v1134 = vsub.s32 0, %v1133
        %v1135 = vrot.slane %v1130, %v1134
        %v1141 = vunpack.c.l.b16 %v1125
        %v1142 = vunpack.c.l.b16 %v1126
        %v1143 = vunpack.c.l.b16 %v1127
        %v1144 = vunpack.c.l.b16 %v1128
        %v1145 = vpack.c.b16 %v1142, %v1141
        %v1146 = vpack.c.b16 %v1144, %v1143
        %1149 = vmatprep.subr.bf16.mxu0 0
        %1150 = vmatpush1.bf16.msra.mxu0 %v1145
        %1151 = vmatprep.subr.bf16.mxu0 0
        %1152 = vmatpush1.bf16.msra.mxu0 %v1146
        %1153 = vmatprep.subr.bf16.mxu0 0
        %1154 = vmatpush1.bf16.msra.mxu0 0
        %1155 = vmatprep.subr.bf16.mxu0 0
        %1156 = vmatpush1.bf16.msra.mxu0 0
        %1157 = vmatprep.subr.bf16.mxu0 0
        %1158 = vmatpush1.bf16.msra.mxu0 0
        %1159 = vmatprep.subr.bf16.mxu0 0
        %1160 = vmatpush1.bf16.msra.mxu0 0
        %1161 = vmatprep.subr.bf16.mxu0 0
        %1162 = vmatpush1.bf16.msra.mxu0 0
        %1163 = vmatprep.subr.bf16.mxu0 0
        %1164 = vmatpush1.bf16.msra.mxu0 0
        %1165 = vmatprep.subr.bf16.mxu0 0
        %1166 = vmatpush1.bf16.msra.mxu0 0
        %1167 = vmatprep.subr.bf16.mxu0 0
        %1168 = vmatpush1.bf16.msra.mxu0 0
        %1169 = vmatprep.subr.bf16.mxu0 0
        %1170 = vmatpush1.bf16.msra.mxu0 0
        %1171 = vmatprep.subr.bf16.mxu0 0
        %1172 = vmatpush1.bf16.msra.mxu0 0
        %1173 = vmatprep.subr.bf16.mxu0 0
        %1174 = vmatpush1.bf16.msra.mxu0 0
        %1175 = vmatprep.subr.bf16.mxu0 0
        %1176 = vmatpush1.bf16.msra.mxu0 0
        %1177 = vmatprep.subr.bf16.mxu0 0
        %1178 = vmatpush1.bf16.msra.mxu0 0
        %1179 = vmatprep.subr.bf16.mxu0 0
        %1180 = vmatpush1.bf16.msra.mxu0 0
        %1181 = vmatprep.mubr.bf16.mxu0 0
        %1182 = vmatmul.mubr.bf16.gmra.mrb[0].mxu0 %v1010
        %v1183 = vpop.f32.mrb[0].mxu0
        %v1184 = vadd.f32 %v1135, %v1183
        %v1185 = vpop.f32.mrb[0].mxu0
        %v1186 = vpop.f32.mrb[0].mxu0
        %v1187 = vpop.f32.mrb[0].mxu0
        %1188 = vdwg.mxu0
        %v1189 = vmul.f32 %v1053, %v1184
        %1190 = vst.msk [vmem:[#allocation2 + $0x8] sm:$0xff] %vm935, %v1189
        %1192 = vrot.lane.b32.xlu0 %v1184, 96
        %v1193 = vpop.permute.xlu0 %1192
        %1195 = vst.msk [vmem:[#allocation3 + $0x8] sm:$0xff] %vm935, %v1193
        %s1196 = scalar_lea.vmem [#allocation18], 32
        %v1197 = vld [vmem:[%s1196] sm:$0xf]
        %v1198 = vld [vmem:[%s1196 + $0x4] sm:$0xf]
        %v1199 = vld [vmem:[%s1196 + $0x8] sm:$0xf]
        %v1200 = vld [vmem:[%s1196 + $0xc] sm:$0xf]
        %s1201 = scalar_lea.vmem [#allocation19], 2
        %v1202 = vld [vmem:[%s1201] sm:$0x1]
        %v1204 = vlaneseq
        %v1205 = vshrl.u32 %v1204, 7
        %v1206 = vsub.s32 0, %v1205
        %v1207 = vrot.slane %v1202, %v1206
        %v1213 = vunpack.c.l.b16 %v1197
        %v1214 = vunpack.c.l.b16 %v1198
        %v1215 = vunpack.c.l.b16 %v1199
        %v1216 = vunpack.c.l.b16 %v1200
        %v1217 = vpack.c.b16 %v1214, %v1213
        %v1218 = vpack.c.b16 %v1216, %v1215
        %1221 = vmatprep.subr.bf16.mxu0 0
        %1222 = vmatpush1.bf16.msra.mxu0 %v1217
        %1223 = vmatprep.subr.bf16.mxu0 0
        %1224 = vmatpush1.bf16.msra.mxu0 %v1218
        %1225 = vmatprep.subr.bf16.mxu0 0
        %1226 = vmatpush1.bf16.msra.mxu0 0
        %1227 = vmatprep.subr.bf16.mxu0 0
        %1228 = vmatpush1.bf16.msra.mxu0 0
        %1229 = vmatprep.subr.bf16.mxu0 0
        %1230 = vmatpush1.bf16.msra.mxu0 0
        %1231 = vmatprep.subr.bf16.mxu0 0
        %1232 = vmatpush1.bf16.msra.mxu0 0
        %1233 = vmatprep.subr.bf16.mxu0 0
        %1234 = vmatpush1.bf16.msra.mxu0 0
        %1235 = vmatprep.subr.bf16.mxu0 0
        %1236 = vmatpush1.bf16.msra.mxu0 0
        %1237 = vmatprep.subr.bf16.mxu0 0
        %1238 = vmatpush1.bf16.msra.mxu0 0
        %1239 = vmatprep.subr.bf16.mxu0 0
        %1240 = vmatpush1.bf16.msra.mxu0 0
        %1241 = vmatprep.subr.bf16.mxu0 0
        %1242 = vmatpush1.bf16.msra.mxu0 0
        %1243 = vmatprep.subr.bf16.mxu0 0
        %1244 = vmatpush1.bf16.msra.mxu0 0
        %1245 = vmatprep.subr.bf16.mxu0 0
        %1246 = vmatpush1.bf16.msra.mxu0 0
        %1247 = vmatprep.subr.bf16.mxu0 0
        %1248 = vmatpush1.bf16.msra.mxu0 0
        %1249 = vmatprep.subr.bf16.mxu0 0
        %1250 = vmatpush1.bf16.msra.mxu0 0
        %1251 = vmatprep.subr.bf16.mxu0 0
        %1252 = vmatpush1.bf16.msra.mxu0 0
        %1253 = vmatprep.mubr.bf16.mxu0 0
        %1254 = vmatmul.mubr.bf16.gmra.mrb[0].mxu0 %v1010
        %v1255 = vpop.f32.mrb[0].mxu0
        %v1256 = vadd.f32 %v1207, %v1255
        %v1257 = vpop.f32.mrb[0].mxu0
        %v1258 = vpop.f32.mrb[0].mxu0
        %v1259 = vpop.f32.mrb[0].mxu0
        %1260 = vdwg.mxu0
        %v1261 = vmul.f32 %v1053, %v1256
        %1262 = vst.msk [vmem:[#allocation2 + $0x10] sm:$0xff] %vm935, %v1261
        %1264 = vrot.lane.b32.xlu0 %v1256, 96
        %v1265 = vpop.permute.xlu0 %1264
        %1267 = vst.msk [vmem:[#allocation3 + $0x10] sm:$0xff] %vm935, %v1265
        %s1268 = scalar_lea.vmem [#allocation18], 48
        %v1269 = vld [vmem:[%s1268] sm:$0xf]
        %v1270 = vld [vmem:[%s1268 + $0x4] sm:$0xf]
        %v1271 = vld [vmem:[%s1268 + $0x8] sm:$0xf]
        %v1272 = vld [vmem:[%s1268 + $0xc] sm:$0xf]
        %s1273 = scalar_lea.vmem [#allocation19], 3
        %v1274 = vld [vmem:[%s1273] sm:$0x1]
        %v1276 = vlaneseq
        %v1277 = vshrl.u32 %v1276, 7
        %v1278 = vsub.s32 0, %v1277
        %v1279 = vrot.slane %v1274, %v1278
        %v1285 = vunpack.c.l.b16 %v1269
        %v1286 = vunpack.c.l.b16 %v1270
        %v1287 = vunpack.c.l.b16 %v1271
        %v1288 = vunpack.c.l.b16 %v1272
        %v1289 = vpack.c.b16 %v1286, %v1285
        %v1290 = vpack.c.b16 %v1288, %v1287
        %1293 = vmatprep.subr.bf16.mxu0 0
        %1294 = vmatpush1.bf16.msra.mxu0 %v1289
        %1295 = vmatprep.subr.bf16.mxu0 0
        %1296 = vmatpush1.bf16.msra.mxu0 %v1290
        %1297 = vmatprep.subr.bf16.mxu0 0
        %1298 = vmatpush1.bf16.msra.mxu0 0
        %1299 = vmatprep.subr.bf16.mxu0 0
        %1300 = vmatpush1.bf16.msra.mxu0 0
        %1301 = vmatprep.subr.bf16.mxu0 0
        %1302 = vmatpush1.bf16.msra.mxu0 0
        %1303 = vmatprep.subr.bf16.mxu0 0
        %1304 = vmatpush1.bf16.msra.mxu0 0
        %1305 = vmatprep.subr.bf16.mxu0 0
        %1306 = vmatpush1.bf16.msra.mxu0 0
        %1307 = vmatprep.subr.bf16.mxu0 0
        %1308 = vmatpush1.bf16.msra.mxu0 0
        %1309 = vmatprep.subr.bf16.mxu0 0
        %1310 = vmatpush1.bf16.msra.mxu0 0
        %1311 = vmatprep.subr.bf16.mxu0 0
        %1312 = vmatpush1.bf16.msra.mxu0 0
        %1313 = vmatprep.subr.bf16.mxu0 0
        %1314 = vmatpush1.bf16.msra.mxu0 0
        %1315 = vmatprep.subr.bf16.mxu0 0
        %1316 = vmatpush1.bf16.msra.mxu0 0
        %1317 = vmatprep.subr.bf16.mxu0 0
        %1318 = vmatpush1.bf16.msra.mxu0 0
        %1319 = vmatprep.subr.bf16.mxu0 0
        %1320 = vmatpush1.bf16.msra.mxu0 0
        %1321 = vmatprep.subr.bf16.mxu0 0
        %1322 = vmatpush1.bf16.msra.mxu0 0
        %1323 = vmatprep.subr.bf16.mxu0 0
        %1324 = vmatpush1.bf16.msra.mxu0 0
        %1325 = vmatprep.mubr.bf16.mxu0 0
        %1326 = vmatmul.mubr.bf16.gmra.mrb[0].mxu0 %v1010
        %v1327 = vpop.f32.mrb[0].mxu0
        %v1328 = vadd.f32 %v1279, %v1327
        %v1329 = vpop.f32.mrb[0].mxu0
        %v1330 = vpop.f32.mrb[0].mxu0
        %v1331 = vpop.f32.mrb[0].mxu0
        %1332 = vdwg.mxu0
        %v1333 = vmul.f32 %v1053, %v1328
        %1334 = vst.msk [vmem:[#allocation2 + $0x18] sm:$0xff] %vm935, %v1333
        %1336 = vrot.lane.b32.xlu0 %v1328, 96
        %v1337 = vpop.permute.xlu0 %1336
        %1339 = vst.msk [vmem:[#allocation3 + $0x18] sm:$0xff] %vm935, %v1337
        %s1340 = scalar_lea.vmem [#allocation18], 64
        %v1341 = vld [vmem:[%s1340] sm:$0xf]
        %v1342 = vld [vmem:[%s1340 + $0x4] sm:$0xf]
        %v1343 = vld [vmem:[%s1340 + $0x8] sm:$0xf]
        %v1344 = vld [vmem:[%s1340 + $0xc] sm:$0xf]
        %s1345 = scalar_lea.vmem [#allocation19], 4
        %v1346 = vld [vmem:[%s1345] sm:$0x1]
        %v1348 = vlaneseq
        %v1349 = vshrl.u32 %v1348, 7
        %v1350 = vsub.s32 0, %v1349
        %v1351 = vrot.slane %v1346, %v1350
        %v1357 = vunpack.c.l.b16 %v1341
        %v1358 = vunpack.c.l.b16 %v1342
        %v1359 = vunpack.c.l.b16 %v1343
        %v1360 = vunpack.c.l.b16 %v1344
        %v1361 = vpack.c.b16 %v1358, %v1357
        %v1362 = vpack.c.b16 %v1360, %v1359
        %1365 = vmatprep.subr.bf16.mxu0 0
        %1366 = vmatpush1.bf16.msra.mxu0 %v1361
        %1367 = vmatprep.subr.bf16.mxu0 0
        %1368 = vmatpush1.bf16.msra.mxu0 %v1362
        %1369 = vmatprep.subr.bf16.mxu0 0
        %1370 = vmatpush1.bf16.msra.mxu0 0
        %1371 = vmatprep.subr.bf16.mxu0 0
        %1372 = vmatpush1.bf16.msra.mxu0 0
        %1373 = vmatprep.subr.bf16.mxu0 0
        %1374 = vmatpush1.bf16.msra.mxu0 0
        %1375 = vmatprep.subr.bf16.mxu0 0
        %1376 = vmatpush1.bf16.msra.mxu0 0
        %1377 = vmatprep.subr.bf16.mxu0 0
        %1378 = vmatpush1.bf16.msra.mxu0 0
        %1379 = vmatprep.subr.bf16.mxu0 0
        %1380 = vmatpush1.bf16.msra.mxu0 0
        %1381 = vmatprep.subr.bf16.mxu0 0
        %1382 = vmatpush1.bf16.msra.mxu0 0
        %1383 = vmatprep.subr.bf16.mxu0 0
        %1384 = vmatpush1.bf16.msra.mxu0 0
        %1385 = vmatprep.subr.bf16.mxu0 0
        %1386 = vmatpush1.bf16.msra.mxu0 0
        %1387 = vmatprep.subr.bf16.mxu0 0
        %1388 = vmatpush1.bf16.msra.mxu0 0
        %1389 = vmatprep.subr.bf16.mxu0 0
        %1390 = vmatpush1.bf16.msra.mxu0 0
        %1391 = vmatprep.subr.bf16.mxu0 0
        %1392 = vmatpush1.bf16.msra.mxu0 0
        %1393 = vmatprep.subr.bf16.mxu0 0
        %1394 = vmatpush1.bf16.msra.mxu0 0
        %1395 = vmatprep.subr.bf16.mxu0 0
        %1396 = vmatpush1.bf16.msra.mxu0 0
        %1397 = vmatprep.mubr.bf16.mxu0 0
        %1398 = vmatmul.mubr.bf16.gmra.mrb[0].mxu0 %v1010
        %v1399 = vpop.f32.mrb[0].mxu0
        %v1400 = vadd.f32 %v1351, %v1399
        %v1401 = vpop.f32.mrb[0].mxu0
        %v1402 = vpop.f32.mrb[0].mxu0
        %v1403 = vpop.f32.mrb[0].mxu0
        %1404 = vdwg.mxu0
        %v1405 = vmul.f32 %v1053, %v1400
        %1406 = vst.msk [vmem:[#allocation2 + $0x20] sm:$0xff] %vm935, %v1405
        %1408 = vrot.lane.b32.xlu0 %v1400, 96
        %v1409 = vpop.permute.xlu0 %1408
        %1411 = vst.msk [vmem:[#allocation3 + $0x20] sm:$0xff] %vm935, %v1409
        %s1412 = scalar_lea.vmem [#allocation18], 80
        %v1413 = vld [vmem:[%s1412] sm:$0xf]
        %v1414 = vld [vmem:[%s1412 + $0x4] sm:$0xf]
        %v1415 = vld [vmem:[%s1412 + $0x8] sm:$0xf]
        %v1416 = vld [vmem:[%s1412 + $0xc] sm:$0xf]
        %s1417 = scalar_lea.vmem [#allocation19], 5
        %v1418 = vld [vmem:[%s1417] sm:$0x1]
        %v1420 = vlaneseq
        %v1421 = vshrl.u32 %v1420, 7
        %v1422 = vsub.s32 0, %v1421
        %v1423 = vrot.slane %v1418, %v1422
        %v1429 = vunpack.c.l.b16 %v1413
        %v1430 = vunpack.c.l.b16 %v1414
        %v1431 = vunpack.c.l.b16 %v1415
        %v1432 = vunpack.c.l.b16 %v1416
        %v1433 = vpack.c.b16 %v1430, %v1429
        %v1434 = vpack.c.b16 %v1432, %v1431
        %1437 = vmatprep.subr.bf16.mxu0 0
        %1438 = vmatpush1.bf16.msra.mxu0 %v1433
        %1439 = vmatprep.subr.bf16.mxu0 0
        %1440 = vmatpush1.bf16.msra.mxu0 %v1434
        %1441 = vmatprep.subr.bf16.mxu0 0
        %1442 = vmatpush1.bf16.msra.mxu0 0
        %1443 = vmatprep.subr.bf16.mxu0 0
        %1444 = vmatpush1.bf16.msra.mxu0 0
        %1445 = vmatprep.subr.bf16.mxu0 0
        %1446 = vmatpush1.bf16.msra.mxu0 0
        %1447 = vmatprep.subr.bf16.mxu0 0
        %1448 = vmatpush1.bf16.msra.mxu0 0
        %1449 = vmatprep.subr.bf16.mxu0 0
        %1450 = vmatpush1.bf16.msra.mxu0 0
        %1451 = vmatprep.subr.bf16.mxu0 0
        %1452 = vmatpush1.bf16.msra.mxu0 0
        %1453 = vmatprep.subr.bf16.mxu0 0
        %1454 = vmatpush1.bf16.msra.mxu0 0
        %1455 = vmatprep.subr.bf16.mxu0 0
        %1456 = vmatpush1.bf16.msra.mxu0 0
        %1457 = vmatprep.subr.bf16.mxu0 0
        %1458 = vmatpush1.bf16.msra.mxu0 0
        %1459 = vmatprep.subr.bf16.mxu0 0
        %1460 = vmatpush1.bf16.msra.mxu0 0
        %1461 = vmatprep.subr.bf16.mxu0 0
        %1462 = vmatpush1.bf16.msra.mxu0 0
        %1463 = vmatprep.subr.bf16.mxu0 0
        %1464 = vmatpush1.bf16.msra.mxu0 0
        %1465 = vmatprep.subr.bf16.mxu0 0
        %1466 = vmatpush1.bf16.msra.mxu0 0
        %1467 = vmatprep.subr.bf16.mxu0 0
        %1468 = vmatpush1.bf16.msra.mxu0 0
        %1469 = vmatprep.mubr.bf16.mxu0 0
        %1470 = vmatmul.mubr.bf16.gmra.mrb[0].mxu0 %v1010
        %v1471 = vpop.f32.mrb[0].mxu0
        %v1472 = vadd.f32 %v1423, %v1471
        %v1473 = vpop.f32.mrb[0].mxu0
        %v1474 = vpop.f32.mrb[0].mxu0
        %v1475 = vpop.f32.mrb[0].mxu0
        %1476 = vdwg.mxu0
        %v1477 = vmul.f32 %v1053, %v1472
        %1478 = vst.msk [vmem:[#allocation2 + $0x28] sm:$0xff] %vm935, %v1477
        %1480 = vrot.lane.b32.xlu0 %v1472, 96
        %v1481 = vpop.permute.xlu0 %1480
        %1483 = vst.msk [vmem:[#allocation3 + $0x28] sm:$0xff] %vm935, %v1481
        %s1484 = scalar_lea.vmem [#allocation18], 96
        %v1485 = vld [vmem:[%s1484] sm:$0xf]
        %v1486 = vld [vmem:[%s1484 + $0x4] sm:$0xf]
        %v1487 = vld [vmem:[%s1484 + $0x8] sm:$0xf]
        %v1488 = vld [vmem:[%s1484 + $0xc] sm:$0xf]
        %s1489 = scalar_lea.vmem [#allocation19], 6
        %v1490 = vld [vmem:[%s1489] sm:$0x1]
        %v1492 = vlaneseq
        %v1493 = vshrl.u32 %v1492, 7
        %v1494 = vsub.s32 0, %v1493
        %v1495 = vrot.slane %v1490, %v1494
        %v1501 = vunpack.c.l.b16 %v1485
        %v1502 = vunpack.c.l.b16 %v1486
        %v1503 = vunpack.c.l.b16 %v1487
        %v1504 = vunpack.c.l.b16 %v1488
        %v1505 = vpack.c.b16 %v1502, %v1501
        %v1506 = vpack.c.b16 %v1504, %v1503
        %1509 = vmatprep.subr.bf16.mxu0 0
        %1510 = vmatpush1.bf16.msra.mxu0 %v1505
        %1511 = vmatprep.subr.bf16.mxu0 0
        %1512 = vmatpush1.bf16.msra.mxu0 %v1506
        %1513 = vmatprep.subr.bf16.mxu0 0
        %1514 = vmatpush1.bf16.msra.mxu0 0
        %1515 = vmatprep.subr.bf16.mxu0 0
        %1516 = vmatpush1.bf16.msra.mxu0 0
        %1517 = vmatprep.subr.bf16.mxu0 0
        %1518 = vmatpush1.bf16.msra.mxu0 0
        %1519 = vmatprep.subr.bf16.mxu0 0
        %1520 = vmatpush1.bf16.msra.mxu0 0
        %1521 = vmatprep.subr.bf16.mxu0 0
        %1522 = vmatpush1.bf16.msra.mxu0 0
        %1523 = vmatprep.subr.bf16.mxu0 0
        %1524 = vmatpush1.bf16.msra.mxu0 0
        %1525 = vmatprep.subr.bf16.mxu0 0
        %1526 = vmatpush1.bf16.msra.mxu0 0
        %1527 = vmatprep.subr.bf16.mxu0 0
        %1528 = vmatpush1.bf16.msra.mxu0 0
        %1529 = vmatprep.subr.bf16.mxu0 0
        %1530 = vmatpush1.bf16.msra.mxu0 0
        %1531 = vmatprep.subr.bf16.mxu0 0
        %1532 = vmatpush1.bf16.msra.mxu0 0
        %1533 = vmatprep.subr.bf16.mxu0 0
        %1534 = vmatpush1.bf16.msra.mxu0 0
        %1535 = vmatprep.subr.bf16.mxu0 0
        %1536 = vmatpush1.bf16.msra.mxu0 0
        %1537 = vmatprep.subr.bf16.mxu0 0
        %1538 = vmatpush1.bf16.msra.mxu0 0
        %1539 = vmatprep.subr.bf16.mxu0 0
        %1540 = vmatpush1.bf16.msra.mxu0 0
        %1541 = vmatprep.mubr.bf16.mxu0 0
        %1542 = vmatmul.mubr.bf16.gmra.mrb[0].mxu0 %v1010
        %v1543 = vpop.f32.mrb[0].mxu0
        %v1544 = vadd.f32 %v1495, %v1543
        %v1545 = vpop.f32.mrb[0].mxu0
        %v1546 = vpop.f32.mrb[0].mxu0
        %v1547 = vpop.f32.mrb[0].mxu0
        %1548 = vdwg.mxu0
        %v1549 = vmul.f32 %v1053, %v1544
        %1550 = vst.msk [vmem:[#allocation2 + $0x30] sm:$0xff] %vm935, %v1549
        %1552 = vrot.lane.b32.xlu0 %v1544, 96
        %v1553 = vpop.permute.xlu0 %1552
        %1555 = vst.msk [vmem:[#allocation3 + $0x30] sm:$0xff] %vm935, %v1553
        %s1556 = scalar_lea.vmem [#allocation18], 112
        %v1557 = vld [vmem:[%s1556] sm:$0xf]
        %v1558 = vld [vmem:[%s1556 + $0x4] sm:$0xf]
        %v1559 = vld [vmem:[%s1556 + $0x8] sm:$0xf]
        %v1560 = vld [vmem:[%s1556 + $0xc] sm:$0xf]
        %s1561 = scalar_lea.vmem [#allocation19], 7
        %v1562 = vld [vmem:[%s1561] sm:$0x1]
        %v1564 = vlaneseq
        %v1565 = vshrl.u32 %v1564, 7
        %v1566 = vsub.s32 0, %v1565
        %v1567 = vrot.slane %v1562, %v1566
        %v1573 = vunpack.c.l.b16 %v1557
        %v1574 = vunpack.c.l.b16 %v1558
        %v1575 = vunpack.c.l.b16 %v1559
        %v1576 = vunpack.c.l.b16 %v1560
        %v1577 = vpack.c.b16 %v1574, %v1573
        %v1578 = vpack.c.b16 %v1576, %v1575
        %1581 = vmatprep.subr.bf16.mxu0 0
        %1582 = vmatpush1.bf16.msra.mxu0 %v1577
        %1583 = vmatprep.subr.bf16.mxu0 0
        %1584 = vmatpush1.bf16.msra.mxu0 %v1578
        %1585 = vmatprep.subr.bf16.mxu0 0
        %1586 = vmatpush1.bf16.msra.mxu0 0
        %1587 = vmatprep.subr.bf16.mxu0 0
        %1588 = vmatpush1.bf16.msra.mxu0 0
        %1589 = vmatprep.subr.bf16.mxu0 0
        %1590 = vmatpush1.bf16.msra.mxu0 0
        %1591 = vmatprep.subr.bf16.mxu0 0
        %1592 = vmatpush1.bf16.msra.mxu0 0
        %1593 = vmatprep.subr.bf16.mxu0 0
        %1594 = vmatpush1.bf16.msra.mxu0 0
        %1595 = vmatprep.subr.bf16.mxu0 0
        %1596 = vmatpush1.bf16.msra.mxu0 0
        %1597 = vmatprep.subr.bf16.mxu0 0
        %1598 = vmatpush1.bf16.msra.mxu0 0
        %1599 = vmatprep.subr.bf16.mxu0 0
        %1600 = vmatpush1.bf16.msra.mxu0 0
        %1601 = vmatprep.subr.bf16.mxu0 0
        %1602 = vmatpush1.bf16.msra.mxu0 0
        %1603 = vmatprep.subr.bf16.mxu0 0
        %1604 = vmatpush1.bf16.msra.mxu0 0
        %1605 = vmatprep.subr.bf16.mxu0 0
        %1606 = vmatpush1.bf16.msra.mxu0 0
        %1607 = vmatprep.subr.bf16.mxu0 0
        %1608 = vmatpush1.bf16.msra.mxu0 0
        %1609 = vmatprep.subr.bf16.mxu0 0
        %1610 = vmatpush1.bf16.msra.mxu0 0
        %1611 = vmatprep.subr.bf16.mxu0 0
        %1612 = vmatpush1.bf16.msra.mxu0 0
        %1613 = vmatprep.mubr.bf16.mxu0 0
        %1614 = vmatmul.mubr.bf16.gmra.mrb[0].mxu0 %v1010
        %v1615 = vpop.f32.mrb[0].mxu0
        %v1616 = vadd.f32 %v1567, %v1615
        %v1617 = vpop.f32.mrb[0].mxu0
        %v1618 = vpop.f32.mrb[0].mxu0
        %v1619 = vpop.f32.mrb[0].mxu0
        %1620 = vdwg.mxu0
        %v1621 = vmul.f32 %v1053, %v1616
        %1622 = vst.msk [vmem:[#allocation2 + $0x38] sm:$0xff] %vm935, %v1621
        %1624 = vrot.lane.b32.xlu0 %v1616, 96
        %v1625 = vpop.permute.xlu0 %1624
        %1627 = vst.msk [vmem:[#allocation3 + $0x38] sm:$0xff] %vm935, %v1625
        %p1628 = scmp.eq.s32.totalorder %s46, 0
        // Predicated region
        $region129: #{tpu_custom_call.1} parent=91 // pred_check
          %p1629 = pneg %p1628
        $region130: #{tpu_custom_call.1} parent=91 // pred_check_branch
          %1631 = sbr.rel (%p1629) target = $region132
        $region131: #{tpu_custom_call.1} parent=91 // pred_region
          %1632 = vst.msk [vmem:[#allocation6] sm:$0xff] %vm935, 0.0
        $region132: #{tpu_custom_call.1} parent=91 // pred_fallthru
          _
        %v1633 = vld [vmem:[#allocation22] sm:$0xff]
        %v1634 = vld [vmem:[#allocation6] sm:$0xff]
        %v1635 = vld [vmem:[#allocation4] sm:$0x1]
        %v1636 = vlaneseq
        %v1637 = vshrl.u32 %v1636, 7
        %v1638 = vsub.s32 0, %v1637
        %v1639 = vrot.slane %v1635, %v1638
        %v1640 = vmul.f32 %v1639, %v1633
        %v1641 = vmul.f32 %v1640, 1.442695
        %v1642 = vpow.pop %v1641
        %v1643 = vld [vmem:[#allocation2] sm:$0x1]
        %s1644 = sadd.s32 0, 8
        %s1645 = scalar_lea.vmem [#allocation2], %s1644
        %v1646 = vld [vmem:[%s1645] sm:$0x1]
        %s1647 = sadd.s32 0, 16
        %s1648 = scalar_lea.vmem [#allocation2], %s1647
        %v1649 = vld [vmem:[%s1648] sm:$0x1]
        %s1650 = sadd.s32 0, 24
        %s1651 = scalar_lea.vmem [#allocation2], %s1650
        %v1652 = vld [vmem:[%s1651] sm:$0x1]
        %s1653 = sadd.s32 0, 32
        %s1654 = scalar_lea.vmem [#allocation2], %s1653
        %v1655 = vld [vmem:[%s1654] sm:$0x1]
        %s1656 = sadd.s32 0, 40
        %s1657 = scalar_lea.vmem [#allocation2], %s1656
        %v1658 = vld [vmem:[%s1657] sm:$0x1]
        %s1659 = sadd.s32 0, 48
        %s1660 = scalar_lea.vmem [#allocation2], %s1659
        %v1661 = vld [vmem:[%s1660] sm:$0x1]
        %s1662 = sadd.s32 0, 56
        %s1663 = scalar_lea.vmem [#allocation2], %s1662
        %v1664 = vld [vmem:[%s1663] sm:$0x1]
        %v1666 = vrot.slane %v1646, 7
        %v1669 = vrot.slane %v1649, 6
        %v1672 = vrot.slane %v1652, 5
        %v1675 = vrot.slane %v1655, 4
        %v1678 = vrot.slane %v1658, 3
        %v1681 = vrot.slane %v1661, 2
        %v1684 = vrot.slane %v1664, 1
        %v1686 = vsel %vm932, %v1643, %v1666
        %vm1687 = vcmask 1041408
        %v1688 = vsel %vm1687, %v1686, %v1669
        %vm1689 = vcmask 1042432
        %v1690 = vsel %vm1689, %v1688, %v1672
        %vm1691 = vcmask 1043456
        %v1692 = vsel %vm1691, %v1690, %v1675
        %vm1693 = vcmask 1044480
        %v1694 = vsel %vm1693, %v1692, %v1678
        %v1695 = vsel %vm973, %v1694, %v1681
        %v1696 = vsel %vm959, %v1695, %v1684
        %v1697 = vld [vmem:[#allocation3] sm:$0x1]
        %s1698 = scalar_lea.vmem [#allocation3], %s1644
        %v1699 = vld [vmem:[%s1698] sm:$0x1]
        %s1700 = scalar_lea.vmem [#allocation3], %s1647
        %v1701 = vld [vmem:[%s1700] sm:$0x1]
        %s1702 = scalar_lea.vmem [#allocation3], %s1650
        %v1703 = vld [vmem:[%s1702] sm:$0x1]
        %s1704 = scalar_lea.vmem [#allocation3], %s1653
        %v1705 = vld [vmem:[%s1704] sm:$0x1]
        %s1706 = scalar_lea.vmem [#allocation3], %s1656
        %v1707 = vld [vmem:[%s1706] sm:$0x1]
        %s1708 = scalar_lea.vmem [#allocation3], %s1659
        %v1709 = vld [vmem:[%s1708] sm:$0x1]
        %s1710 = scalar_lea.vmem [#allocation3], %s1662
        %v1711 = vld [vmem:[%s1710] sm:$0x1]
        %v1713 = vrot.slane %v1699, 7
        %v1716 = vrot.slane %v1701, 6
        %v1719 = vrot.slane %v1703, 5
        %v1722 = vrot.slane %v1705, 4
        %v1725 = vrot.slane %v1707, 3
        %v1728 = vrot.slane %v1709, 2
        %v1731 = vrot.slane %v1711, 1
        %v1733 = vsel %vm932, %v1697, %v1713
        %v1734 = vsel %vm1687, %v1733, %v1716
        %v1735 = vsel %vm1689, %v1734, %v1719
        %v1736 = vsel %vm1691, %v1735, %v1722
        %v1737 = vsel %vm1693, %v1736, %v1725
        %v1738 = vsel %vm973, %v1737, %v1728
        %v1739 = vsel %vm959, %v1738, %v1731
        %v1740 = vmul.f32 %v1642, %v1634
        %v1741 = vadd.f32 %v1740, %v1696
        %v1742 = vmul.f32 %v1739, %v1741
        %v1743 = vsel %vm935, %v1742, 0.0
        %v1744 = vrot.slane %v1743, 4
        %v1745 = vadd.f32 %v1743, %v1744
        %v1746 = vrot.slane %v1745, 2
        %v1747 = vadd.f32 %v1745, %v1746
        %v1748 = vrot.slane %v1747, 1
        %v1749 = vadd.f32 %v1747, %v1748
        %s1750 = sadd.s32 0, 1
        %s1751 = scalar_lea.vmem [#allocation4], %s1750
        %v1752 = vld [vmem:[%s1751] sm:$0x1]
        %v1753 = vlaneseq
        %v1754 = vshrl.u32 %v1753, 7
        %v1755 = vsub.s32 0, %v1754
        %v1756 = vrot.slane %v1752, %v1755
        %v1757 = vmul.f32 %v1756, %v1633
        %v1758 = vmul.f32 %v1757, 1.442695
        %v1759 = vpow.pop %v1758
        %s1760 = scalar_lea.vmem [#allocation2], %s1750
        %v1761 = vld [vmem:[%s1760] sm:$0x1]
        %s1762 = sadd.s32 0, 9
        %s1763 = scalar_lea.vmem [#allocation2], %s1762
        %v1764 = vld [vmem:[%s1763] sm:$0x1]
        %s1765 = sadd.s32 0, 17
        %s1766 = scalar_lea.vmem [#allocation2], %s1765
        %v1767 = vld [vmem:[%s1766] sm:$0x1]
        %s1768 = sadd.s32 0, 25
        %s1769 = scalar_lea.vmem [#allocation2], %s1768
        %v1770 = vld [vmem:[%s1769] sm:$0x1]
        %s1771 = sadd.s32 0, 33
        %s1772 = scalar_lea.vmem [#allocation2], %s1771
        %v1773 = vld [vmem:[%s1772] sm:$0x1]
        %s1774 = sadd.s32 0, 41
        %s1775 = scalar_lea.vmem [#allocation2], %s1774
        %v1776 = vld [vmem:[%s1775] sm:$0x1]
        %s1777 = sadd.s32 0, 49
        %s1778 = scalar_lea.vmem [#allocation2], %s1777
        %v1779 = vld [vmem:[%s1778] sm:$0x1]
        %s1780 = sadd.s32 0, 57
        %s1781 = scalar_lea.vmem [#allocation2], %s1780
        %v1782 = vld [vmem:[%s1781] sm:$0x1]
        %v1784 = vrot.slane %v1764, 7
        %v1787 = vrot.slane %v1767, 6
        %v1790 = vrot.slane %v1770, 5
        %v1793 = vrot.slane %v1773, 4
        %v1796 = vrot.slane %v1776, 3
        %v1799 = vrot.slane %v1779, 2
        %v1802 = vrot.slane %v1782, 1
        %v1804 = vsel %vm932, %v1761, %v1784
        %v1805 = vsel %vm1687, %v1804, %v1787
        %v1806 = vsel %vm1689, %v1805, %v1790
        %v1807 = vsel %vm1691, %v1806, %v1793
        %v1808 = vsel %vm1693, %v1807, %v1796
        %v1809 = vsel %vm973, %v1808, %v1799
        %v1810 = vsel %vm959, %v1809, %v1802
        %s1811 = scalar_lea.vmem [#allocation3], %s1750
        %v1812 = vld [vmem:[%s1811] sm:$0x1]
        %s1813 = scalar_lea.vmem [#allocation3], %s1762
        %v1814 = vld [vmem:[%s1813] sm:$0x1]
        %s1815 = scalar_lea.vmem [#allocation3], %s1765
        %v1816 = vld [vmem:[%s1815] sm:$0x1]
        %s1817 = scalar_lea.vmem [#allocation3], %s1768
        %v1818 = vld [vmem:[%s1817] sm:$0x1]
        %s1819 = scalar_lea.vmem [#allocation3], %s1771
        %v1820 = vld [vmem:[%s1819] sm:$0x1]
        %s1821 = scalar_lea.vmem [#allocation3], %s1774
        %v1822 = vld [vmem:[%s1821] sm:$0x1]
        %s1823 = scalar_lea.vmem [#allocation3], %s1777
        %v1824 = vld [vmem:[%s1823] sm:$0x1]
        %s1825 = scalar_lea.vmem [#allocation3], %s1780
        %v1826 = vld [vmem:[%s1825] sm:$0x1]
        %v1828 = vrot.slane %v1814, 7
        %v1831 = vrot.slane %v1816, 6
        %v1834 = vrot.slane %v1818, 5
        %v1837 = vrot.slane %v1820, 4
        %v1840 = vrot.slane %v1822, 3
        %v1843 = vrot.slane %v1824, 2
        %v1846 = vrot.slane %v1826, 1
        %v1848 = vsel %vm932, %v1812, %v1828
        %v1849 = vsel %vm1687, %v1848, %v1831
        %v1850 = vsel %vm1689, %v1849, %v1834
        %v1851 = vsel %vm1691, %v1850, %v1837
        %v1852 = vsel %vm1693, %v1851, %v1840
        %v1853 = vsel %vm973, %v1852, %v1843
        %v1854 = vsel %vm959, %v1853, %v1846
        %v1855 = vmul.f32 %v1759, %v1741
        %v1856 = vadd.f32 %v1855, %v1810
        %v1857 = vmul.f32 %v1854, %v1856
        %v1858 = vsel %vm935, %v1857, 0.0
        %v1859 = vrot.slane %v1858, 4
        %v1860 = vadd.f32 %v1858, %v1859
        %v1861 = vrot.slane %v1860, 2
        %v1862 = vadd.f32 %v1860, %v1861
        %v1863 = vrot.slane %v1862, 1
        %v1864 = vadd.f32 %v1862, %v1863
        %s1865 = sadd.s32 0, 2
        %s1866 = scalar_lea.vmem [#allocation4], %s1865
        %v1867 = vld [vmem:[%s1866] sm:$0x1]
        %v1868 = vlaneseq
        %v1869 = vshrl.u32 %v1868, 7
        %v1870 = vsub.s32 0, %v1869
        %v1871 = vrot.slane %v1867, %v1870
        %v1872 = vmul.f32 %v1871, %v1633
        %v1873 = vmul.f32 %v1872, 1.442695
        %v1874 = vpow.pop %v1873
        %s1875 = scalar_lea.vmem [#allocation2], %s1865
        %v1876 = vld [vmem:[%s1875] sm:$0x1]
        %s1877 = sadd.s32 0, 10
        %s1878 = scalar_lea.vmem [#allocation2], %s1877
        %v1879 = vld [vmem:[%s1878] sm:$0x1]
        %s1880 = sadd.s32 0, 18
        %s1881 = scalar_lea.vmem [#allocation2], %s1880
        %v1882 = vld [vmem:[%s1881] sm:$0x1]
        %s1883 = sadd.s32 0, 26
        %s1884 = scalar_lea.vmem [#allocation2], %s1883
        %v1885 = vld [vmem:[%s1884] sm:$0x1]
        %s1886 = sadd.s32 0, 34
        %s1887 = scalar_lea.vmem [#allocation2], %s1886
        %v1888 = vld [vmem:[%s1887] sm:$0x1]
        %s1889 = sadd.s32 0, 42
        %s1890 = scalar_lea.vmem [#allocation2], %s1889
        %v1891 = vld [vmem:[%s1890] sm:$0x1]
        %s1892 = sadd.s32 0, 50
        %s1893 = scalar_lea.vmem [#allocation2], %s1892
        %v1894 = vld [vmem:[%s1893] sm:$0x1]
        %s1895 = sadd.s32 0, 58
        %s1896 = scalar_lea.vmem [#allocation2], %s1895
        %v1897 = vld [vmem:[%s1896] sm:$0x1]
        %v1899 = vrot.slane %v1879, 7
        %v1902 = vrot.slane %v1882, 6
        %v1905 = vrot.slane %v1885, 5
        %v1908 = vrot.slane %v1888, 4
        %v1911 = vrot.slane %v1891, 3
        %v1914 = vrot.slane %v1894, 2
        %v1917 = vrot.slane %v1897, 1
        %v1919 = vsel %vm932, %v1876, %v1899
        %v1920 = vsel %vm1687, %v1919, %v1902
        %v1921 = vsel %vm1689, %v1920, %v1905
        %v1922 = vsel %vm1691, %v1921, %v1908
        %v1923 = vsel %vm1693, %v1922, %v1911
        %v1924 = vsel %vm973, %v1923, %v1914
        %v1925 = vsel %vm959, %v1924, %v1917
        %s1926 = scalar_lea.vmem [#allocation3], %s1865
        %v1927 = vld [vmem:[%s1926] sm:$0x1]
        %s1928 = scalar_lea.vmem [#allocation3], %s1877
        %v1929 = vld [vmem:[%s1928] sm:$0x1]
        %s1930 = scalar_lea.vmem [#allocation3], %s1880
        %v1931 = vld [vmem:[%s1930] sm:$0x1]
        %s1932 = scalar_lea.vmem [#allocation3], %s1883
        %v1933 = vld [vmem:[%s1932] sm:$0x1]
        %s1934 = scalar_lea.vmem [#allocation3], %s1886
        %v1935 = vld [vmem:[%s1934] sm:$0x1]
        %s1936 = scalar_lea.vmem [#allocation3], %s1889
        %v1937 = vld [vmem:[%s1936] sm:$0x1]
        %s1938 = scalar_lea.vmem [#allocation3], %s1892
        %v1939 = vld [vmem:[%s1938] sm:$0x1]
        %s1940 = scalar_lea.vmem [#allocation3], %s1895
        %v1941 = vld [vmem:[%s1940] sm:$0x1]
        %v1943 = vrot.slane %v1929, 7
        %v1946 = vrot.slane %v1931, 6
        %v1949 = vrot.slane %v1933, 5
        %v1952 = vrot.slane %v1935, 4
        %v1955 = vrot.slane %v1937, 3
        %v1958 = vrot.slane %v1939, 2
        %v1961 = vrot.slane %v1941, 1
        %v1963 = vsel %vm932, %v1927, %v1943
        %v1964 = vsel %vm1687, %v1963, %v1946
        %v1965 = vsel %vm1689, %v1964, %v1949
        %v1966 = vsel %vm1691, %v1965, %v1952
        %v1967 = vsel %vm1693, %v1966, %v1955
        %v1968 = vsel %vm973, %v1967, %v1958
        %v1969 = vsel %vm959, %v1968, %v1961
        %v1970 = vmul.f32 %v1874, %v1856
        %v1971 = vadd.f32 %v1970, %v1925
        %v1972 = vmul.f32 %v1969, %v1971
        %v1973 = vsel %vm935, %v1972, 0.0
        %v1974 = vrot.slane %v1973, 4
        %v1975 = vadd.f32 %v1973, %v1974
        %v1976 = vrot.slane %v1975, 2
        %v1977 = vadd.f32 %v1975, %v1976
        %v1978 = vrot.slane %v1977, 1
        %v1979 = vadd.f32 %v1977, %v1978
        %s1980 = sadd.s32 0, 3
        %s1981 = scalar_lea.vmem [#allocation4], %s1980
        %v1982 = vld [vmem:[%s1981] sm:$0x1]
        %v1983 = vlaneseq
        %v1984 = vshrl.u32 %v1983, 7
        %v1985 = vsub.s32 0, %v1984
        %v1986 = vrot.slane %v1982, %v1985
        %v1987 = vmul.f32 %v1986, %v1633
        %v1988 = vmul.f32 %v1987, 1.442695
        %v1989 = vpow.pop %v1988
        %s1990 = scalar_lea.vmem [#allocation2], %s1980
        %v1991 = vld [vmem:[%s1990] sm:$0x1]
        %s1992 = sadd.s32 0, 11
        %s1993 = scalar_lea.vmem [#allocation2], %s1992
        %v1994 = vld [vmem:[%s1993] sm:$0x1]
        %s1995 = sadd.s32 0, 19
        %s1996 = scalar_lea.vmem [#allocation2], %s1995
        %v1997 = vld [vmem:[%s1996] sm:$0x1]
        %s1998 = sadd.s32 0, 27
        %s1999 = scalar_lea.vmem [#allocation2], %s1998
        %v2000 = vld [vmem:[%s1999] sm:$0x1]
        %s2001 = sadd.s32 0, 35
        %s2002 = scalar_lea.vmem [#allocation2], %s2001
        %v2003 = vld [vmem:[%s2002] sm:$0x1]
        %s2004 = sadd.s32 0, 43
        %s2005 = scalar_lea.vmem [#allocation2], %s2004
        %v2006 = vld [vmem:[%s2005] sm:$0x1]
        %s2007 = sadd.s32 0, 51
        %s2008 = scalar_lea.vmem [#allocation2], %s2007
        %v2009 = vld [vmem:[%s2008] sm:$0x1]
        %s2010 = sadd.s32 0, 59
        %s2011 = scalar_lea.vmem [#allocation2], %s2010
        %v2012 = vld [vmem:[%s2011] sm:$0x1]
        %v2014 = vrot.slane %v1994, 7
        %v2017 = vrot.slane %v1997, 6
        %v2020 = vrot.slane %v2000, 5
        %v2023 = vrot.slane %v2003, 4
        %v2026 = vrot.slane %v2006, 3
        %v2029 = vrot.slane %v2009, 2
        %v2032 = vrot.slane %v2012, 1
        %v2034 = vsel %vm932, %v1991, %v2014
        %v2035 = vsel %vm1687, %v2034, %v2017
        %v2036 = vsel %vm1689, %v2035, %v2020
        %v2037 = vsel %vm1691, %v2036, %v2023
        %v2038 = vsel %vm1693, %v2037, %v2026
        %v2039 = vsel %vm973, %v2038, %v2029
        %v2040 = vsel %vm959, %v2039, %v2032
        %s2041 = scalar_lea.vmem [#allocation3], %s1980
        %v2042 = vld [vmem:[%s2041] sm:$0x1]
        %s2043 = scalar_lea.vmem [#allocation3], %s1992
        %v2044 = vld [vmem:[%s2043] sm:$0x1]
        %s2045 = scalar_lea.vmem [#allocation3], %s1995
        %v2046 = vld [vmem:[%s2045] sm:$0x1]
        %s2047 = scalar_lea.vmem [#allocation3], %s1998
        %v2048 = vld [vmem:[%s2047] sm:$0x1]
        %s2049 = scalar_lea.vmem [#allocation3], %s2001
        %v2050 = vld [vmem:[%s2049] sm:$0x1]
        %s2051 = scalar_lea.vmem [#allocation3], %s2004
        %v2052 = vld [vmem:[%s2051] sm:$0x1]
        %s2053 = scalar_lea.vmem [#allocation3], %s2007
        %v2054 = vld [vmem:[%s2053] sm:$0x1]
        %s2055 = scalar_lea.vmem [#allocation3], %s2010
        %v2056 = vld [vmem:[%s2055] sm:$0x1]
        %v2058 = vrot.slane %v2044, 7
        %v2061 = vrot.slane %v2046, 6
        %v2064 = vrot.slane %v2048, 5
        %v2067 = vrot.slane %v2050, 4
        %v2070 = vrot.slane %v2052, 3
        %v2073 = vrot.slane %v2054, 2
        %v2076 = vrot.slane %v2056, 1
        %v2078 = vsel %vm932, %v2042, %v2058
        %v2079 = vsel %vm1687, %v2078, %v2061
        %v2080 = vsel %vm1689, %v2079, %v2064
        %v2081 = vsel %vm1691, %v2080, %v2067
        %v2082 = vsel %vm1693, %v2081, %v2070
        %v2083 = vsel %vm973, %v2082, %v2073
        %v2084 = vsel %vm959, %v2083, %v2076
        %v2085 = vmul.f32 %v1989, %v1971
        %v2086 = vadd.f32 %v2085, %v2040
        %v2087 = vmul.f32 %v2084, %v2086
        %v2088 = vsel %vm935, %v2087, 0.0
        %v2089 = vrot.slane %v2088, 4
        %v2090 = vadd.f32 %v2088, %v2089
        %v2091 = vrot.slane %v2090, 2
        %v2092 = vadd.f32 %v2090, %v2091
        %v2093 = vrot.slane %v2092, 1
        %v2094 = vadd.f32 %v2092, %v2093
        %s2095 = sadd.s32 0, 4
        %s2096 = scalar_lea.vmem [#allocation4], %s2095
        %v2097 = vld [vmem:[%s2096] sm:$0x1]
        %v2098 = vlaneseq
        %v2099 = vshrl.u32 %v2098, 7
        %v2100 = vsub.s32 0, %v2099
        %v2101 = vrot.slane %v2097, %v2100
        %v2102 = vmul.f32 %v2101, %v1633
        %v2103 = vmul.f32 %v2102, 1.442695
        %v2104 = vpow.pop %v2103
        %s2105 = scalar_lea.vmem [#allocation2], %s2095
        %v2106 = vld [vmem:[%s2105] sm:$0x1]
        %s2107 = sadd.s32 0, 12
        %s2108 = scalar_lea.vmem [#allocation2], %s2107
        %v2109 = vld [vmem:[%s2108] sm:$0x1]
        %s2110 = sadd.s32 0, 20
        %s2111 = scalar_lea.vmem [#allocation2], %s2110
        %v2112 = vld [vmem:[%s2111] sm:$0x1]
        %s2113 = sadd.s32 0, 28
        %s2114 = scalar_lea.vmem [#allocation2], %s2113
        %v2115 = vld [vmem:[%s2114] sm:$0x1]
        %s2116 = sadd.s32 0, 36
        %s2117 = scalar_lea.vmem [#allocation2], %s2116
        %v2118 = vld [vmem:[%s2117] sm:$0x1]
        %s2119 = sadd.s32 0, 44
        %s2120 = scalar_lea.vmem [#allocation2], %s2119
        %v2121 = vld [vmem:[%s2120] sm:$0x1]
        %s2122 = sadd.s32 0, 52
        %s2123 = scalar_lea.vmem [#allocation2], %s2122
        %v2124 = vld [vmem:[%s2123] sm:$0x1]
        %s2125 = sadd.s32 0, 60
        %s2126 = scalar_lea.vmem [#allocation2], %s2125
        %v2127 = vld [vmem:[%s2126] sm:$0x1]
        %v2129 = vrot.slane %v2109, 7
        %v2132 = vrot.slane %v2112, 6
        %v2135 = vrot.slane %v2115, 5
        %v2138 = vrot.slane %v2118, 4
        %v2141 = vrot.slane %v2121, 3
        %v2144 = vrot.slane %v2124, 2
        %v2147 = vrot.slane %v2127, 1
        %v2149 = vsel %vm932, %v2106, %v2129
        %v2150 = vsel %vm1687, %v2149, %v2132
        %v2151 = vsel %vm1689, %v2150, %v2135
        %v2152 = vsel %vm1691, %v2151, %v2138
        %v2153 = vsel %vm1693, %v2152, %v2141
        %v2154 = vsel %vm973, %v2153, %v2144
        %v2155 = vsel %vm959, %v2154, %v2147
        %s2156 = scalar_lea.vmem [#allocation3], %s2095
        %v2157 = vld [vmem:[%s2156] sm:$0x1]
        %s2158 = scalar_lea.vmem [#allocation3], %s2107
        %v2159 = vld [vmem:[%s2158] sm:$0x1]
        %s2160 = scalar_lea.vmem [#allocation3], %s2110
        %v2161 = vld [vmem:[%s2160] sm:$0x1]
        %s2162 = scalar_lea.vmem [#allocation3], %s2113
        %v2163 = vld [vmem:[%s2162] sm:$0x1]
        %s2164 = scalar_lea.vmem [#allocation3], %s2116
        %v2165 = vld [vmem:[%s2164] sm:$0x1]
        %s2166 = scalar_lea.vmem [#allocation3], %s2119
        %v2167 = vld [vmem:[%s2166] sm:$0x1]
        %s2168 = scalar_lea.vmem [#allocation3], %s2122
        %v2169 = vld [vmem:[%s2168] sm:$0x1]
        %s2170 = scalar_lea.vmem [#allocation3], %s2125
        %v2171 = vld [vmem:[%s2170] sm:$0x1]
        %v2173 = vrot.slane %v2159, 7
        %v2176 = vrot.slane %v2161, 6
        %v2179 = vrot.slane %v2163, 5
        %v2182 = vrot.slane %v2165, 4
        %v2185 = vrot.slane %v2167, 3
        %v2188 = vrot.slane %v2169, 2
        %v2191 = vrot.slane %v2171, 1
        %v2193 = vsel %vm932, %v2157, %v2173
        %v2194 = vsel %vm1687, %v2193, %v2176
        %v2195 = vsel %vm1689, %v2194, %v2179
        %v2196 = vsel %vm1691, %v2195, %v2182
        %v2197 = vsel %vm1693, %v2196, %v2185
        %v2198 = vsel %vm973, %v2197, %v2188
        %v2199 = vsel %vm959, %v2198, %v2191
        %v2200 = vmul.f32 %v2104, %v2086
        %v2201 = vadd.f32 %v2200, %v2155
        %v2202 = vmul.f32 %v2199, %v2201
        %v2203 = vsel %vm935, %v2202, 0.0
        %v2204 = vrot.slane %v2203, 4
        %v2205 = vadd.f32 %v2203, %v2204
        %v2206 = vrot.slane %v2205, 2
        %v2207 = vadd.f32 %v2205, %v2206
        %v2208 = vrot.slane %v2207, 1
        %v2209 = vadd.f32 %v2207, %v2208
        %s2210 = sadd.s32 0, 5
        %s2211 = scalar_lea.vmem [#allocation4], %s2210
        %v2212 = vld [vmem:[%s2211] sm:$0x1]
        %v2213 = vlaneseq
        %v2214 = vshrl.u32 %v2213, 7
        %v2215 = vsub.s32 0, %v2214
        %v2216 = vrot.slane %v2212, %v2215
        %v2217 = vmul.f32 %v2216, %v1633
        %v2218 = vmul.f32 %v2217, 1.442695
        %v2219 = vpow.pop %v2218
        %s2220 = scalar_lea.vmem [#allocation2], %s2210
        %v2221 = vld [vmem:[%s2220] sm:$0x1]
        %s2222 = sadd.s32 0, 13
        %s2223 = scalar_lea.vmem [#allocation2], %s2222
        %v2224 = vld [vmem:[%s2223] sm:$0x1]
        %s2225 = sadd.s32 0, 21
        %s2226 = scalar_lea.vmem [#allocation2], %s2225
        %v2227 = vld [vmem:[%s2226] sm:$0x1]
        %s2228 = sadd.s32 0, 29
        %s2229 = scalar_lea.vmem [#allocation2], %s2228
        %v2230 = vld [vmem:[%s2229] sm:$0x1]
        %s2231 = sadd.s32 0, 37
        %s2232 = scalar_lea.vmem [#allocation2], %s2231
        %v2233 = vld [vmem:[%s2232] sm:$0x1]
        %s2234 = sadd.s32 0, 45
        %s2235 = scalar_lea.vmem [#allocation2], %s2234
        %v2236 = vld [vmem:[%s2235] sm:$0x1]
        %s2237 = sadd.s32 0, 53
        %s2238 = scalar_lea.vmem [#allocation2], %s2237
        %v2239 = vld [vmem:[%s2238] sm:$0x1]
        %s2240 = sadd.s32 0, 61
        %s2241 = scalar_lea.vmem [#allocation2], %s2240
        %v2242 = vld [vmem:[%s2241] sm:$0x1]
        %v2244 = vrot.slane %v2224, 7
        %v2247 = vrot.slane %v2227, 6
        %v2250 = vrot.slane %v2230, 5
        %v2253 = vrot.slane %v2233, 4
        %v2256 = vrot.slane %v2236, 3
        %v2259 = vrot.slane %v2239, 2
        %v2262 = vrot.slane %v2242, 1
        %v2264 = vsel %vm932, %v2221, %v2244
        %v2265 = vsel %vm1687, %v2264, %v2247
        %v2266 = vsel %vm1689, %v2265, %v2250
        %v2267 = vsel %vm1691, %v2266, %v2253
        %v2268 = vsel %vm1693, %v2267, %v2256
        %v2269 = vsel %vm973, %v2268, %v2259
        %v2270 = vsel %vm959, %v2269, %v2262
        %s2271 = scalar_lea.vmem [#allocation3], %s2210
        %v2272 = vld [vmem:[%s2271] sm:$0x1]
        %s2273 = scalar_lea.vmem [#allocation3], %s2222
        %v2274 = vld [vmem:[%s2273] sm:$0x1]
        %s2275 = scalar_lea.vmem [#allocation3], %s2225
        %v2276 = vld [vmem:[%s2275] sm:$0x1]
        %s2277 = scalar_lea.vmem [#allocation3], %s2228
        %v2278 = vld [vmem:[%s2277] sm:$0x1]
        %s2279 = scalar_lea.vmem [#allocation3], %s2231
        %v2280 = vld [vmem:[%s2279] sm:$0x1]
        %s2281 = scalar_lea.vmem [#allocation3], %s2234
        %v2282 = vld [vmem:[%s2281] sm:$0x1]
        %s2283 = scalar_lea.vmem [#allocation3], %s2237
        %v2284 = vld [vmem:[%s2283] sm:$0x1]
        %s2285 = scalar_lea.vmem [#allocation3], %s2240
        %v2286 = vld [vmem:[%s2285] sm:$0x1]
        %v2288 = vrot.slane %v2274, 7
        %v2291 = vrot.slane %v2276, 6
        %v2294 = vrot.slane %v2278, 5
        %v2297 = vrot.slane %v2280, 4
        %v2300 = vrot.slane %v2282, 3
        %v2303 = vrot.slane %v2284, 2
        %v2306 = vrot.slane %v2286, 1
        %v2308 = vsel %vm932, %v2272, %v2288
        %v2309 = vsel %vm1687, %v2308, %v2291
        %v2310 = vsel %vm1689, %v2309, %v2294
        %v2311 = vsel %vm1691, %v2310, %v2297
        %v2312 = vsel %vm1693, %v2311, %v2300
        %v2313 = vsel %vm973, %v2312, %v2303
        %v2314 = vsel %vm959, %v2313, %v2306
        %v2315 = vmul.f32 %v2219, %v2201
        %v2316 = vadd.f32 %v2315, %v2270
        %v2317 = vmul.f32 %v2314, %v2316
        %v2318 = vsel %vm935, %v2317, 0.0
        %v2319 = vrot.slane %v2318, 4
        %v2320 = vadd.f32 %v2318, %v2319
        %v2321 = vrot.slane %v2320, 2
        %v2322 = vadd.f32 %v2320, %v2321
        %v2323 = vrot.slane %v2322, 1
        %v2324 = vadd.f32 %v2322, %v2323
        %s2325 = sadd.s32 0, 6
        %s2326 = scalar_lea.vmem [#allocation4], %s2325
        %v2327 = vld [vmem:[%s2326] sm:$0x1]
        %v2328 = vlaneseq
        %v2329 = vshrl.u32 %v2328, 7
        %v2330 = vsub.s32 0, %v2329
        %v2331 = vrot.slane %v2327, %v2330
        %v2332 = vmul.f32 %v2331, %v1633
        %v2333 = vmul.f32 %v2332, 1.442695
        %v2334 = vpow.pop %v2333
        %s2335 = scalar_lea.vmem [#allocation2], %s2325
        %v2336 = vld [vmem:[%s2335] sm:$0x1]
        %s2337 = sadd.s32 0, 14
        %s2338 = scalar_lea.vmem [#allocation2], %s2337
        %v2339 = vld [vmem:[%s2338] sm:$0x1]
        %s2340 = sadd.s32 0, 22
        %s2341 = scalar_lea.vmem [#allocation2], %s2340
        %v2342 = vld [vmem:[%s2341] sm:$0x1]
        %s2343 = sadd.s32 0, 30
        %s2344 = scalar_lea.vmem [#allocation2], %s2343
        %v2345 = vld [vmem:[%s2344] sm:$0x1]
        %s2346 = sadd.s32 0, 38
        %s2347 = scalar_lea.vmem [#allocation2], %s2346
        %v2348 = vld [vmem:[%s2347] sm:$0x1]
        %s2349 = sadd.s32 0, 46
        %s2350 = scalar_lea.vmem [#allocation2], %s2349
        %v2351 = vld [vmem:[%s2350] sm:$0x1]
        %s2352 = sadd.s32 0, 54
        %s2353 = scalar_lea.vmem [#allocation2], %s2352
        %v2354 = vld [vmem:[%s2353] sm:$0x1]
        %s2355 = sadd.s32 0, 62
        %s2356 = scalar_lea.vmem [#allocation2], %s2355
        %v2357 = vld [vmem:[%s2356] sm:$0x1]
        %v2359 = vrot.slane %v2339, 7
        %v2362 = vrot.slane %v2342, 6
        %v2365 = vrot.slane %v2345, 5
        %v2368 = vrot.slane %v2348, 4
        %v2371 = vrot.slane %v2351, 3
        %v2374 = vrot.slane %v2354, 2
        %v2377 = vrot.slane %v2357, 1
        %v2379 = vsel %vm932, %v2336, %v2359
        %v2380 = vsel %vm1687, %v2379, %v2362
        %v2381 = vsel %vm1689, %v2380, %v2365
        %v2382 = vsel %vm1691, %v2381, %v2368
        %v2383 = vsel %vm1693, %v2382, %v2371
        %v2384 = vsel %vm973, %v2383, %v2374
        %v2385 = vsel %vm959, %v2384, %v2377
        %s2386 = scalar_lea.vmem [#allocation3], %s2325
        %v2387 = vld [vmem:[%s2386] sm:$0x1]
        %s2388 = scalar_lea.vmem [#allocation3], %s2337
        %v2389 = vld [vmem:[%s2388] sm:$0x1]
        %s2390 = scalar_lea.vmem [#allocation3], %s2340
        %v2391 = vld [vmem:[%s2390] sm:$0x1]
        %s2392 = scalar_lea.vmem [#allocation3], %s2343
        %v2393 = vld [vmem:[%s2392] sm:$0x1]
        %s2394 = scalar_lea.vmem [#allocation3], %s2346
        %v2395 = vld [vmem:[%s2394] sm:$0x1]
        %s2396 = scalar_lea.vmem [#allocation3], %s2349
        %v2397 = vld [vmem:[%s2396] sm:$0x1]
        %s2398 = scalar_lea.vmem [#allocation3], %s2352
        %v2399 = vld [vmem:[%s2398] sm:$0x1]
        %s2400 = scalar_lea.vmem [#allocation3], %s2355
        %v2401 = vld [vmem:[%s2400] sm:$0x1]
        %v2403 = vrot.slane %v2389, 7
        %v2406 = vrot.slane %v2391, 6
        %v2409 = vrot.slane %v2393, 5
        %v2412 = vrot.slane %v2395, 4
        %v2415 = vrot.slane %v2397, 3
        %v2418 = vrot.slane %v2399, 2
        %v2421 = vrot.slane %v2401, 1
        %v2423 = vsel %vm932, %v2387, %v2403
        %v2424 = vsel %vm1687, %v2423, %v2406
        %v2425 = vsel %vm1689, %v2424, %v2409
        %v2426 = vsel %vm1691, %v2425, %v2412
        %v2427 = vsel %vm1693, %v2426, %v2415
        %v2428 = vsel %vm973, %v2427, %v2418
        %v2429 = vsel %vm959, %v2428, %v2421
        %v2430 = vmul.f32 %v2334, %v2316
        %v2431 = vadd.f32 %v2430, %v2385
        %v2432 = vmul.f32 %v2429, %v2431
        %v2433 = vsel %vm935, %v2432, 0.0
        %v2434 = vrot.slane %v2433, 4
        %v2435 = vadd.f32 %v2433, %v2434
        %v2436 = vrot.slane %v2435, 2
        %v2437 = vadd.f32 %v2435, %v2436
        %v2438 = vrot.slane %v2437, 1
        %v2439 = vadd.f32 %v2437, %v2438
        %s2440 = sadd.s32 0, 7
        %s2441 = scalar_lea.vmem [#allocation4], %s2440
        %v2442 = vld [vmem:[%s2441] sm:$0x1]
        %v2443 = vlaneseq
        %v2444 = vshrl.u32 %v2443, 7
        %v2445 = vsub.s32 0, %v2444
        %v2446 = vrot.slane %v2442, %v2445
        %v2447 = vmul.f32 %v2446, %v1633
        %v2448 = vmul.f32 %v2447, 1.442695
        %v2449 = vpow.pop %v2448
        %s2450 = scalar_lea.vmem [#allocation2], %s2440
        %v2451 = vld [vmem:[%s2450] sm:$0x1]
        %s2452 = sadd.s32 0, 15
        %s2453 = scalar_lea.vmem [#allocation2], %s2452
        %v2454 = vld [vmem:[%s2453] sm:$0x1]
        %s2455 = sadd.s32 0, 23
        %s2456 = scalar_lea.vmem [#allocation2], %s2455
        %v2457 = vld [vmem:[%s2456] sm:$0x1]
        %s2458 = sadd.s32 0, 31
        %s2459 = scalar_lea.vmem [#allocation2], %s2458
        %v2460 = vld [vmem:[%s2459] sm:$0x1]
        %s2461 = sadd.s32 0, 39
        %s2462 = scalar_lea.vmem [#allocation2], %s2461
        %v2463 = vld [vmem:[%s2462] sm:$0x1]
        %s2464 = sadd.s32 0, 47
        %s2465 = scalar_lea.vmem [#allocation2], %s2464
        %v2466 = vld [vmem:[%s2465] sm:$0x1]
        %s2467 = sadd.s32 0, 55
        %s2468 = scalar_lea.vmem [#allocation2], %s2467
        %v2469 = vld [vmem:[%s2468] sm:$0x1]
        %s2470 = sadd.s32 0, 63
        %s2471 = scalar_lea.vmem [#allocation2], %s2470
        %v2472 = vld [vmem:[%s2471] sm:$0x1]
        %v2474 = vrot.slane %v2454, 7
        %v2477 = vrot.slane %v2457, 6
        %v2480 = vrot.slane %v2460, 5
        %v2483 = vrot.slane %v2463, 4
        %v2486 = vrot.slane %v2466, 3
        %v2489 = vrot.slane %v2469, 2
        %v2492 = vrot.slane %v2472, 1
        %v2494 = vsel %vm932, %v2451, %v2474
        %v2495 = vsel %vm1687, %v2494, %v2477
        %v2496 = vsel %vm1689, %v2495, %v2480
        %v2497 = vsel %vm1691, %v2496, %v2483
        %v2498 = vsel %vm1693, %v2497, %v2486
        %v2499 = vsel %vm973, %v2498, %v2489
        %v2500 = vsel %vm959, %v2499, %v2492
        %s2501 = scalar_lea.vmem [#allocation3], %s2440
        %v2502 = vld [vmem:[%s2501] sm:$0x1]
        %s2503 = scalar_lea.vmem [#allocation3], %s2452
        %v2504 = vld [vmem:[%s2503] sm:$0x1]
        %s2505 = scalar_lea.vmem [#allocation3], %s2455
        %v2506 = vld [vmem:[%s2505] sm:$0x1]
        %s2507 = scalar_lea.vmem [#allocation3], %s2458
        %v2508 = vld [vmem:[%s2507] sm:$0x1]
        %s2509 = scalar_lea.vmem [#allocation3], %s2461
        %v2510 = vld [vmem:[%s2509] sm:$0x1]
        %s2511 = scalar_lea.vmem [#allocation3], %s2464
        %v2512 = vld [vmem:[%s2511] sm:$0x1]
        %s2513 = scalar_lea.vmem [#allocation3], %s2467
        %v2514 = vld [vmem:[%s2513] sm:$0x1]
        %s2515 = scalar_lea.vmem [#allocation3], %s2470
        %v2516 = vld [vmem:[%s2515] sm:$0x1]
        %v2518 = vrot.slane %v2504, 7
        %v2521 = vrot.slane %v2506, 6
        %v2524 = vrot.slane %v2508, 5
        %v2527 = vrot.slane %v2510, 4
        %v2530 = vrot.slane %v2512, 3
        %v2533 = vrot.slane %v2514, 2
        %v2536 = vrot.slane %v2516, 1
        %v2538 = vsel %vm932, %v2502, %v2518
        %v2539 = vsel %vm1687, %v2538, %v2521
        %v2540 = vsel %vm1689, %v2539, %v2524
        %v2541 = vsel %vm1691, %v2540, %v2527
        %v2542 = vsel %vm1693, %v2541, %v2530
        %v2543 = vsel %vm973, %v2542, %v2533
        %v2544 = vsel %vm959, %v2543, %v2536
        %v2545 = vmul.f32 %v2449, %v2431
        %v2546 = vadd.f32 %v2545, %v2500
        %v2547 = vmul.f32 %v2544, %v2546
        %v2548 = vsel %vm935, %v2547, 0.0
        %v2549 = vrot.slane %v2548, 4
        %v2550 = vadd.f32 %v2548, %v2549
        %v2551 = vrot.slane %v2550, 2
        %v2552 = vadd.f32 %v2550, %v2551
        %v2553 = vrot.slane %v2552, 1
        %v2554 = vadd.f32 %v2552, %v2553
        %v2555 = vsel %vm932, %v1749, %v1864
        %v2556 = vsel %vm1687, %v2555, %v1979
        %v2557 = vsel %vm1689, %v2556, %v2094
        %v2558 = vsel %vm1691, %v2557, %v2209
        %v2559 = vsel %vm1693, %v2558, %v2324
        %v2560 = vsel %vm973, %v2559, %v2439
        %v2561 = vsel %vm959, %v2560, %v2554
        %2562 = vst.msk [vmem:[#allocation5] sm:$0xff] %vm935, %v2561
        %2563 = vst.msk [vmem:[#allocation6] sm:$0xff] %vm935, %v2546
        %v2564 = vld [vmem:[#allocation5] sm:$0xff]
        %v2565 = vld [vmem:[#allocation24] sm:$0x1]
        %v2567 = vlaneseq
        %v2568 = vshrl.u32 %v2567, 7
        %v2569 = vsub.s32 0, %v2568
        %v2570 = vrot.slane %v2565, %v2569
        %v2572 = vmul.f32 %v2570, %v984
        %v2573 = vadd.f32 %v2564, %v2572
        %v2574 = vpack.c.bf16 %v846, %v846
        %v2575 = vld [vmem:[%s14] sm:$0xf]
        %v2576 = vld [vmem:[%s14 + $0x4] sm:$0xf]
        %v2577 = vld [vmem:[%s14 + $0x8] sm:$0xf]
        %v2578 = vld [vmem:[%s14 + $0xc] sm:$0xf]
        %v2579 = vld [vmem:[%s15] sm:$0x1]
        %v2581 = vlaneseq
        %v2582 = vshrl.u32 %v2581, 7
        %v2583 = vsub.s32 0, %v2582
        %v2584 = vrot.slane %v2579, %v2583
        %2587 = vrot.lane.b32.xlu0 %v2574, 96
        %v2588 = vpop.permute.xlu0 %2587
        %v2593 = vunpack.c.l.b16 %v2575
        %v2594 = vunpack.c.l.b16 %v2576
        %v2595 = vunpack.c.l.b16 %v2577
        %v2596 = vunpack.c.l.b16 %v2578
        %v2597 = vpack.c.b16 %v2594, %v2593
        %v2598 = vpack.c.b16 %v2596, %v2595
        %v2602 = vsel %vm935, %v2588, 0
        %2604 = vmatprep.subr.bf16.mxu0 0
        %2605 = vmatpush1.bf16.msra.mxu0 %v2597
        %2606 = vmatprep.subr.bf16.mxu0 0
        %2607 = vmatpush1.bf16.msra.mxu0 %v2598
        %2608 = vmatprep.subr.bf16.mxu0 0
        %2609 = vmatpush1.bf16.msra.mxu0 0
        %2610 = vmatprep.subr.bf16.mxu0 0
        %2611 = vmatpush1.bf16.msra.mxu0 0
        %2612 = vmatprep.subr.bf16.mxu0 0
        %2613 = vmatpush1.bf16.msra.mxu0 0
        %2614 = vmatprep.subr.bf16.mxu0 0
        %2615 = vmatpush1.bf16.msra.mxu0 0
        %2616 = vmatprep.subr.bf16.mxu0 0
        %2617 = vmatpush1.bf16.msra.mxu0 0
        %2618 = vmatprep.subr.bf16.mxu0 0
        %2619 = vmatpush1.bf16.msra.mxu0 0
        %2620 = vmatprep.subr.bf16.mxu0 0
        %2621 = vmatpush1.bf16.msra.mxu0 0
        %2622 = vmatprep.subr.bf16.mxu0 0
        %2623 = vmatpush1.bf16.msra.mxu0 0
        %2624 = vmatprep.subr.bf16.mxu0 0
        %2625 = vmatpush1.bf16.msra.mxu0 0
        %2626 = vmatprep.subr.bf16.mxu0 0
        %2627 = vmatpush1.bf16.msra.mxu0 0
        %2628 = vmatprep.subr.bf16.mxu0 0
        %2629 = vmatpush1.bf16.msra.mxu0 0
        %2630 = vmatprep.subr.bf16.mxu0 0
        %2631 = vmatpush1.bf16.msra.mxu0 0
        %2632 = vmatprep.subr.bf16.mxu0 0
        %2633 = vmatpush1.bf16.msra.mxu0 0
        %2634 = vmatprep.subr.bf16.mxu0 0
        %2635 = vmatpush1.bf16.msra.mxu0 0
        %2636 = vmatprep.mubr.bf16.mxu0 0
        %2637 = vmatmul.mubr.bf16.gmra.mrb[0].mxu0 %v2602
        %v2638 = vpop.f32.mrb[0].mxu0
        %v2639 = vadd.f32 %v2584, %v2638
        %v2640 = vpop.f32.mrb[0].mxu0
        %v2641 = vpop.f32.mrb[0].mxu0
        %v2642 = vpop.f32.mrb[0].mxu0
        %2643 = vdwg.mxu0
        %v2644 = vxor.u32 %v2639, 2147483648
        %v2645 = vmul.f32 %v2644, 1.442695
        %v2646 = vpow.pop %v2645
        %v2647 = vadd.f32 %v2646, 1.0
        %v2648 = vrcp.pop %v2647
        %v2649 = vmul.f32 1.0, %v2648
        %v2650 = vmul.f32 %v2649, %v2573
        %v2651 = vmul.f32 %v2650, 0.5
        %v2652 = vmul.f32 %v2650, 0.70710677
        %v2653 = vand.u32 2147483647, %v2652
        %v2654 = vmul.f32 %v2653, 0.3275911
        %v2655 = vadd.f32 %v2654, 1.0
        %v2656 = vrcp.pop %v2655
        %v2657 = vmul.f32 1.0, %v2656
        %v2658 = vmul.f32 %v2657, 1.0614054
        %v2659 = vadd.f32 %v2658, -1.4531521
        %v2660 = vmul.f32 %v2659, %v2657
        %v2661 = vadd.f32 %v2660, 1.4214138
        %v2662 = vmul.f32 %v2661, %v2657
        %v2663 = vadd.f32 %v2662, -0.28449672
        %v2664 = vmul.f32 %v2663, %v2657
        %v2665 = vadd.f32 %v2664, 0.2548296
        %v2666 = vmul.f32 %v2665, %v2657
        %v2667 = vsub.f32 0.0, %v2653
        %v2668 = vmul.f32 %v2667, %v2653
        %v2669 = vmul.f32 %v2668, 1.442695
        %v2670 = vpow.pop %v2669
        %v2671 = vmul.f32 %v2666, %v2670
        %v2672 = vsub.f32 1.0, %v2671
        %vm2673 = vcmp.lt.f32.partialorder %v2652, 0.0
        %v2674 = vsub.f32 0.0, %v2672
        %v2675 = vsel %vm2673, %v2674, %v2672
        %v2676 = vadd.f32 %v2675, 1.0
        %v2677 = vmul.f32 %v2651, %v2676
        %v2678 = vpack.c.bf16 %v2677, %v2677
        %v2679 = vld [vmem:[%s16] sm:$0xf]
        %v2680 = vld [vmem:[%s16 + $0x4] sm:$0xf]
        %v2681 = vld [vmem:[%s16 + $0x8] sm:$0xf]
        %v2682 = vld [vmem:[%s16 + $0xc] sm:$0xf]
        %v2683 = vld [vmem:[%s17] sm:$0x1]
        %v2685 = vlaneseq
        %v2686 = vshrl.u32 %v2685, 7
        %v2687 = vsub.s32 0, %v2686
        %v2688 = vrot.slane %v2683, %v2687
        %v2694 = vunpack.c.l.b16 %v2679
        %v2695 = vunpack.c.l.b16 %v2680
        %v2696 = vunpack.c.l.b16 %v2681
        %v2697 = vunpack.c.l.b16 %v2682
        %v2698 = vpack.c.b16 %v2695, %v2694
        %v2699 = vpack.c.b16 %v2697, %v2696
        %v2703 = vsel %vm935, %v2678, 0
        %2705 = vmatprep.subr.bf16.mxu0 0
        %2706 = vmatpush1.bf16.msra.mxu0 %v2698
        %2707 = vmatprep.subr.bf16.mxu0 0
        %2708 = vmatpush1.bf16.msra.mxu0 %v2699
        %2709 = vmatprep.subr.bf16.mxu0 0
        %2710 = vmatpush1.bf16.msra.mxu0 0
        %2711 = vmatprep.subr.bf16.mxu0 0
        %2712 = vmatpush1.bf16.msra.mxu0 0
        %2713 = vmatprep.subr.bf16.mxu0 0
        %2714 = vmatpush1.bf16.msra.mxu0 0
        %2715 = vmatprep.subr.bf16.mxu0 0
        %2716 = vmatpush1.bf16.msra.mxu0 0
        %2717 = vmatprep.subr.bf16.mxu0 0
        %2718 = vmatpush1.bf16.msra.mxu0 0
        %2719 = vmatprep.subr.bf16.mxu0 0
        %2720 = vmatpush1.bf16.msra.mxu0 0
        %2721 = vmatprep.subr.bf16.mxu0 0
        %2722 = vmatpush1.bf16.msra.mxu0 0
        %2723 = vmatprep.subr.bf16.mxu0 0
        %2724 = vmatpush1.bf16.msra.mxu0 0
        %2725 = vmatprep.subr.bf16.mxu0 0
        %2726 = vmatpush1.bf16.msra.mxu0 0
        %2727 = vmatprep.subr.bf16.mxu0 0
        %2728 = vmatpush1.bf16.msra.mxu0 0
        %2729 = vmatprep.subr.bf16.mxu0 0
        %2730 = vmatpush1.bf16.msra.mxu0 0
        %2731 = vmatprep.subr.bf16.mxu0 0
        %2732 = vmatpush1.bf16.msra.mxu0 0
        %2733 = vmatprep.subr.bf16.mxu0 0
        %2734 = vmatpush1.bf16.msra.mxu0 0
        %2735 = vmatprep.subr.bf16.mxu0 0
        %2736 = vmatpush1.bf16.msra.mxu0 0
        %2737 = vmatprep.mubr.bf16.mxu0 0
        %2738 = vmatmul.mubr.bf16.gmra.mrb[0].mxu0 %v2703
        %v2739 = vpop.f32.mrb[0].mxu0
        %v2740 = vadd.f32 %v2688, %v2739
        %v2741 = vpop.f32.mrb[0].mxu0
        %v2742 = vpop.f32.mrb[0].mxu0
        %v2743 = vpop.f32.mrb[0].mxu0
        %2744 = vdwg.mxu0
        %v2745 = vadd.f32 %v791, %v2740
        %v2746 = vmul.f32 %v2745, %v2745
        %v2747 = vsel %vm774, %v2746, 0.0
        %2748 = vadd.xlane.f32.xlu0 %v2747
        %v2749 = vpop.xlane.xlu0 %2748
        %v2750 = vmul.f32 %v2749, %v778
        %v2751 = vrsqrt.pop %v2750
        %v2752 = vmul.f32 %v2750, %v2751
        %vm2753 = vcmp.eq.f32.partialorder %v2750, inf
        %v2754 = vsel %vm2753, %v2750, %v2752
        %vm2755 = vcmp.eq.f32.partialorder %v2750, 0.0
        %v2756 = vand.u32 %v2750, 2147483648
        %v2757 = vsel %vm2755, %v2756, %v2754
        %v2758 = vadd.f32 %v2757, 1e-05
        %v2759 = vrcp.pop %v2758
        %v2760 = vstv %s771
        %v2761 = vmul.f32 %v2760, %v2759
        %v2762 = vmul.f32 %v2745, %v2761
        %2763 = vst.msk [vmem:[%s754] sm:$0xff] %vm774, %v2762
        %s2764 = sand.u32 %s461, 1
        %s2765 = scalar_lea.sflag [#allocation12], %s2764
        %s2766 = sand.u32 %s461, 1
        %s2767 = smul.addr %s2766, 8
        %s2768 = scalar_lea.vmem [#allocation25], %s2767
        // Predicated region
        $region133: #{tpu_custom_call.1} parent=91 // pred_check
          %p2769 = pneg %p471
        $region134: #{tpu_custom_call.1} parent=91 // pred_check_branch
          %2771 = sbr.rel (%p2769) target = $region136
        $region135: #{tpu_custom_call.1} parent=91 // pred_region
          %s2773 = ssub.s32 128, 128
          %2774 = vsyncadd %s2765, %s2773
          %s2775 = smul.addr %s45, 2
          %s2776 = sadd.s32 %s46, %s2775
          %s2777 = smul.addr %s2776, 128
          %s2778 = scalar_lea.hbm %s18, %s2777
          %s2780 = sshll.u32 %s2768, 4
          %s2781 = int_to_ptr.vmem [resolvable:$true] %s2780
          %2783 = dma.vmem_to_hbm [thread:$0]  %s2781, 128, %s2778, %s2765
        $region136: #{tpu_custom_call.1} parent=91 // pred_fallthru
          _
      $region92: #{tpu_custom_call.1} parent=5 // pred_fallthru
        _
      %p2784 = scmp.le.s32.totalorder 2, %s36
      // Predicated region
      $region137: #{tpu_custom_call.1} parent=5 // pred_check
        %p2785 = pneg %p2784
      $region138: #{tpu_custom_call.1} parent=5 // pred_check_branch
        %2787 = sbr.rel (%p2785) target = $region140
      $region139: #{tpu_custom_call.1} parent=5 // pred_region
        %s2788 = ssub.s32 %s36, 2
        // Predicated region
        $region141: #{tpu_custom_call.1} parent=139 // pred_check
          %p2789 = pneg %p477
        $region142: #{tpu_custom_call.1} parent=139 // pred_check_branch
          %2791 = sbr.rel (%p2789) target = $region144
        $region143: #{tpu_custom_call.1} parent=139 // pred_region
          %s2792 = sand.u32 %s462, 1
          %s2793 = scalar_lea.sflag [#allocation12], %s2792
          %s2794 = sand.u32 %s462, 1
          %s2795 = smul.addr %s2794, 8
          %s2796 = scalar_lea.vmem [#allocation25], %s2795
          %2797 = dma.done %s2793, 128
        $region144: #{tpu_custom_call.1} parent=139 // pred_fallthru
          _
      $region140: #{tpu_custom_call.1} parent=5 // pred_fallthru
        _
    $region6: #{tpu_custom_call.1} parent=1 // loop_footer
      %s40 = sadd.s32 1, %s36
    $region7: #{tpu_custom_call.1} parent=1 // loop_footer_branch
      %35 = sbr.rel target = $region3
    $region8: #{tpu_custom_call.1} parent=1 // loop_exit
      _
    %2798 = vsyncpa [#allocation11], 1
    %s2799 = scalar_lea.sflag [#allocation11], 1
    %2800 = vsyncpa %s2799, 1
    %2801 = vsyncpa [#allocation14], 1
    %2802 = vsyncpa [#allocation17], 1
    %2803 = vsyncpa [#allocation20], 1
    %2804 = vsyncpa [#allocation23], 1
    %2805 = vsyncpa [#allocation12], 1
    %s2806 = scalar_lea.sflag [#allocation12], 1
    %2807 = vsyncpa %s2806, 1

</llo_original>
